<compile_context>
chip_gen: v5e
topology: v5e:2x2
jax: 0.10.0
libtpu: 0.0.40
codegen_flags: <defaults>
</compile_context>

<pallas_src>
import functools

import jax
import jax.numpy as jnp
from jax.experimental import pallas as pl
from jax.experimental.pallas import tpu as pltpu


# ----------------------------------------------------------------------------
# Fully fused Actor kernel: no grid, everything VMEM-resident.
# ----------------------------------------------------------------------------
def _actor_fused_kernel(num_layers, num_steps, x_ref, len_ref, *refs):
    """refs = [w_ih_l, w_hh_l, b_l]*L, h0, c0, ln_g, ln_b, w_skip, b_skip,
               w1, b1, w2, b2, out_ref, gx_scr."""
    L, T = num_layers, num_steps
    lstm_refs = refs[:3 * L]
    (h0_ref, c0_ref, ln_g_ref, ln_b_ref, w_skip_ref, b_skip_ref,
     w1_ref, b1_ref, w2_ref, b2_ref, out_ref, gx_scr) = refs[3 * L:]

    x = x_ref[...]                                   # (T*B, D), time-major flat
    B = x.shape[0] // T
    H = ln_g_ref.shape[-1]

    # ---- hoisted layer-0 input projection: one MXU matmul for all timesteps --
    gx = (jnp.dot(x, lstm_refs[0][...], preferred_element_type=jnp.float32)
          + lstm_refs[2][...])                       # (T*B, 4H), gate order ifgo
    for t in range(T):                               # static scatter -> scratch
        gx_scr[t] = gx[t * B:(t + 1) * B, :]

    # ---- hoisted skip branch: ReLU(x @ W_skip + b), summed over time ---------
    skip = jnp.maximum(
        jnp.dot(x, w_skip_ref[...], preferred_element_type=jnp.float32)
        + b_skip_ref[...], 0.0)                      # (T*B, H)
    skip_sum = jnp.zeros((B, H), jnp.float32)
    for t in range(T):
        skip_sum = skip_sum + skip[t * B:(t + 1) * B, :]

    # ---- loop-invariant values loaded once ------------------------------------
    lens = len_ref[...]                              # (B, 1) int32
    ln_g = ln_g_ref[...]
    ln_b = ln_b_ref[...]
    w_hh = [lstm_refs[3 * l + 1][...] for l in range(L)]
    w_ih = [lstm_refs[3 * l + 0][...] for l in range(1, L)]
    bg = [lstm_refs[3 * l + 2][...] for l in range(1, L)]

    def cell(gates, c_prev):
        i_g = jax.nn.sigmoid(gates[:, 0 * H:1 * H])
        f_g = jax.nn.sigmoid(gates[:, 1 * H:2 * H])
        g_g = jnp.tanh(gates[:, 2 * H:3 * H])
        o_g = jax.nn.sigmoid(gates[:, 3 * H:4 * H])
        c_new = f_g * c_prev + i_g * g_g
        h_new = o_g * jnp.tanh(c_new)
        return h_new, c_new

    def body(t, carry):
        hs, cs, acc = carry
        valid = t < lens                             # (B, 1) bool, bcasts over H
        new_hs, new_cs = [], []
        # layer 0: input projection precomputed, only h @ W_hh in the loop
        gates = gx_scr[t] + jnp.dot(hs[0], w_hh[0],
                                    preferred_element_type=jnp.float32)
        h_new, c_new = cell(gates, cs[0])
        new_hs.append(jnp.where(valid, h_new, hs[0]))   # freeze past seq_len
        new_cs.append(jnp.where(valid, c_new, cs[0]))
        y = jnp.where(valid, h_new, 0.0)                # packed output: 0 pad
        # layers 1..L-1
        for l in range(1, L):
            gates = (jnp.dot(y, w_ih[l - 1], preferred_element_type=jnp.float32)
                     + jnp.dot(hs[l], w_hh[l], preferred_element_type=jnp.float32)
                     + bg[l - 1])
            h_new, c_new = cell(gates, cs[l])
            new_hs.append(jnp.where(valid, h_new, hs[l]))
            new_cs.append(jnp.where(valid, c_new, cs[l]))
            y = jnp.where(valid, h_new, 0.0)
        # head, per-timestep part: ReLU -> LayerNorm, accumulate for mean over T
        z = jnp.maximum(y, 0.0)
        mu = jnp.mean(z, axis=-1, keepdims=True)
        var = jnp.mean((z - mu) ** 2, axis=-1, keepdims=True)
        z = (z - mu) * jax.lax.rsqrt(var + 1e-5) * ln_g + ln_b
        return tuple(new_hs), tuple(new_cs), acc + z

    h_init = tuple(h0_ref[l] for l in range(L))
    c_init = tuple(c0_ref[l] for l in range(L))
    acc0 = jnp.zeros((B, H), jnp.float32)
    _, _, acc = jax.lax.fori_loop(0, T, body, (h_init, c_init, acc0),
                                  unroll=True)

    # mean over time (LayerNorm branch + skip branch), then MLP head
    pooled = (acc + skip_sum) * (1.0 / T)            # (B, H)
    hid = jnp.maximum(
        jnp.dot(pooled, w1_ref[...], preferred_element_type=jnp.float32)
        + b1_ref[...], 0.0)
    out_ref[...] = (jnp.dot(hid, w2_ref[...], preferred_element_type=jnp.float32)
                    + b2_ref[...])


def _actor_forward_impl(params, x_btd, seq_lengths, h0, c0):
    B, T, D = x_btd.shape
    H = params["ln_g"].shape[-1]
    A = params["w2"].shape[-1]                       # static shape -> jit-safe
    L = len(params["lstm"])

    x_flat = jnp.transpose(x_btd, (1, 0, 2)).reshape(T * B, D)  # time-major flat
    seq_b1 = seq_lengths.reshape(B, 1).astype(jnp.int32)
    lstm_args = [w for layer in params["lstm"] for w in layer]

    vmem = pl.BlockSpec(memory_space=pltpu.MemorySpace.VMEM)
    n_in = 2 + 3 * L + 10
    return pl.pallas_call(
        functools.partial(_actor_fused_kernel, L, T),
        out_shape=jax.ShapeDtypeStruct((B, A), jnp.float32),
        in_specs=[vmem] * n_in,
        out_specs=vmem,
        scratch_shapes=[pltpu.VMEM((T, B, 4 * H), jnp.float32)],  # hoisted gates
    )(x_flat, seq_b1, *lstm_args,
      h0, c0, params["ln_g"], params["ln_b"],
      params["w_skip"], params["b_skip"],
      params["w1"], params["b1"], params["w2"], params["b2"])


actor_forward = jax.jit(_actor_forward_impl)


# ----------------------------------------------------------------------------
# Parameter construction (deterministic, xavier-normal-style like init_weights).
# ----------------------------------------------------------------------------
def _xavier(key, shape, fan_in, fan_out):
    std = (2.0 / (fan_in + fan_out)) ** 0.5
    return std * jax.random.normal(key, shape, jnp.float32)


def make_actor_params(key, input_size, hidden_size, num_layers, output_size):
    D, H, O = input_size, hidden_size, output_size
    keys = jax.random.split(key, 2 * num_layers + 4)
    k = iter(keys)
    lstm = []
    for l in range(num_layers):
        din = D if l == 0 else H
        w_ih = _xavier(next(k), (din, 4 * H), din, 4 * H)   # (Din, 4H)
        w_hh = _xavier(next(k), (H, 4 * H), H, 4 * H)       # (H, 4H)
        bg = jnp.zeros((1, 4 * H), jnp.float32)             # b_ih + b_hh = 0
        lstm.append((w_ih, w_hh, bg))
    return dict(
        lstm=lstm,
        ln_g=jnp.ones((1, H), jnp.float32),                 # LayerNorm defaults
        ln_b=jnp.zeros((1, H), jnp.float32),
        # TODO(synk): skip_connection keeps torch's default (kaiming-uniform)
        # init in the reference; xavier-normal used here for determinism.
        w_skip=_xavier(next(k), (D, H), D, H),
        b_skip=jnp.zeros((1, H), jnp.float32),
        w1=_xavier(next(k), (H, H), H, H),
        b1=jnp.zeros((1, H), jnp.float32),
        w2=_xavier(next(k), (H, O), H, O),
        b2=jnp.zeros((1, O), jnp.float32),
    )


# ----------------------------------------------------------------------------
if __name__ == "__main__":
    B, T, D, H, L, A = 2, 8, 16, 32, 2, 4   # batch, seq, input, hidden, layers, out

    key = jax.random.PRNGKey(0)
    k_params, k_x, k_h, k_c = jax.random.split(key, 4)

    params = make_actor_params(k_params, D, H, L, A)
    state = jax.random.normal(k_x, (B, T, D), jnp.float32)
    # pad_packed + residual add in the reference requires max(seq_lengths) == T
    seq_lengths = jnp.array([T, 5], jnp.int32)

    # h0/c0: xavier-normal-style random initial states (created per forward in
    # the torch code).
    std_h = (2.0 / (B + H)) ** 0.5
    h0 = std_h * jax.random.normal(k_h, (L, B, H), jnp.float32)
    c0 = std_h * jax.random.normal(k_c, (L, B, H), jnp.float32)

    out = actor_forward(params, state, seq_lengths, h0, c0)
    jax.block_until_ready(out)

    assert out.shape == (B, A)
    print("KERNEL_OK")
</pallas_src>

<mosaic_0001>
module attributes {stable_mosaic.version = 11 : i64} {
  func.func @_actor_fused_kernel(%arg0: memref<16x16xf32, #tpu.memory_space<vmem>>, %arg1: memref<2x1xi32, #tpu.memory_space<vmem>>, %arg2: memref<16x128xf32, #tpu.memory_space<vmem>>, %arg3: memref<32x128xf32, #tpu.memory_space<vmem>>, %arg4: memref<1x128xf32, #tpu.memory_space<vmem>>, %arg5: memref<32x128xf32, #tpu.memory_space<vmem>>, %arg6: memref<32x128xf32, #tpu.memory_space<vmem>>, %arg7: memref<1x128xf32, #tpu.memory_space<vmem>>, %arg8: memref<2x2x32xf32, #tpu.memory_space<vmem>>, %arg9: memref<2x2x32xf32, #tpu.memory_space<vmem>>, %arg10: memref<1x32xf32, #tpu.memory_space<vmem>>, %arg11: memref<1x32xf32, #tpu.memory_space<vmem>>, %arg12: memref<16x32xf32, #tpu.memory_space<vmem>>, %arg13: memref<1x32xf32, #tpu.memory_space<vmem>>, %arg14: memref<32x32xf32, #tpu.memory_space<vmem>>, %arg15: memref<1x32xf32, #tpu.memory_space<vmem>>, %arg16: memref<32x4xf32, #tpu.memory_space<vmem>>, %arg17: memref<1x4xf32, #tpu.memory_space<vmem>>, %arg18: memref<2x4xf32, #tpu.memory_space<vmem>>, %arg19: memref<8x2x128xf32, #tpu.memory_space<vmem>>) attributes {dimension_semantics = [], scalar_prefetch = 0 : i64, scratch_operands = 1 : i64, tpu.core_type = #tpu.core_type<tc>} {
    %c0 = arith.constant 0 : index
    %c0_0 = arith.constant 0 : index
    %0 = vector.load %arg0[%c0, %c0_0] : memref<16x16xf32, #tpu.memory_space<vmem>>, vector<16x16xf32>
    %c0_1 = arith.constant 0 : index
    %c0_2 = arith.constant 0 : index
    %1 = vector.load %arg2[%c0_1, %c0_2] : memref<16x128xf32, #tpu.memory_space<vmem>>, vector<16x128xf32>
    %cst = arith.constant dense<0.000000e+00> : vector<16x128xf32>
    %2 = tpu.matmul %0, %1, %cst {dimension_numbers = #tpu.dot_dimension_numbers<[1], [0], [0], [1], [0, 0, 1, 1], [], []>} : vector<16x16xf32>, vector<16x128xf32>, vector<16x128xf32> -> vector<16x128xf32>
    %c0_3 = arith.constant 0 : index
    %c0_4 = arith.constant 0 : index
    %3 = vector.load %arg4[%c0_3, %c0_4] : memref<1x128xf32, #tpu.memory_space<vmem>>, vector<1x128xf32>
    %4 = vector.broadcast %3 : vector<1x128xf32> to vector<16x128xf32>
    %5 = arith.addf %2, %4 : vector<16x128xf32>
    %6 = vector.extract_strided_slice %5 {offsets = [0, 0], sizes = [2, 128], strides = [1, 1]} : vector<16x128xf32> to vector<2x128xf32>
    %c0_5 = arith.constant 0 : index
    %c0_6 = arith.constant 0 : index
    %c0_7 = arith.constant 0 : index
    %7 = vector.load %arg19[%c0_5, %c0_6, %c0_7] : memref<8x2x128xf32, #tpu.memory_space<vmem>>, vector<1x2x128xf32>
    %8 = vector.shape_cast %7 : vector<1x2x128xf32> to vector<2x128xf32>
    %9 = vector.shape_cast %6 : vector<2x128xf32> to vector<1x2x128xf32>
    tpu.vector_store %arg19[%c0_5, %c0_6, %c0_7], %9 {strides = array<i32>} : memref<8x2x128xf32, #tpu.memory_space<vmem>>, vector<1x2x128xf32>,
    %10 = vector.extract_strided_slice %5 {offsets = [2, 0], sizes = [2, 128], strides = [1, 1]} : vector<16x128xf32> to vector<2x128xf32>
    %c1 = arith.constant 1 : index
    %c0_8 = arith.constant 0 : index
    %c0_9 = arith.constant 0 : index
    %11 = vector.load %arg19[%c1, %c0_8, %c0_9] : memref<8x2x128xf32, #tpu.memory_space<vmem>>, vector<1x2x128xf32>
    %12 = vector.shape_cast %11 : vector<1x2x128xf32> to vector<2x128xf32>
    %13 = vector.shape_cast %10 : vector<2x128xf32> to vector<1x2x128xf32>
    tpu.vector_store %arg19[%c1, %c0_8, %c0_9], %13 {strides = array<i32>} : memref<8x2x128xf32, #tpu.memory_space<vmem>>, vector<1x2x128xf32>,
    %14 = vector.extract_strided_slice %5 {offsets = [4, 0], sizes = [2, 128], strides = [1, 1]} : vector<16x128xf32> to vector<2x128xf32>
    %c2 = arith.constant 2 : index
    %c0_10 = arith.constant 0 : index
    %c0_11 = arith.constant 0 : index
    %15 = vector.load %arg19[%c2, %c0_10, %c0_11] : memref<8x2x128xf32, #tpu.memory_space<vmem>>, vector<1x2x128xf32>
    %16 = vector.shape_cast %15 : vector<1x2x128xf32> to vector<2x128xf32>
    %17 = vector.shape_cast %14 : vector<2x128xf32> to vector<1x2x128xf32>
    tpu.vector_store %arg19[%c2, %c0_10, %c0_11], %17 {strides = array<i32>} : memref<8x2x128xf32, #tpu.memory_space<vmem>>, vector<1x2x128xf32>,
    %18 = vector.extract_strided_slice %5 {offsets = [6, 0], sizes = [2, 128], strides = [1, 1]} : vector<16x128xf32> to vector<2x128xf32>
    %c3 = arith.constant 3 : index
    %c0_12 = arith.constant 0 : index
    %c0_13 = arith.constant 0 : index
    %19 = vector.load %arg19[%c3, %c0_12, %c0_13] : memref<8x2x128xf32, #tpu.memory_space<vmem>>, vector<1x2x128xf32>
    %20 = vector.shape_cast %19 : vector<1x2x128xf32> to vector<2x128xf32>
    %21 = vector.shape_cast %18 : vector<2x128xf32> to vector<1x2x128xf32>
    tpu.vector_store %arg19[%c3, %c0_12, %c0_13], %21 {strides = array<i32>} : memref<8x2x128xf32, #tpu.memory_space<vmem>>, vector<1x2x128xf32>,
    %22 = vector.extract_strided_slice %5 {offsets = [8, 0], sizes = [2, 128], strides = [1, 1]} : vector<16x128xf32> to vector<2x128xf32>
    %c4 = arith.constant 4 : index
    %c0_14 = arith.constant 0 : index
    %c0_15 = arith.constant 0 : index
    %23 = vector.load %arg19[%c4, %c0_14, %c0_15] : memref<8x2x128xf32, #tpu.memory_space<vmem>>, vector<1x2x128xf32>
    %24 = vector.shape_cast %23 : vector<1x2x128xf32> to vector<2x128xf32>
    %25 = vector.shape_cast %22 : vector<2x128xf32> to vector<1x2x128xf32>
    tpu.vector_store %arg19[%c4, %c0_14, %c0_15], %25 {strides = array<i32>} : memref<8x2x128xf32, #tpu.memory_space<vmem>>, vector<1x2x128xf32>,
    %26 = vector.extract_strided_slice %5 {offsets = [10, 0], sizes = [2, 128], strides = [1, 1]} : vector<16x128xf32> to vector<2x128xf32>
    %c5 = arith.constant 5 : index
    %c0_16 = arith.constant 0 : index
    %c0_17 = arith.constant 0 : index
    %27 = vector.load %arg19[%c5, %c0_16, %c0_17] : memref<8x2x128xf32, #tpu.memory_space<vmem>>, vector<1x2x128xf32>
    %28 = vector.shape_cast %27 : vector<1x2x128xf32> to vector<2x128xf32>
    %29 = vector.shape_cast %26 : vector<2x128xf32> to vector<1x2x128xf32>
    tpu.vector_store %arg19[%c5, %c0_16, %c0_17], %29 {strides = array<i32>} : memref<8x2x128xf32, #tpu.memory_space<vmem>>, vector<1x2x128xf32>,
    %30 = vector.extract_strided_slice %5 {offsets = [12, 0], sizes = [2, 128], strides = [1, 1]} : vector<16x128xf32> to vector<2x128xf32>
    %c6 = arith.constant 6 : index
    %c0_18 = arith.constant 0 : index
    %c0_19 = arith.constant 0 : index
    %31 = vector.load %arg19[%c6, %c0_18, %c0_19] : memref<8x2x128xf32, #tpu.memory_space<vmem>>, vector<1x2x128xf32>
    %32 = vector.shape_cast %31 : vector<1x2x128xf32> to vector<2x128xf32>
    %33 = vector.shape_cast %30 : vector<2x128xf32> to vector<1x2x128xf32>
    tpu.vector_store %arg19[%c6, %c0_18, %c0_19], %33 {strides = array<i32>} : memref<8x2x128xf32, #tpu.memory_space<vmem>>, vector<1x2x128xf32>,
    %34 = vector.extract_strided_slice %5 {offsets = [14, 0], sizes = [2, 128], strides = [1, 1]} : vector<16x128xf32> to vector<2x128xf32>
    %c7 = arith.constant 7 : index
    %c0_20 = arith.constant 0 : index
    %c0_21 = arith.constant 0 : index
    %35 = vector.load %arg19[%c7, %c0_20, %c0_21] : memref<8x2x128xf32, #tpu.memory_space<vmem>>, vector<1x2x128xf32>
    %36 = vector.shape_cast %35 : vector<1x2x128xf32> to vector<2x128xf32>
    %37 = vector.shape_cast %34 : vector<2x128xf32> to vector<1x2x128xf32>
    tpu.vector_store %arg19[%c7, %c0_20, %c0_21], %37 {strides = array<i32>} : memref<8x2x128xf32, #tpu.memory_space<vmem>>, vector<1x2x128xf32>,
    %c0_22 = arith.constant 0 : index
    %c0_23 = arith.constant 0 : index
    %38 = vector.load %arg12[%c0_22, %c0_23] : memref<16x32xf32, #tpu.memory_space<vmem>>, vector<16x32xf32>
    %cst_24 = arith.constant dense<0.000000e+00> : vector<16x32xf32>
    %39 = tpu.matmul %0, %38, %cst_24 {dimension_numbers = #tpu.dot_dimension_numbers<[1], [0], [0], [1], [0, 0, 1, 1], [], []>} : vector<16x16xf32>, vector<16x32xf32>, vector<16x32xf32> -> vector<16x32xf32>
    %c0_25 = arith.constant 0 : index
    %c0_26 = arith.constant 0 : index
    %40 = vector.load %arg13[%c0_25, %c0_26] : memref<1x32xf32, #tpu.memory_space<vmem>>, vector<1x32xf32>
    %41 = vector.broadcast %40 : vector<1x32xf32> to vector<16x32xf32>
    %42 = arith.addf %39, %41 : vector<16x32xf32>
    %cst_27 = arith.constant 0.000000e+00 : f32
    %43 = vector.broadcast %cst_27 : f32 to vector<16x32xf32>
    %44 = arith.maximumf %42, %43 : vector<16x32xf32>
    %cst_28 = arith.constant 0.000000e+00 : f32
    %45 = vector.broadcast %cst_28 : f32 to vector<2x32xf32>
    %46 = vector.extract_strided_slice %44 {offsets = [0, 0], sizes = [2, 32], strides = [1, 1]} : vector<16x32xf32> to vector<2x32xf32>
    %47 = arith.addf %45, %46 : vector<2x32xf32>
    %48 = vector.extract_strided_slice %44 {offsets = [2, 0], sizes = [2, 32], strides = [1, 1]} : vector<16x32xf32> to vector<2x32xf32>
    %49 = arith.addf %47, %48 : vector<2x32xf32>
    %50 = vector.extract_strided_slice %44 {offsets = [4, 0], sizes = [2, 32], strides = [1, 1]} : vector<16x32xf32> to vector<2x32xf32>
    %51 = arith.addf %49, %50 : vector<2x32xf32>
    %52 = vector.extract_strided_slice %44 {offsets = [6, 0], sizes = [2, 32], strides = [1, 1]} : vector<16x32xf32> to vector<2x32xf32>
    %53 = arith.addf %51, %52 : vector<2x32xf32>
    %54 = vector.extract_strided_slice %44 {offsets = [8, 0], sizes = [2, 32], strides = [1, 1]} : vector<16x32xf32> to vector<2x32xf32>
    %55 = arith.addf %53, %54 : vector<2x32xf32>
    %56 = vector.extract_strided_slice %44 {offsets = [10, 0], sizes = [2, 32], strides = [1, 1]} : vector<16x32xf32> to vector<2x32xf32>
    %57 = arith.addf %55, %56 : vector<2x32xf32>
    %58 = vector.extract_strided_slice %44 {offsets = [12, 0], sizes = [2, 32], strides = [1, 1]} : vector<16x32xf32> to vector<2x32xf32>
    %59 = arith.addf %57, %58 : vector<2x32xf32>
    %60 = vector.extract_strided_slice %44 {offsets = [14, 0], sizes = [2, 32], strides = [1, 1]} : vector<16x32xf32> to vector<2x32xf32>
    %61 = arith.addf %59, %60 : vector<2x32xf32>
    %c0_29 = arith.constant 0 : index
    %c0_30 = arith.constant 0 : index
    %62 = vector.load %arg1[%c0_29, %c0_30] : memref<2x1xi32, #tpu.memory_space<vmem>>, vector<2x1xi32>
    %c0_31 = arith.constant 0 : index
    %c0_32 = arith.constant 0 : index
    %63 = vector.load %arg10[%c0_31, %c0_32] : memref<1x32xf32, #tpu.memory_space<vmem>>, vector<1x32xf32>
    %c0_33 = arith.constant 0 : index
    %c0_34 = arith.constant 0 : index
    %64 = vector.load %arg11[%c0_33, %c0_34] : memref<1x32xf32, #tpu.memory_space<vmem>>, vector<1x32xf32>
    %c0_35 = arith.constant 0 : index
    %c0_36 = arith.constant 0 : index
    %65 = vector.load %arg3[%c0_35, %c0_36] : memref<32x128xf32, #tpu.memory_space<vmem>>, vector<32x128xf32>
    %c0_37 = arith.constant 0 : index
    %c0_38 = arith.constant 0 : index
    %66 = vector.load %arg6[%c0_37, %c0_38] : memref<32x128xf32, #tpu.memory_space<vmem>>, vector<32x128xf32>
    %c0_39 = arith.constant 0 : index
    %c0_40 = arith.constant 0 : index
    %67 = vector.load %arg5[%c0_39, %c0_40] : memref<32x128xf32, #tpu.memory_space<vmem>>, vector<32x128xf32>
    %c0_41 = arith.constant 0 : index
    %c0_42 = arith.constant 0 : index
    %68 = vector.load %arg7[%c0_41, %c0_42] : memref<1x128xf32, #tpu.memory_space<vmem>>, vector<1x128xf32>
    %c0_43 = arith.constant 0 : index
    %c0_44 = arith.constant 0 : index
    %c0_45 = arith.constant 0 : index
    %69 = vector.load %arg8[%c0_43, %c0_44, %c0_45] : memref<2x2x32xf32, #tpu.memory_space<vmem>>, vector<1x2x32xf32>
    %70 = vector.shape_cast %69 : vector<1x2x32xf32> to vector<2x32xf32>
    %c1_46 = arith.constant 1 : index
    %c0_47 = arith.constant 0 : index
    %c0_48 = arith.constant 0 : index
    %71 = vector.load %arg8[%c1_46, %c0_47, %c0_48] : memref<2x2x32xf32, #tpu.memory_space<vmem>>, vector<1x2x32xf32>
    %72 = vector.shape_cast %71 : vector<1x2x32xf32> to vector<2x32xf32>
    %c0_49 = arith.constant 0 : index
    %c0_50 = arith.constant 0 : index
    %c0_51 = arith.constant 0 : index
    %73 = vector.load %arg9[%c0_49, %c0_50, %c0_51] : memref<2x2x32xf32, #tpu.memory_space<vmem>>, vector<1x2x32xf32>
    %74 = vector.shape_cast %73 : vector<1x2x32xf32> to vector<2x32xf32>
    %c1_52 = arith.constant 1 : index
    %c0_53 = arith.constant 0 : index
    %c0_54 = arith.constant 0 : index
    %75 = vector.load %arg9[%c1_52, %c0_53, %c0_54] : memref<2x2x32xf32, #tpu.memory_space<vmem>>, vector<1x2x32xf32>
    %76 = vector.shape_cast %75 : vector<1x2x32xf32> to vector<2x32xf32>
    %cst_55 = arith.constant 0.000000e+00 : f32
    %77 = vector.broadcast %cst_55 : f32 to vector<2x32xf32>
    %c0_i32 = arith.constant 0 : i32
    %78 = vector.broadcast %c0_i32 : i32 to vector<2x1xi32>
    %79 = arith.cmpi slt, %78, %62 : vector<2x1xi32>
    %80 = arith.index_cast %c0_i32 : i32 to index
    %c0_56 = arith.constant 0 : index
    %c0_57 = arith.constant 0 : index
    %81 = vector.load %arg19[%80, %c0_56, %c0_57] : memref<8x2x128xf32, #tpu.memory_space<vmem>>, vector<1x2x128xf32>
    %82 = vector.shape_cast %81 : vector<1x2x128xf32> to vector<2x128xf32>
    %cst_58 = arith.constant dense<0.000000e+00> : vector<2x128xf32>
    %83 = tpu.matmul %70, %65, %cst_58 {dimension_numbers = #tpu.dot_dimension_numbers<[1], [0], [0], [1], [0, 0, 1, 1], [], []>} : vector<2x32xf32>, vector<32x128xf32>, vector<2x128xf32> -> vector<2x128xf32>
    %84 = arith.addf %82, %83 : vector<2x128xf32>
    %85 = vector.extract_strided_slice %84 {offsets = [0, 0], sizes = [2, 32], strides = [1, 1]} : vector<2x128xf32> to vector<2x32xf32>
    %86 = arith.negf %85 : vector<2x32xf32>
    %87 = math.exp %86 : vector<2x32xf32>
    %cst_59 = arith.constant 1.000000e+00 : f32
    %88 = vector.broadcast %cst_59 : f32 to vector<2x32xf32>
    %89 = arith.addf %88, %87 : vector<2x32xf32>
    %90 = arith.divf %88, %89 : vector<2x32xf32>
    %91 = vector.extract_strided_slice %84 {offsets = [0, 32], sizes = [2, 32], strides = [1, 1]} : vector<2x128xf32> to vector<2x32xf32>
    %92 = arith.negf %91 : vector<2x32xf32>
    %93 = math.exp %92 : vector<2x32xf32>
    %cst_60 = arith.constant 1.000000e+00 : f32
    %94 = vector.broadcast %cst_60 : f32 to vector<2x32xf32>
    %95 = arith.addf %94, %93 : vector<2x32xf32>
    %96 = arith.divf %94, %95 : vector<2x32xf32>
    %97 = vector.extract_strided_slice %84 {offsets = [0, 64], sizes = [2, 32], strides = [1, 1]} : vector<2x128xf32> to vector<2x32xf32>
    %98 = math.tanh %97 : vector<2x32xf32>
    %99 = vector.extract_strided_slice %84 {offsets = [0, 96], sizes = [2, 32], strides = [1, 1]} : vector<2x128xf32> to vector<2x32xf32>
    %100 = arith.negf %99 : vector<2x32xf32>
    %101 = math.exp %100 : vector<2x32xf32>
    %cst_61 = arith.constant 1.000000e+00 : f32
    %102 = vector.broadcast %cst_61 : f32 to vector<2x32xf32>
    %103 = arith.addf %102, %101 : vector<2x32xf32>
    %104 = arith.divf %102, %103 : vector<2x32xf32>
    %105 = arith.mulf %96, %74 : vector<2x32xf32>
    %106 = arith.mulf %90, %98 : vector<2x32xf32>
    %107 = arith.addf %105, %106 : vector<2x32xf32>
    %108 = math.tanh %107 : vector<2x32xf32>
    %109 = arith.mulf %104, %108 : vector<2x32xf32>
    %110 = vector.shape_cast %79 : vector<2x1xi1> to vector<2x1xi1>
    %111 = vector.broadcast %110 : vector<2x1xi1> to vector<2x32xi1>
    %112 = arith.select %111, %109, %70 : vector<2x32xi1>, vector<2x32xf32>
    %113 = vector.shape_cast %79 : vector<2x1xi1> to vector<2x1xi1>
    %114 = vector.broadcast %113 : vector<2x1xi1> to vector<2x32xi1>
    %115 = arith.select %114, %107, %74 : vector<2x32xi1>, vector<2x32xf32>
    %cst_62 = arith.constant 0.000000e+00 : f32
    %116 = vector.shape_cast %79 : vector<2x1xi1> to vector<2x1xi1>
    %117 = vector.broadcast %116 : vector<2x1xi1> to vector<2x32xi1>
    %118 = vector.broadcast %cst_62 : f32 to vector<2x32xf32>
    %119 = arith.select %117, %109, %118 : vector<2x32xi1>, vector<2x32xf32>
    %cst_63 = arith.constant dense<0.000000e+00> : vector<2x128xf32>
    %120 = tpu.matmul %119, %67, %cst_63 {dimension_numbers = #tpu.dot_dimension_numbers<[1], [0], [0], [1], [0, 0, 1, 1], [], []>} : vector<2x32xf32>, vector<32x128xf32>, vector<2x128xf32> -> vector<2x128xf32>
    %cst_64 = arith.constant dense<0.000000e+00> : vector<2x128xf32>
    %121 = tpu.matmul %72, %66, %cst_64 {dimension_numbers = #tpu.dot_dimension_numbers<[1], [0], [0], [1], [0, 0, 1, 1], [], []>} : vector<2x32xf32>, vector<32x128xf32>, vector<2x128xf32> -> vector<2x128xf32>
    %122 = arith.addf %120, %121 : vector<2x128xf32>
    %123 = vector.broadcast %68 : vector<1x128xf32> to vector<2x128xf32>
    %124 = arith.addf %122, %123 : vector<2x128xf32>
    %125 = vector.extract_strided_slice %124 {offsets = [0, 0], sizes = [2, 32], strides = [1, 1]} : vector<2x128xf32> to vector<2x32xf32>
    %126 = arith.negf %125 : vector<2x32xf32>
    %127 = math.exp %126 : vector<2x32xf32>
    %cst_65 = arith.constant 1.000000e+00 : f32
    %128 = vector.broadcast %cst_65 : f32 to vector<2x32xf32>
    %129 = arith.addf %128, %127 : vector<2x32xf32>
    %130 = arith.divf %128, %129 : vector<2x32xf32>
    %131 = vector.extract_strided_slice %124 {offsets = [0, 32], sizes = [2, 32], strides = [1, 1]} : vector<2x128xf32> to vector<2x32xf32>
    %132 = arith.negf %131 : vector<2x32xf32>
    %133 = math.exp %132 : vector<2x32xf32>
    %cst_66 = arith.constant 1.000000e+00 : f32
    %134 = vector.broadcast %cst_66 : f32 to vector<2x32xf32>
    %135 = arith.addf %134, %133 : vector<2x32xf32>
    %136 = arith.divf %134, %135 : vector<2x32xf32>
    %137 = vector.extract_strided_slice %124 {offsets = [0, 64], sizes = [2, 32], strides = [1, 1]} : vector<2x128xf32> to vector<2x32xf32>
    %138 = math.tanh %137 : vector<2x32xf32>
    %139 = vector.extract_strided_slice %124 {offsets = [0, 96], sizes = [2, 32], strides = [1, 1]} : vector<2x128xf32> to vector<2x32xf32>
    %140 = arith.negf %139 : vector<2x32xf32>
    %141 = math.exp %140 : vector<2x32xf32>
    %cst_67 = arith.constant 1.000000e+00 : f32
    %142 = vector.broadcast %cst_67 : f32 to vector<2x32xf32>
    %143 = arith.addf %142, %141 : vector<2x32xf32>
    %144 = arith.divf %142, %143 : vector<2x32xf32>
    %145 = arith.mulf %136, %76 : vector<2x32xf32>
    %146 = arith.mulf %130, %138 : vector<2x32xf32>
    %147 = arith.addf %145, %146 : vector<2x32xf32>
    %148 = math.tanh %147 : vector<2x32xf32>
    %149 = arith.mulf %144, %148 : vector<2x32xf32>
    %150 = vector.shape_cast %79 : vector<2x1xi1> to vector<2x1xi1>
    %151 = vector.broadcast %150 : vector<2x1xi1> to vector<2x32xi1>
    %152 = arith.select %151, %149, %72 : vector<2x32xi1>, vector<2x32xf32>
    %153 = vector.shape_cast %79 : vector<2x1xi1> to vector<2x1xi1>
    %154 = vector.broadcast %153 : vector<2x1xi1> to vector<2x32xi1>
    %155 = arith.select %154, %147, %76 : vector<2x32xi1>, vector<2x32xf32>
    %cst_68 = arith.constant 0.000000e+00 : f32
    %156 = vector.shape_cast %79 : vector<2x1xi1> to vector<2x1xi1>
    %157 = vector.broadcast %156 : vector<2x1xi1> to vector<2x32xi1>
    %158 = vector.broadcast %cst_68 : f32 to vector<2x32xf32>
    %159 = arith.select %157, %149, %158 : vector<2x32xi1>, vector<2x32xf32>
    %cst_69 = arith.constant 0.000000e+00 : f32
    %160 = vector.broadcast %cst_69 : f32 to vector<2x32xf32>
    %161 = arith.maximumf %159, %160 : vector<2x32xf32>
    %cst_70 = arith.constant dense<0.000000e+00> : vector<2xf32>
    %162 = vector.multi_reduction <add>, %161, %cst_70 [1] : vector<2x32xf32> to vector<2xf32>
    %163 = vector.shape_cast %162 : vector<2xf32> to vector<2x1xf32>
    %cst_71 = arith.constant 3.200000e+01 : f32
    %164 = vector.broadcast %cst_71 : f32 to vector<2x1xf32>
    %165 = arith.divf %163, %164 : vector<2x1xf32>
    %166 = vector.broadcast %165 : vector<2x1xf32> to vector<2x32xf32>
    %167 = arith.subf %161, %166 : vector<2x32xf32>
    %168 = arith.mulf %167, %167 : vector<2x32xf32>
    %cst_72 = arith.constant dense<0.000000e+00> : vector<2xf32>
    %169 = vector.multi_reduction <add>, %168, %cst_72 [1] : vector<2x32xf32> to vector<2xf32>
    %170 = vector.shape_cast %169 : vector<2xf32> to vector<2x1xf32>
    %cst_73 = arith.constant 3.200000e+01 : f32
    %171 = vector.broadcast %cst_73 : f32 to vector<2x1xf32>
    %172 = arith.divf %170, %171 : vector<2x1xf32>
    %173 = vector.broadcast %165 : vector<2x1xf32> to vector<2x32xf32>
    %174 = arith.subf %161, %173 : vector<2x32xf32>
    %cst_74 = arith.constant 9.99999974E-6 : f32
    %175 = vector.broadcast %cst_74 : f32 to vector<2x1xf32>
    %176 = arith.addf %172, %175 : vector<2x1xf32>
    %177 = math.rsqrt %176 : vector<2x1xf32>
    %178 = vector.broadcast %177 : vector<2x1xf32> to vector<2x32xf32>
    %179 = arith.mulf %174, %178 : vector<2x32xf32>
    %180 = vector.broadcast %63 : vector<1x32xf32> to vector<2x32xf32>
    %181 = arith.mulf %179, %180 : vector<2x32xf32>
    %182 = vector.broadcast %64 : vector<1x32xf32> to vector<2x32xf32>
    %183 = arith.addf %181, %182 : vector<2x32xf32>
    %184 = arith.addf %77, %183 : vector<2x32xf32>
    %c1_i32 = arith.constant 1 : i32
    %185 = vector.broadcast %c1_i32 : i32 to vector<2x1xi32>
    %186 = arith.cmpi slt, %185, %62 : vector<2x1xi32>
    %187 = arith.index_cast %c1_i32 : i32 to index
    %c0_75 = arith.constant 0 : index
    %c0_76 = arith.constant 0 : index
    %188 = vector.load %arg19[%187, %c0_75, %c0_76] : memref<8x2x128xf32, #tpu.memory_space<vmem>>, vector<1x2x128xf32>
    %189 = vector.shape_cast %188 : vector<1x2x128xf32> to vector<2x128xf32>
    %cst_77 = arith.constant dense<0.000000e+00> : vector<2x128xf32>
    %190 = tpu.matmul %112, %65, %cst_77 {dimension_numbers = #tpu.dot_dimension_numbers<[1], [0], [0], [1], [0, 0, 1, 1], [], []>} : vector<2x32xf32>, vector<32x128xf32>, vector<2x128xf32> -> vector<2x128xf32>
    %191 = arith.addf %189, %190 : vector<2x128xf32>
    %192 = vector.extract_strided_slice %191 {offsets = [0, 0], sizes = [2, 32], strides = [1, 1]} : vector<2x128xf32> to vector<2x32xf32>
    %193 = arith.negf %192 : vector<2x32xf32>
    %194 = math.exp %193 : vector<2x32xf32>
    %cst_78 = arith.constant 1.000000e+00 : f32
    %195 = vector.broadcast %cst_78 : f32 to vector<2x32xf32>
    %196 = arith.addf %195, %194 : vector<2x32xf32>
    %197 = arith.divf %195, %196 : vector<2x32xf32>
    %198 = vector.extract_strided_slice %191 {offsets = [0, 32], sizes = [2, 32], strides = [1, 1]} : vector<2x128xf32> to vector<2x32xf32>
    %199 = arith.negf %198 : vector<2x32xf32>
    %200 = math.exp %199 : vector<2x32xf32>
    %cst_79 = arith.constant 1.000000e+00 : f32
    %201 = vector.broadcast %cst_79 : f32 to vector<2x32xf32>
    %202 = arith.addf %201, %200 : vector<2x32xf32>
    %203 = arith.divf %201, %202 : vector<2x32xf32>
    %204 = vector.extract_strided_slice %191 {offsets = [0, 64], sizes = [2, 32], strides = [1, 1]} : vector<2x128xf32> to vector<2x32xf32>
    %205 = math.tanh %204 : vector<2x32xf32>
    %206 = vector.extract_strided_slice %191 {offsets = [0, 96], sizes = [2, 32], strides = [1, 1]} : vector<2x128xf32> to vector<2x32xf32>
    %207 = arith.negf %206 : vector<2x32xf32>
    %208 = math.exp %207 : vector<2x32xf32>
    %cst_80 = arith.constant 1.000000e+00 : f32
    %209 = vector.broadcast %cst_80 : f32 to vector<2x32xf32>
    %210 = arith.addf %209, %208 : vector<2x32xf32>
    %211 = arith.divf %209, %210 : vector<2x32xf32>
    %212 = arith.mulf %203, %115 : vector<2x32xf32>
    %213 = arith.mulf %197, %205 : vector<2x32xf32>
    %214 = arith.addf %212, %213 : vector<2x32xf32>
    %215 = math.tanh %214 : vector<2x32xf32>
    %216 = arith.mulf %211, %215 : vector<2x32xf32>
    %217 = vector.shape_cast %186 : vector<2x1xi1> to vector<2x1xi1>
    %218 = vector.broadcast %217 : vector<2x1xi1> to vector<2x32xi1>
    %219 = arith.select %218, %216, %112 : vector<2x32xi1>, vector<2x32xf32>
    %220 = vector.shape_cast %186 : vector<2x1xi1> to vector<2x1xi1>
    %221 = vector.broadcast %220 : vector<2x1xi1> to vector<2x32xi1>
    %222 = arith.select %221, %214, %115 : vector<2x32xi1>, vector<2x32xf32>
    %cst_81 = arith.constant 0.000000e+00 : f32
    %223 = vector.shape_cast %186 : vector<2x1xi1> to vector<2x1xi1>
    %224 = vector.broadcast %223 : vector<2x1xi1> to vector<2x32xi1>
    %225 = vector.broadcast %cst_81 : f32 to vector<2x32xf32>
    %226 = arith.select %224, %216, %225 : vector<2x32xi1>, vector<2x32xf32>
    %cst_82 = arith.constant dense<0.000000e+00> : vector<2x128xf32>
    %227 = tpu.matmul %226, %67, %cst_82 {dimension_numbers = #tpu.dot_dimension_numbers<[1], [0], [0], [1], [0, 0, 1, 1], [], []>} : vector<2x32xf32>, vector<32x128xf32>, vector<2x128xf32> -> vector<2x128xf32>
    %cst_83 = arith.constant dense<0.000000e+00> : vector<2x128xf32>
    %228 = tpu.matmul %152, %66, %cst_83 {dimension_numbers = #tpu.dot_dimension_numbers<[1], [0], [0], [1], [0, 0, 1, 1], [], []>} : vector<2x32xf32>, vector<32x128xf32>, vector<2x128xf32> -> vector<2x128xf32>
    %229 = arith.addf %227, %228 : vector<2x128xf32>
    %230 = vector.broadcast %68 : vector<1x128xf32> to vector<2x128xf32>
    %231 = arith.addf %229, %230 : vector<2x128xf32>
    %232 = vector.extract_strided_slice %231 {offsets = [0, 0], sizes = [2, 32], strides = [1, 1]} : vector<2x128xf32> to vector<2x32xf32>
    %233 = arith.negf %232 : vector<2x32xf32>
    %234 = math.exp %233 : vector<2x32xf32>
    %cst_84 = arith.constant 1.000000e+00 : f32
    %235 = vector.broadcast %cst_84 : f32 to vector<2x32xf32>
    %236 = arith.addf %235, %234 : vector<2x32xf32>
    %237 = arith.divf %235, %236 : vector<2x32xf32>
    %238 = vector.extract_strided_slice %231 {offsets = [0, 32], sizes = [2, 32], strides = [1, 1]} : vector<2x128xf32> to vector<2x32xf32>
    %239 = arith.negf %238 : vector<2x32xf32>
    %240 = math.exp %239 : vector<2x32xf32>
    %cst_85 = arith.constant 1.000000e+00 : f32
    %241 = vector.broadcast %cst_85 : f32 to vector<2x32xf32>
    %242 = arith.addf %241, %240 : vector<2x32xf32>
    %243 = arith.divf %241, %242 : vector<2x32xf32>
    %244 = vector.extract_strided_slice %231 {offsets = [0, 64], sizes = [2, 32], strides = [1, 1]} : vector<2x128xf32> to vector<2x32xf32>
    %245 = math.tanh %244 : vector<2x32xf32>
    %246 = vector.extract_strided_slice %231 {offsets = [0, 96], sizes = [2, 32], strides = [1, 1]} : vector<2x128xf32> to vector<2x32xf32>
    %247 = arith.negf %246 : vector<2x32xf32>
    %248 = math.exp %247 : vector<2x32xf32>
    %cst_86 = arith.constant 1.000000e+00 : f32
    %249 = vector.broadcast %cst_86 : f32 to vector<2x32xf32>
    %250 = arith.addf %249, %248 : vector<2x32xf32>
    %251 = arith.divf %249, %250 : vector<2x32xf32>
    %252 = arith.mulf %243, %155 : vector<2x32xf32>
    %253 = arith.mulf %237, %245 : vector<2x32xf32>
    %254 = arith.addf %252, %253 : vector<2x32xf32>
    %255 = math.tanh %254 : vector<2x32xf32>
    %256 = arith.mulf %251, %255 : vector<2x32xf32>
    %257 = vector.shape_cast %186 : vector<2x1xi1> to vector<2x1xi1>
    %258 = vector.broadcast %257 : vector<2x1xi1> to vector<2x32xi1>
    %259 = arith.select %258, %256, %152 : vector<2x32xi1>, vector<2x32xf32>
    %260 = vector.shape_cast %186 : vector<2x1xi1> to vector<2x1xi1>
    %261 = vector.broadcast %260 : vector<2x1xi1> to vector<2x32xi1>
    %262 = arith.select %261, %254, %155 : vector<2x32xi1>, vector<2x32xf32>
    %cst_87 = arith.constant 0.000000e+00 : f32
    %263 = vector.shape_cast %186 : vector<2x1xi1> to vector<2x1xi1>
    %264 = vector.broadcast %263 : vector<2x1xi1> to vector<2x32xi1>
    %265 = vector.broadcast %cst_87 : f32 to vector<2x32xf32>
    %266 = arith.select %264, %256, %265 : vector<2x32xi1>, vector<2x32xf32>
    %cst_88 = arith.constant 0.000000e+00 : f32
    %267 = vector.broadcast %cst_88 : f32 to vector<2x32xf32>
    %268 = arith.maximumf %266, %267 : vector<2x32xf32>
    %cst_89 = arith.constant dense<0.000000e+00> : vector<2xf32>
    %269 = vector.multi_reduction <add>, %268, %cst_89 [1] : vector<2x32xf32> to vector<2xf32>
    %270 = vector.shape_cast %269 : vector<2xf32> to vector<2x1xf32>
    %cst_90 = arith.constant 3.200000e+01 : f32
    %271 = vector.broadcast %cst_90 : f32 to vector<2x1xf32>
    %272 = arith.divf %270, %271 : vector<2x1xf32>
    %273 = vector.broadcast %272 : vector<2x1xf32> to vector<2x32xf32>
    %274 = arith.subf %268, %273 : vector<2x32xf32>
    %275 = arith.mulf %274, %274 : vector<2x32xf32>
    %cst_91 = arith.constant dense<0.000000e+00> : vector<2xf32>
    %276 = vector.multi_reduction <add>, %275, %cst_91 [1] : vector<2x32xf32> to vector<2xf32>
    %277 = vector.shape_cast %276 : vector<2xf32> to vector<2x1xf32>
    %cst_92 = arith.constant 3.200000e+01 : f32
    %278 = vector.broadcast %cst_92 : f32 to vector<2x1xf32>
    %279 = arith.divf %277, %278 : vector<2x1xf32>
    %280 = vector.broadcast %272 : vector<2x1xf32> to vector<2x32xf32>
    %281 = arith.subf %268, %280 : vector<2x32xf32>
    %cst_93 = arith.constant 9.99999974E-6 : f32
    %282 = vector.broadcast %cst_93 : f32 to vector<2x1xf32>
    %283 = arith.addf %279, %282 : vector<2x1xf32>
    %284 = math.rsqrt %283 : vector<2x1xf32>
    %285 = vector.broadcast %284 : vector<2x1xf32> to vector<2x32xf32>
    %286 = arith.mulf %281, %285 : vector<2x32xf32>
    %287 = vector.broadcast %63 : vector<1x32xf32> to vector<2x32xf32>
    %288 = arith.mulf %286, %287 : vector<2x32xf32>
    %289 = vector.broadcast %64 : vector<1x32xf32> to vector<2x32xf32>
    %290 = arith.addf %288, %289 : vector<2x32xf32>
    %291 = arith.addf %184, %290 : vector<2x32xf32>
    %c2_i32 = arith.constant 2 : i32
    %292 = vector.broadcast %c2_i32 : i32 to vector<2x1xi32>
    %293 = arith.cmpi slt, %292, %62 : vector<2x1xi32>
    %294 = arith.index_cast %c2_i32 : i32 to index
    %c0_94 = arith.constant 0 : index
    %c0_95 = arith.constant 0 : index
    %295 = vector.load %arg19[%294, %c0_94, %c0_95] : memref<8x2x128xf32, #tpu.memory_space<vmem>>, vector<1x2x128xf32>
    %296 = vector.shape_cast %295 : vector<1x2x128xf32> to vector<2x128xf32>
    %cst_96 = arith.constant dense<0.000000e+00> : vector<2x128xf32>
    %297 = tpu.matmul %219, %65, %cst_96 {dimension_numbers = #tpu.dot_dimension_numbers<[1], [0], [0], [1], [0, 0, 1, 1], [], []>} : vector<2x32xf32>, vector<32x128xf32>, vector<2x128xf32> -> vector<2x128xf32>
    %298 = arith.addf %296, %297 : vector<2x128xf32>
    %299 = vector.extract_strided_slice %298 {offsets = [0, 0], sizes = [2, 32], strides = [1, 1]} : vector<2x128xf32> to vector<2x32xf32>
    %300 = arith.negf %299 : vector<2x32xf32>
    %301 = math.exp %300 : vector<2x32xf32>
    %cst_97 = arith.constant 1.000000e+00 : f32
    %302 = vector.broadcast %cst_97 : f32 to vector<2x32xf32>
    %303 = arith.addf %302, %301 : vector<2x32xf32>
    %304 = arith.divf %302, %303 : vector<2x32xf32>
    %305 = vector.extract_strided_slice %298 {offsets = [0, 32], sizes = [2, 32], strides = [1, 1]} : vector<2x128xf32> to vector<2x32xf32>
    %306 = arith.negf %305 : vector<2x32xf32>
    %307 = math.exp %306 : vector<2x32xf32>
    %cst_98 = arith.constant 1.000000e+00 : f32
    %308 = vector.broadcast %cst_98 : f32 to vector<2x32xf32>
    %309 = arith.addf %308, %307 : vector<2x32xf32>
    %310 = arith.divf %308, %309 : vector<2x32xf32>
    %311 = vector.extract_strided_slice %298 {offsets = [0, 64], sizes = [2, 32], strides = [1, 1]} : vector<2x128xf32> to vector<2x32xf32>
    %312 = math.tanh %311 : vector<2x32xf32>
    %313 = vector.extract_strided_slice %298 {offsets = [0, 96], sizes = [2, 32], strides = [1, 1]} : vector<2x128xf32> to vector<2x32xf32>
    %314 = arith.negf %313 : vector<2x32xf32>
    %315 = math.exp %314 : vector<2x32xf32>
    %cst_99 = arith.constant 1.000000e+00 : f32
    %316 = vector.broadcast %cst_99 : f32 to vector<2x32xf32>
    %317 = arith.addf %316, %315 : vector<2x32xf32>
    %318 = arith.divf %316, %317 : vector<2x32xf32>
    %319 = arith.mulf %310, %222 : vector<2x32xf32>
    %320 = arith.mulf %304, %312 : vector<2x32xf32>
    %321 = arith.addf %319, %320 : vector<2x32xf32>
    %322 = math.tanh %321 : vector<2x32xf32>
    %323 = arith.mulf %318, %322 : vector<2x32xf32>
    %324 = vector.shape_cast %293 : vector<2x1xi1> to vector<2x1xi1>
    %325 = vector.broadcast %324 : vector<2x1xi1> to vector<2x32xi1>
    %326 = arith.select %325, %323, %219 : vector<2x32xi1>, vector<2x32xf32>
    %327 = vector.shape_cast %293 : vector<2x1xi1> to vector<2x1xi1>
    %328 = vector.broadcast %327 : vector<2x1xi1> to vector<2x32xi1>
    %329 = arith.select %328, %321, %222 : vector<2x32xi1>, vector<2x32xf32>
    %cst_100 = arith.constant 0.000000e+00 : f32
    %330 = vector.shape_cast %293 : vector<2x1xi1> to vector<2x1xi1>
    %331 = vector.broadcast %330 : vector<2x1xi1> to vector<2x32xi1>
    %332 = vector.broadcast %cst_100 : f32 to vector<2x32xf32>
    %333 = arith.select %331, %323, %332 : vector<2x32xi1>, vector<2x32xf32>
    %cst_101 = arith.constant dense<0.000000e+00> : vector<2x128xf32>
    %334 = tpu.matmul %333, %67, %cst_101 {dimension_numbers = #tpu.dot_dimension_numbers<[1], [0], [0], [1], [0, 0, 1, 1], [], []>} : vector<2x32xf32>, vector<32x128xf32>, vector<2x128xf32> -> vector<2x128xf32>
    %cst_102 = arith.constant dense<0.000000e+00> : vector<2x128xf32>
    %335 = tpu.matmul %259, %66, %cst_102 {dimension_numbers = #tpu.dot_dimension_numbers<[1], [0], [0], [1], [0, 0, 1, 1], [], []>} : vector<2x32xf32>, vector<32x128xf32>, vector<2x128xf32> -> vector<2x128xf32>
    %336 = arith.addf %334, %335 : vector<2x128xf32>
    %337 = vector.broadcast %68 : vector<1x128xf32> to vector<2x128xf32>
    %338 = arith.addf %336, %337 : vector<2x128xf32>
    %339 = vector.extract_strided_slice %338 {offsets = [0, 0], sizes = [2, 32], strides = [1, 1]} : vector<2x128xf32> to vector<2x32xf32>
    %340 = arith.negf %339 : vector<2x32xf32>
    %341 = math.exp %340 : vector<2x32xf32>
    %cst_103 = arith.constant 1.000000e+00 : f32
    %342 = vector.broadcast %cst_103 : f32 to vector<2x32xf32>
    %343 = arith.addf %342, %341 : vector<2x32xf32>
    %344 = arith.divf %342, %343 : vector<2x32xf32>
    %345 = vector.extract_strided_slice %338 {offsets = [0, 32], sizes = [2, 32], strides = [1, 1]} : vector<2x128xf32> to vector<2x32xf32>
    %346 = arith.negf %345 : vector<2x32xf32>
    %347 = math.exp %346 : vector<2x32xf32>
    %cst_104 = arith.constant 1.000000e+00 : f32
    %348 = vector.broadcast %cst_104 : f32 to vector<2x32xf32>
    %349 = arith.addf %348, %347 : vector<2x32xf32>
    %350 = arith.divf %348, %349 : vector<2x32xf32>
    %351 = vector.extract_strided_slice %338 {offsets = [0, 64], sizes = [2, 32], strides = [1, 1]} : vector<2x128xf32> to vector<2x32xf32>
    %352 = math.tanh %351 : vector<2x32xf32>
    %353 = vector.extract_strided_slice %338 {offsets = [0, 96], sizes = [2, 32], strides = [1, 1]} : vector<2x128xf32> to vector<2x32xf32>
    %354 = arith.negf %353 : vector<2x32xf32>
    %355 = math.exp %354 : vector<2x32xf32>
    %cst_105 = arith.constant 1.000000e+00 : f32
    %356 = vector.broadcast %cst_105 : f32 to vector<2x32xf32>
    %357 = arith.addf %356, %355 : vector<2x32xf32>
    %358 = arith.divf %356, %357 : vector<2x32xf32>
    %359 = arith.mulf %350, %262 : vector<2x32xf32>
    %360 = arith.mulf %344, %352 : vector<2x32xf32>
    %361 = arith.addf %359, %360 : vector<2x32xf32>
    %362 = math.tanh %361 : vector<2x32xf32>
    %363 = arith.mulf %358, %362 : vector<2x32xf32>
    %364 = vector.shape_cast %293 : vector<2x1xi1> to vector<2x1xi1>
    %365 = vector.broadcast %364 : vector<2x1xi1> to vector<2x32xi1>
    %366 = arith.select %365, %363, %259 : vector<2x32xi1>, vector<2x32xf32>
    %367 = vector.shape_cast %293 : vector<2x1xi1> to vector<2x1xi1>
    %368 = vector.broadcast %367 : vector<2x1xi1> to vector<2x32xi1>
    %369 = arith.select %368, %361, %262 : vector<2x32xi1>, vector<2x32xf32>
    %cst_106 = arith.constant 0.000000e+00 : f32
    %370 = vector.shape_cast %293 : vector<2x1xi1> to vector<2x1xi1>
    %371 = vector.broadcast %370 : vector<2x1xi1> to vector<2x32xi1>
    %372 = vector.broadcast %cst_106 : f32 to vector<2x32xf32>
    %373 = arith.select %371, %363, %372 : vector<2x32xi1>, vector<2x32xf32>
    %cst_107 = arith.constant 0.000000e+00 : f32
    %374 = vector.broadcast %cst_107 : f32 to vector<2x32xf32>
    %375 = arith.maximumf %373, %374 : vector<2x32xf32>
    %cst_108 = arith.constant dense<0.000000e+00> : vector<2xf32>
    %376 = vector.multi_reduction <add>, %375, %cst_108 [1] : vector<2x32xf32> to vector<2xf32>
    %377 = vector.shape_cast %376 : vector<2xf32> to vector<2x1xf32>
    %cst_109 = arith.constant 3.200000e+01 : f32
    %378 = vector.broadcast %cst_109 : f32 to vector<2x1xf32>
    %379 = arith.divf %377, %378 : vector<2x1xf32>
    %380 = vector.broadcast %379 : vector<2x1xf32> to vector<2x32xf32>
    %381 = arith.subf %375, %380 : vector<2x32xf32>
    %382 = arith.mulf %381, %381 : vector<2x32xf32>
    %cst_110 = arith.constant dense<0.000000e+00> : vector<2xf32>
    %383 = vector.multi_reduction <add>, %382, %cst_110 [1] : vector<2x32xf32> to vector<2xf32>
    %384 = vector.shape_cast %383 : vector<2xf32> to vector<2x1xf32>
    %cst_111 = arith.constant 3.200000e+01 : f32
    %385 = vector.broadcast %cst_111 : f32 to vector<2x1xf32>
    %386 = arith.divf %384, %385 : vector<2x1xf32>
    %387 = vector.broadcast %379 : vector<2x1xf32> to vector<2x32xf32>
    %388 = arith.subf %375, %387 : vector<2x32xf32>
    %cst_112 = arith.constant 9.99999974E-6 : f32
    %389 = vector.broadcast %cst_112 : f32 to vector<2x1xf32>
    %390 = arith.addf %386, %389 : vector<2x1xf32>
    %391 = math.rsqrt %390 : vector<2x1xf32>
    %392 = vector.broadcast %391 : vector<2x1xf32> to vector<2x32xf32>
    %393 = arith.mulf %388, %392 : vector<2x32xf32>
    %394 = vector.broadcast %63 : vector<1x32xf32> to vector<2x32xf32>
    %395 = arith.mulf %393, %394 : vector<2x32xf32>
    %396 = vector.broadcast %64 : vector<1x32xf32> to vector<2x32xf32>
    %397 = arith.addf %395, %396 : vector<2x32xf32>
    %398 = arith.addf %291, %397 : vector<2x32xf32>
    %c3_i32 = arith.constant 3 : i32
    %399 = vector.broadcast %c3_i32 : i32 to vector<2x1xi32>
    %400 = arith.cmpi slt, %399, %62 : vector<2x1xi32>
    %401 = arith.index_cast %c3_i32 : i32 to index
    %c0_113 = arith.constant 0 : index
    %c0_114 = arith.constant 0 : index
    %402 = vector.load %arg19[%401, %c0_113, %c0_114] : memref<8x2x128xf32, #tpu.memory_space<vmem>>, vector<1x2x128xf32>
    %403 = vector.shape_cast %402 : vector<1x2x128xf32> to vector<2x128xf32>
    %cst_115 = arith.constant dense<0.000000e+00> : vector<2x128xf32>
    %404 = tpu.matmul %326, %65, %cst_115 {dimension_numbers = #tpu.dot_dimension_numbers<[1], [0], [0], [1], [0, 0, 1, 1], [], []>} : vector<2x32xf32>, vector<32x128xf32>, vector<2x128xf32> -> vector<2x128xf32>
    %405 = arith.addf %403, %404 : vector<2x128xf32>
    %406 = vector.extract_strided_slice %405 {offsets = [0, 0], sizes = [2, 32], strides = [1, 1]} : vector<2x128xf32> to vector<2x32xf32>
    %407 = arith.negf %406 : vector<2x32xf32>
    %408 = math.exp %407 : vector<2x32xf32>
    %cst_116 = arith.constant 1.000000e+00 : f32
    %409 = vector.broadcast %cst_116 : f32 to vector<2x32xf32>
    %410 = arith.addf %409, %408 : vector<2x32xf32>
    %411 = arith.divf %409, %410 : vector<2x32xf32>
    %412 = vector.extract_strided_slice %405 {offsets = [0, 32], sizes = [2, 32], strides = [1, 1]} : vector<2x128xf32> to vector<2x32xf32>
    %413 = arith.negf %412 : vector<2x32xf32>
    %414 = math.exp %413 : vector<2x32xf32>
    %cst_117 = arith.constant 1.000000e+00 : f32
    %415 = vector.broadcast %cst_117 : f32 to vector<2x32xf32>
    %416 = arith.addf %415, %414 : vector<2x32xf32>
    %417 = arith.divf %415, %416 : vector<2x32xf32>
    %418 = vector.extract_strided_slice %405 {offsets = [0, 64], sizes = [2, 32], strides = [1, 1]} : vector<2x128xf32> to vector<2x32xf32>
    %419 = math.tanh %418 : vector<2x32xf32>
    %420 = vector.extract_strided_slice %405 {offsets = [0, 96], sizes = [2, 32], strides = [1, 1]} : vector<2x128xf32> to vector<2x32xf32>
    %421 = arith.negf %420 : vector<2x32xf32>
    %422 = math.exp %421 : vector<2x32xf32>
    %cst_118 = arith.constant 1.000000e+00 : f32
    %423 = vector.broadcast %cst_118 : f32 to vector<2x32xf32>
    %424 = arith.addf %423, %422 : vector<2x32xf32>
    %425 = arith.divf %423, %424 : vector<2x32xf32>
    %426 = arith.mulf %417, %329 : vector<2x32xf32>
    %427 = arith.mulf %411, %419 : vector<2x32xf32>
    %428 = arith.addf %426, %427 : vector<2x32xf32>
    %429 = math.tanh %428 : vector<2x32xf32>
    %430 = arith.mulf %425, %429 : vector<2x32xf32>
    %431 = vector.shape_cast %400 : vector<2x1xi1> to vector<2x1xi1>
    %432 = vector.broadcast %431 : vector<2x1xi1> to vector<2x32xi1>
    %433 = arith.select %432, %430, %326 : vector<2x32xi1>, vector<2x32xf32>
    %434 = vector.shape_cast %400 : vector<2x1xi1> to vector<2x1xi1>
    %435 = vector.broadcast %434 : vector<2x1xi1> to vector<2x32xi1>
    %436 = arith.select %435, %428, %329 : vector<2x32xi1>, vector<2x32xf32>
    %cst_119 = arith.constant 0.000000e+00 : f32
    %437 = vector.shape_cast %400 : vector<2x1xi1> to vector<2x1xi1>
    %438 = vector.broadcast %437 : vector<2x1xi1> to vector<2x32xi1>
    %439 = vector.broadcast %cst_119 : f32 to vector<2x32xf32>
    %440 = arith.select %438, %430, %439 : vector<2x32xi1>, vector<2x32xf32>
    %cst_120 = arith.constant dense<0.000000e+00> : vector<2x128xf32>
    %441 = tpu.matmul %440, %67, %cst_120 {dimension_numbers = #tpu.dot_dimension_numbers<[1], [0], [0], [1], [0, 0, 1, 1], [], []>} : vector<2x32xf32>, vector<32x128xf32>, vector<2x128xf32> -> vector<2x128xf32>
    %cst_121 = arith.constant dense<0.000000e+00> : vector<2x128xf32>
    %442 = tpu.matmul %366, %66, %cst_121 {dimension_numbers = #tpu.dot_dimension_numbers<[1], [0], [0], [1], [0, 0, 1, 1], [], []>} : vector<2x32xf32>, vector<32x128xf32>, vector<2x128xf32> -> vector<2x128xf32>
    %443 = arith.addf %441, %442 : vector<2x128xf32>
    %444 = vector.broadcast %68 : vector<1x128xf32> to vector<2x128xf32>
    %445 = arith.addf %443, %444 : vector<2x128xf32>
    %446 = vector.extract_strided_slice %445 {offsets = [0, 0], sizes = [2, 32], strides = [1, 1]} : vector<2x128xf32> to vector<2x32xf32>
    %447 = arith.negf %446 : vector<2x32xf32>
    %448 = math.exp %447 : vector<2x32xf32>
    %cst_122 = arith.constant 1.000000e+00 : f32
    %449 = vector.broadcast %cst_122 : f32 to vector<2x32xf32>
    %450 = arith.addf %449, %448 : vector<2x32xf32>
    %451 = arith.divf %449, %450 : vector<2x32xf32>
    %452 = vector.extract_strided_slice %445 {offsets = [0, 32], sizes = [2, 32], strides = [1, 1]} : vector<2x128xf32> to vector<2x32xf32>
    %453 = arith.negf %452 : vector<2x32xf32>
    %454 = math.exp %453 : vector<2x32xf32>
    %cst_123 = arith.constant 1.000000e+00 : f32
    %455 = vector.broadcast %cst_123 : f32 to vector<2x32xf32>
    %456 = arith.addf %455, %454 : vector<2x32xf32>
    %457 = arith.divf %455, %456 : vector<2x32xf32>
    %458 = vector.extract_strided_slice %445 {offsets = [0, 64], sizes = [2, 32], strides = [1, 1]} : vector<2x128xf32> to vector<2x32xf32>
    %459 = math.tanh %458 : vector<2x32xf32>
    %460 = vector.extract_strided_slice %445 {offsets = [0, 96], sizes = [2, 32], strides = [1, 1]} : vector<2x128xf32> to vector<2x32xf32>
    %461 = arith.negf %460 : vector<2x32xf32>
    %462 = math.exp %461 : vector<2x32xf32>
    %cst_124 = arith.constant 1.000000e+00 : f32
    %463 = vector.broadcast %cst_124 : f32 to vector<2x32xf32>
    %464 = arith.addf %463, %462 : vector<2x32xf32>
    %465 = arith.divf %463, %464 : vector<2x32xf32>
    %466 = arith.mulf %457, %369 : vector<2x32xf32>
    %467 = arith.mulf %451, %459 : vector<2x32xf32>
    %468 = arith.addf %466, %467 : vector<2x32xf32>
    %469 = math.tanh %468 : vector<2x32xf32>
    %470 = arith.mulf %465, %469 : vector<2x32xf32>
    %471 = vector.shape_cast %400 : vector<2x1xi1> to vector<2x1xi1>
    %472 = vector.broadcast %471 : vector<2x1xi1> to vector<2x32xi1>
    %473 = arith.select %472, %470, %366 : vector<2x32xi1>, vector<2x32xf32>
    %474 = vector.shape_cast %400 : vector<2x1xi1> to vector<2x1xi1>
    %475 = vector.broadcast %474 : vector<2x1xi1> to vector<2x32xi1>
    %476 = arith.select %475, %468, %369 : vector<2x32xi1>, vector<2x32xf32>
    %cst_125 = arith.constant 0.000000e+00 : f32
    %477 = vector.shape_cast %400 : vector<2x1xi1> to vector<2x1xi1>
    %478 = vector.broadcast %477 : vector<2x1xi1> to vector<2x32xi1>
    %479 = vector.broadcast %cst_125 : f32 to vector<2x32xf32>
    %480 = arith.select %478, %470, %479 : vector<2x32xi1>, vector<2x32xf32>
    %cst_126 = arith.constant 0.000000e+00 : f32
    %481 = vector.broadcast %cst_126 : f32 to vector<2x32xf32>
    %482 = arith.maximumf %480, %481 : vector<2x32xf32>
    %cst_127 = arith.constant dense<0.000000e+00> : vector<2xf32>
    %483 = vector.multi_reduction <add>, %482, %cst_127 [1] : vector<2x32xf32> to vector<2xf32>
    %484 = vector.shape_cast %483 : vector<2xf32> to vector<2x1xf32>
    %cst_128 = arith.constant 3.200000e+01 : f32
    %485 = vector.broadcast %cst_128 : f32 to vector<2x1xf32>
    %486 = arith.divf %484, %485 : vector<2x1xf32>
    %487 = vector.broadcast %486 : vector<2x1xf32> to vector<2x32xf32>
    %488 = arith.subf %482, %487 : vector<2x32xf32>
    %489 = arith.mulf %488, %488 : vector<2x32xf32>
    %cst_129 = arith.constant dense<0.000000e+00> : vector<2xf32>
    %490 = vector.multi_reduction <add>, %489, %cst_129 [1] : vector<2x32xf32> to vector<2xf32>
    %491 = vector.shape_cast %490 : vector<2xf32> to vector<2x1xf32>
    %cst_130 = arith.constant 3.200000e+01 : f32
    %492 = vector.broadcast %cst_130 : f32 to vector<2x1xf32>
    %493 = arith.divf %491, %492 : vector<2x1xf32>
    %494 = vector.broadcast %486 : vector<2x1xf32> to vector<2x32xf32>
    %495 = arith.subf %482, %494 : vector<2x32xf32>
    %cst_131 = arith.constant 9.99999974E-6 : f32
    %496 = vector.broadcast %cst_131 : f32 to vector<2x1xf32>
    %497 = arith.addf %493, %496 : vector<2x1xf32>
    %498 = math.rsqrt %497 : vector<2x1xf32>
    %499 = vector.broadcast %498 : vector<2x1xf32> to vector<2x32xf32>
    %500 = arith.mulf %495, %499 : vector<2x32xf32>
    %501 = vector.broadcast %63 : vector<1x32xf32> to vector<2x32xf32>
    %502 = arith.mulf %500, %501 : vector<2x32xf32>
    %503 = vector.broadcast %64 : vector<1x32xf32> to vector<2x32xf32>
    %504 = arith.addf %502, %503 : vector<2x32xf32>
    %505 = arith.addf %398, %504 : vector<2x32xf32>
    %c4_i32 = arith.constant 4 : i32
    %506 = vector.broadcast %c4_i32 : i32 to vector<2x1xi32>
    %507 = arith.cmpi slt, %506, %62 : vector<2x1xi32>
    %508 = arith.index_cast %c4_i32 : i32 to index
    %c0_132 = arith.constant 0 : index
    %c0_133 = arith.constant 0 : index
    %509 = vector.load %arg19[%508, %c0_132, %c0_133] : memref<8x2x128xf32, #tpu.memory_space<vmem>>, vector<1x2x128xf32>
    %510 = vector.shape_cast %509 : vector<1x2x128xf32> to vector<2x128xf32>
    %cst_134 = arith.constant dense<0.000000e+00> : vector<2x128xf32>
    %511 = tpu.matmul %433, %65, %cst_134 {dimension_numbers = #tpu.dot_dimension_numbers<[1], [0], [0], [1], [0, 0, 1, 1], [], []>} : vector<2x32xf32>, vector<32x128xf32>, vector<2x128xf32> -> vector<2x128xf32>
    %512 = arith.addf %510, %511 : vector<2x128xf32>
    %513 = vector.extract_strided_slice %512 {offsets = [0, 0], sizes = [2, 32], strides = [1, 1]} : vector<2x128xf32> to vector<2x32xf32>
    %514 = arith.negf %513 : vector<2x32xf32>
    %515 = math.exp %514 : vector<2x32xf32>
    %cst_135 = arith.constant 1.000000e+00 : f32
    %516 = vector.broadcast %cst_135 : f32 to vector<2x32xf32>
    %517 = arith.addf %516, %515 : vector<2x32xf32>
    %518 = arith.divf %516, %517 : vector<2x32xf32>
    %519 = vector.extract_strided_slice %512 {offsets = [0, 32], sizes = [2, 32], strides = [1, 1]} : vector<2x128xf32> to vector<2x32xf32>
    %520 = arith.negf %519 : vector<2x32xf32>
    %521 = math.exp %520 : vector<2x32xf32>
    %cst_136 = arith.constant 1.000000e+00 : f32
    %522 = vector.broadcast %cst_136 : f32 to vector<2x32xf32>
    %523 = arith.addf %522, %521 : vector<2x32xf32>
    %524 = arith.divf %522, %523 : vector<2x32xf32>
    %525 = vector.extract_strided_slice %512 {offsets = [0, 64], sizes = [2, 32], strides = [1, 1]} : vector<2x128xf32> to vector<2x32xf32>
    %526 = math.tanh %525 : vector<2x32xf32>
    %527 = vector.extract_strided_slice %512 {offsets = [0, 96], sizes = [2, 32], strides = [1, 1]} : vector<2x128xf32> to vector<2x32xf32>
    %528 = arith.negf %527 : vector<2x32xf32>
    %529 = math.exp %528 : vector<2x32xf32>
    %cst_137 = arith.constant 1.000000e+00 : f32
    %530 = vector.broadcast %cst_137 : f32 to vector<2x32xf32>
    %531 = arith.addf %530, %529 : vector<2x32xf32>
    %532 = arith.divf %530, %531 : vector<2x32xf32>
    %533 = arith.mulf %524, %436 : vector<2x32xf32>
    %534 = arith.mulf %518, %526 : vector<2x32xf32>
    %535 = arith.addf %533, %534 : vector<2x32xf32>
    %536 = math.tanh %535 : vector<2x32xf32>
    %537 = arith.mulf %532, %536 : vector<2x32xf32>
    %538 = vector.shape_cast %507 : vector<2x1xi1> to vector<2x1xi1>
    %539 = vector.broadcast %538 : vector<2x1xi1> to vector<2x32xi1>
    %540 = arith.select %539, %537, %433 : vector<2x32xi1>, vector<2x32xf32>
    %541 = vector.shape_cast %507 : vector<2x1xi1> to vector<2x1xi1>
    %542 = vector.broadcast %541 : vector<2x1xi1> to vector<2x32xi1>
    %543 = arith.select %542, %535, %436 : vector<2x32xi1>, vector<2x32xf32>
    %cst_138 = arith.constant 0.000000e+00 : f32
    %544 = vector.shape_cast %507 : vector<2x1xi1> to vector<2x1xi1>
    %545 = vector.broadcast %544 : vector<2x1xi1> to vector<2x32xi1>
    %546 = vector.broadcast %cst_138 : f32 to vector<2x32xf32>
    %547 = arith.select %545, %537, %546 : vector<2x32xi1>, vector<2x32xf32>
    %cst_139 = arith.constant dense<0.000000e+00> : vector<2x128xf32>
    %548 = tpu.matmul %547, %67, %cst_139 {dimension_numbers = #tpu.dot_dimension_numbers<[1], [0], [0], [1], [0, 0, 1, 1], [], []>} : vector<2x32xf32>, vector<32x128xf32>, vector<2x128xf32> -> vector<2x128xf32>
    %cst_140 = arith.constant dense<0.000000e+00> : vector<2x128xf32>
    %549 = tpu.matmul %473, %66, %cst_140 {dimension_numbers = #tpu.dot_dimension_numbers<[1], [0], [0], [1], [0, 0, 1, 1], [], []>} : vector<2x32xf32>, vector<32x128xf32>, vector<2x128xf32> -> vector<2x128xf32>
    %550 = arith.addf %548, %549 : vector<2x128xf32>
    %551 = vector.broadcast %68 : vector<1x128xf32> to vector<2x128xf32>
    %552 = arith.addf %550, %551 : vector<2x128xf32>
    %553 = vector.extract_strided_slice %552 {offsets = [0, 0], sizes = [2, 32], strides = [1, 1]} : vector<2x128xf32> to vector<2x32xf32>
    %554 = arith.negf %553 : vector<2x32xf32>
    %555 = math.exp %554 : vector<2x32xf32>
    %cst_141 = arith.constant 1.000000e+00 : f32
    %556 = vector.broadcast %cst_141 : f32 to vector<2x32xf32>
    %557 = arith.addf %556, %555 : vector<2x32xf32>
    %558 = arith.divf %556, %557 : vector<2x32xf32>
    %559 = vector.extract_strided_slice %552 {offsets = [0, 32], sizes = [2, 32], strides = [1, 1]} : vector<2x128xf32> to vector<2x32xf32>
    %560 = arith.negf %559 : vector<2x32xf32>
    %561 = math.exp %560 : vector<2x32xf32>
    %cst_142 = arith.constant 1.000000e+00 : f32
    %562 = vector.broadcast %cst_142 : f32 to vector<2x32xf32>
    %563 = arith.addf %562, %561 : vector<2x32xf32>
    %564 = arith.divf %562, %563 : vector<2x32xf32>
    %565 = vector.extract_strided_slice %552 {offsets = [0, 64], sizes = [2, 32], strides = [1, 1]} : vector<2x128xf32> to vector<2x32xf32>
    %566 = math.tanh %565 : vector<2x32xf32>
    %567 = vector.extract_strided_slice %552 {offsets = [0, 96], sizes = [2, 32], strides = [1, 1]} : vector<2x128xf32> to vector<2x32xf32>
    %568 = arith.negf %567 : vector<2x32xf32>
    %569 = math.exp %568 : vector<2x32xf32>
    %cst_143 = arith.constant 1.000000e+00 : f32
    %570 = vector.broadcast %cst_143 : f32 to vector<2x32xf32>
    %571 = arith.addf %570, %569 : vector<2x32xf32>
    %572 = arith.divf %570, %571 : vector<2x32xf32>
    %573 = arith.mulf %564, %476 : vector<2x32xf32>
    %574 = arith.mulf %558, %566 : vector<2x32xf32>
    %575 = arith.addf %573, %574 : vector<2x32xf32>
    %576 = math.tanh %575 : vector<2x32xf32>
    %577 = arith.mulf %572, %576 : vector<2x32xf32>
    %578 = vector.shape_cast %507 : vector<2x1xi1> to vector<2x1xi1>
    %579 = vector.broadcast %578 : vector<2x1xi1> to vector<2x32xi1>
    %580 = arith.select %579, %577, %473 : vector<2x32xi1>, vector<2x32xf32>
    %581 = vector.shape_cast %507 : vector<2x1xi1> to vector<2x1xi1>
    %582 = vector.broadcast %581 : vector<2x1xi1> to vector<2x32xi1>
    %583 = arith.select %582, %575, %476 : vector<2x32xi1>, vector<2x32xf32>
    %cst_144 = arith.constant 0.000000e+00 : f32
    %584 = vector.shape_cast %507 : vector<2x1xi1> to vector<2x1xi1>
    %585 = vector.broadcast %584 : vector<2x1xi1> to vector<2x32xi1>
    %586 = vector.broadcast %cst_144 : f32 to vector<2x32xf32>
    %587 = arith.select %585, %577, %586 : vector<2x32xi1>, vector<2x32xf32>
    %cst_145 = arith.constant 0.000000e+00 : f32
    %588 = vector.broadcast %cst_145 : f32 to vector<2x32xf32>
    %589 = arith.maximumf %587, %588 : vector<2x32xf32>
    %cst_146 = arith.constant dense<0.000000e+00> : vector<2xf32>
    %590 = vector.multi_reduction <add>, %589, %cst_146 [1] : vector<2x32xf32> to vector<2xf32>
    %591 = vector.shape_cast %590 : vector<2xf32> to vector<2x1xf32>
    %cst_147 = arith.constant 3.200000e+01 : f32
    %592 = vector.broadcast %cst_147 : f32 to vector<2x1xf32>
    %593 = arith.divf %591, %592 : vector<2x1xf32>
    %594 = vector.broadcast %593 : vector<2x1xf32> to vector<2x32xf32>
    %595 = arith.subf %589, %594 : vector<2x32xf32>
    %596 = arith.mulf %595, %595 : vector<2x32xf32>
    %cst_148 = arith.constant dense<0.000000e+00> : vector<2xf32>
    %597 = vector.multi_reduction <add>, %596, %cst_148 [1] : vector<2x32xf32> to vector<2xf32>
    %598 = vector.shape_cast %597 : vector<2xf32> to vector<2x1xf32>
    %cst_149 = arith.constant 3.200000e+01 : f32
    %599 = vector.broadcast %cst_149 : f32 to vector<2x1xf32>
    %600 = arith.divf %598, %599 : vector<2x1xf32>
    %601 = vector.broadcast %593 : vector<2x1xf32> to vector<2x32xf32>
    %602 = arith.subf %589, %601 : vector<2x32xf32>
    %cst_150 = arith.constant 9.99999974E-6 : f32
    %603 = vector.broadcast %cst_150 : f32 to vector<2x1xf32>
    %604 = arith.addf %600, %603 : vector<2x1xf32>
    %605 = math.rsqrt %604 : vector<2x1xf32>
    %606 = vector.broadcast %605 : vector<2x1xf32> to vector<2x32xf32>
    %607 = arith.mulf %602, %606 : vector<2x32xf32>
    %608 = vector.broadcast %63 : vector<1x32xf32> to vector<2x32xf32>
    %609 = arith.mulf %607, %608 : vector<2x32xf32>
    %610 = vector.broadcast %64 : vector<1x32xf32> to vector<2x32xf32>
    %611 = arith.addf %609, %610 : vector<2x32xf32>
    %612 = arith.addf %505, %611 : vector<2x32xf32>
    %c5_i32 = arith.constant 5 : i32
    %613 = vector.broadcast %c5_i32 : i32 to vector<2x1xi32>
    %614 = arith.cmpi slt, %613, %62 : vector<2x1xi32>
    %615 = arith.index_cast %c5_i32 : i32 to index
    %c0_151 = arith.constant 0 : index
    %c0_152 = arith.constant 0 : index
    %616 = vector.load %arg19[%615, %c0_151, %c0_152] : memref<8x2x128xf32, #tpu.memory_space<vmem>>, vector<1x2x128xf32>
    %617 = vector.shape_cast %616 : vector<1x2x128xf32> to vector<2x128xf32>
    %cst_153 = arith.constant dense<0.000000e+00> : vector<2x128xf32>
    %618 = tpu.matmul %540, %65, %cst_153 {dimension_numbers = #tpu.dot_dimension_numbers<[1], [0], [0], [1], [0, 0, 1, 1], [], []>} : vector<2x32xf32>, vector<32x128xf32>, vector<2x128xf32> -> vector<2x128xf32>
    %619 = arith.addf %617, %618 : vector<2x128xf32>
    %620 = vector.extract_strided_slice %619 {offsets = [0, 0], sizes = [2, 32], strides = [1, 1]} : vector<2x128xf32> to vector<2x32xf32>
    %621 = arith.negf %620 : vector<2x32xf32>
    %622 = math.exp %621 : vector<2x32xf32>
    %cst_154 = arith.constant 1.000000e+00 : f32
    %623 = vector.broadcast %cst_154 : f32 to vector<2x32xf32>
    %624 = arith.addf %623, %622 : vector<2x32xf32>
    %625 = arith.divf %623, %624 : vector<2x32xf32>
    %626 = vector.extract_strided_slice %619 {offsets = [0, 32], sizes = [2, 32], strides = [1, 1]} : vector<2x128xf32> to vector<2x32xf32>
    %627 = arith.negf %626 : vector<2x32xf32>
    %628 = math.exp %627 : vector<2x32xf32>
    %cst_155 = arith.constant 1.000000e+00 : f32
    %629 = vector.broadcast %cst_155 : f32 to vector<2x32xf32>
    %630 = arith.addf %629, %628 : vector<2x32xf32>
    %631 = arith.divf %629, %630 : vector<2x32xf32>
    %632 = vector.extract_strided_slice %619 {offsets = [0, 64], sizes = [2, 32], strides = [1, 1]} : vector<2x128xf32> to vector<2x32xf32>
    %633 = math.tanh %632 : vector<2x32xf32>
    %634 = vector.extract_strided_slice %619 {offsets = [0, 96], sizes = [2, 32], strides = [1, 1]} : vector<2x128xf32> to vector<2x32xf32>
    %635 = arith.negf %634 : vector<2x32xf32>
    %636 = math.exp %635 : vector<2x32xf32>
    %cst_156 = arith.constant 1.000000e+00 : f32
    %637 = vector.broadcast %cst_156 : f32 to vector<2x32xf32>
    %638 = arith.addf %637, %636 : vector<2x32xf32>
    %639 = arith.divf %637, %638 : vector<2x32xf32>
    %640 = arith.mulf %631, %543 : vector<2x32xf32>
    %641 = arith.mulf %625, %633 : vector<2x32xf32>
    %642 = arith.addf %640, %641 : vector<2x32xf32>
    %643 = math.tanh %642 : vector<2x32xf32>
    %644 = arith.mulf %639, %643 : vector<2x32xf32>
    %645 = vector.shape_cast %614 : vector<2x1xi1> to vector<2x1xi1>
    %646 = vector.broadcast %645 : vector<2x1xi1> to vector<2x32xi1>
    %647 = arith.select %646, %644, %540 : vector<2x32xi1>, vector<2x32xf32>
    %648 = vector.shape_cast %614 : vector<2x1xi1> to vector<2x1xi1>
    %649 = vector.broadcast %648 : vector<2x1xi1> to vector<2x32xi1>
    %650 = arith.select %649, %642, %543 : vector<2x32xi1>, vector<2x32xf32>
    %cst_157 = arith.constant 0.000000e+00 : f32
    %651 = vector.shape_cast %614 : vector<2x1xi1> to vector<2x1xi1>
    %652 = vector.broadcast %651 : vector<2x1xi1> to vector<2x32xi1>
    %653 = vector.broadcast %cst_157 : f32 to vector<2x32xf32>
    %654 = arith.select %652, %644, %653 : vector<2x32xi1>, vector<2x32xf32>
    %cst_158 = arith.constant dense<0.000000e+00> : vector<2x128xf32>
    %655 = tpu.matmul %654, %67, %cst_158 {dimension_numbers = #tpu.dot_dimension_numbers<[1], [0], [0], [1], [0, 0, 1, 1], [], []>} : vector<2x32xf32>, vector<32x128xf32>, vector<2x128xf32> -> vector<2x128xf32>
    %cst_159 = arith.constant dense<0.000000e+00> : vector<2x128xf32>
    %656 = tpu.matmul %580, %66, %cst_159 {dimension_numbers = #tpu.dot_dimension_numbers<[1], [0], [0], [1], [0, 0, 1, 1], [], []>} : vector<2x32xf32>, vector<32x128xf32>, vector<2x128xf32> -> vector<2x128xf32>
    %657 = arith.addf %655, %656 : vector<2x128xf32>
    %658 = vector.broadcast %68 : vector<1x128xf32> to vector<2x128xf32>
    %659 = arith.addf %657, %658 : vector<2x128xf32>
    %660 = vector.extract_strided_slice %659 {offsets = [0, 0], sizes = [2, 32], strides = [1, 1]} : vector<2x128xf32> to vector<2x32xf32>
    %661 = arith.negf %660 : vector<2x32xf32>
    %662 = math.exp %661 : vector<2x32xf32>
    %cst_160 = arith.constant 1.000000e+00 : f32
    %663 = vector.broadcast %cst_160 : f32 to vector<2x32xf32>
    %664 = arith.addf %663, %662 : vector<2x32xf32>
    %665 = arith.divf %663, %664 : vector<2x32xf32>
    %666 = vector.extract_strided_slice %659 {offsets = [0, 32], sizes = [2, 32], strides = [1, 1]} : vector<2x128xf32> to vector<2x32xf32>
    %667 = arith.negf %666 : vector<2x32xf32>
    %668 = math.exp %667 : vector<2x32xf32>
    %cst_161 = arith.constant 1.000000e+00 : f32
    %669 = vector.broadcast %cst_161 : f32 to vector<2x32xf32>
    %670 = arith.addf %669, %668 : vector<2x32xf32>
    %671 = arith.divf %669, %670 : vector<2x32xf32>
    %672 = vector.extract_strided_slice %659 {offsets = [0, 64], sizes = [2, 32], strides = [1, 1]} : vector<2x128xf32> to vector<2x32xf32>
    %673 = math.tanh %672 : vector<2x32xf32>
    %674 = vector.extract_strided_slice %659 {offsets = [0, 96], sizes = [2, 32], strides = [1, 1]} : vector<2x128xf32> to vector<2x32xf32>
    %675 = arith.negf %674 : vector<2x32xf32>
    %676 = math.exp %675 : vector<2x32xf32>
    %cst_162 = arith.constant 1.000000e+00 : f32
    %677 = vector.broadcast %cst_162 : f32 to vector<2x32xf32>
    %678 = arith.addf %677, %676 : vector<2x32xf32>
    %679 = arith.divf %677, %678 : vector<2x32xf32>
    %680 = arith.mulf %671, %583 : vector<2x32xf32>
    %681 = arith.mulf %665, %673 : vector<2x32xf32>
    %682 = arith.addf %680, %681 : vector<2x32xf32>
    %683 = math.tanh %682 : vector<2x32xf32>
    %684 = arith.mulf %679, %683 : vector<2x32xf32>
    %685 = vector.shape_cast %614 : vector<2x1xi1> to vector<2x1xi1>
    %686 = vector.broadcast %685 : vector<2x1xi1> to vector<2x32xi1>
    %687 = arith.select %686, %684, %580 : vector<2x32xi1>, vector<2x32xf32>
    %688 = vector.shape_cast %614 : vector<2x1xi1> to vector<2x1xi1>
    %689 = vector.broadcast %688 : vector<2x1xi1> to vector<2x32xi1>
    %690 = arith.select %689, %682, %583 : vector<2x32xi1>, vector<2x32xf32>
    %cst_163 = arith.constant 0.000000e+00 : f32
    %691 = vector.shape_cast %614 : vector<2x1xi1> to vector<2x1xi1>
    %692 = vector.broadcast %691 : vector<2x1xi1> to vector<2x32xi1>
    %693 = vector.broadcast %cst_163 : f32 to vector<2x32xf32>
    %694 = arith.select %692, %684, %693 : vector<2x32xi1>, vector<2x32xf32>
    %cst_164 = arith.constant 0.000000e+00 : f32
    %695 = vector.broadcast %cst_164 : f32 to vector<2x32xf32>
    %696 = arith.maximumf %694, %695 : vector<2x32xf32>
    %cst_165 = arith.constant dense<0.000000e+00> : vector<2xf32>
    %697 = vector.multi_reduction <add>, %696, %cst_165 [1] : vector<2x32xf32> to vector<2xf32>
    %698 = vector.shape_cast %697 : vector<2xf32> to vector<2x1xf32>
    %cst_166 = arith.constant 3.200000e+01 : f32
    %699 = vector.broadcast %cst_166 : f32 to vector<2x1xf32>
    %700 = arith.divf %698, %699 : vector<2x1xf32>
    %701 = vector.broadcast %700 : vector<2x1xf32> to vector<2x32xf32>
    %702 = arith.subf %696, %701 : vector<2x32xf32>
    %703 = arith.mulf %702, %702 : vector<2x32xf32>
    %cst_167 = arith.constant dense<0.000000e+00> : vector<2xf32>
    %704 = vector.multi_reduction <add>, %703, %cst_167 [1] : vector<2x32xf32> to vector<2xf32>
    %705 = vector.shape_cast %704 : vector<2xf32> to vector<2x1xf32>
    %cst_168 = arith.constant 3.200000e+01 : f32
    %706 = vector.broadcast %cst_168 : f32 to vector<2x1xf32>
    %707 = arith.divf %705, %706 : vector<2x1xf32>
    %708 = vector.broadcast %700 : vector<2x1xf32> to vector<2x32xf32>
    %709 = arith.subf %696, %708 : vector<2x32xf32>
    %cst_169 = arith.constant 9.99999974E-6 : f32
    %710 = vector.broadcast %cst_169 : f32 to vector<2x1xf32>
    %711 = arith.addf %707, %710 : vector<2x1xf32>
    %712 = math.rsqrt %711 : vector<2x1xf32>
    %713 = vector.broadcast %712 : vector<2x1xf32> to vector<2x32xf32>
    %714 = arith.mulf %709, %713 : vector<2x32xf32>
    %715 = vector.broadcast %63 : vector<1x32xf32> to vector<2x32xf32>
    %716 = arith.mulf %714, %715 : vector<2x32xf32>
    %717 = vector.broadcast %64 : vector<1x32xf32> to vector<2x32xf32>
    %718 = arith.addf %716, %717 : vector<2x32xf32>
    %719 = arith.addf %612, %718 : vector<2x32xf32>
    %c6_i32 = arith.constant 6 : i32
    %720 = vector.broadcast %c6_i32 : i32 to vector<2x1xi32>
    %721 = arith.cmpi slt, %720, %62 : vector<2x1xi32>
    %722 = arith.index_cast %c6_i32 : i32 to index
    %c0_170 = arith.constant 0 : index
    %c0_171 = arith.constant 0 : index
    %723 = vector.load %arg19[%722, %c0_170, %c0_171] : memref<8x2x128xf32, #tpu.memory_space<vmem>>, vector<1x2x128xf32>
    %724 = vector.shape_cast %723 : vector<1x2x128xf32> to vector<2x128xf32>
    %cst_172 = arith.constant dense<0.000000e+00> : vector<2x128xf32>
    %725 = tpu.matmul %647, %65, %cst_172 {dimension_numbers = #tpu.dot_dimension_numbers<[1], [0], [0], [1], [0, 0, 1, 1], [], []>} : vector<2x32xf32>, vector<32x128xf32>, vector<2x128xf32> -> vector<2x128xf32>
    %726 = arith.addf %724, %725 : vector<2x128xf32>
    %727 = vector.extract_strided_slice %726 {offsets = [0, 0], sizes = [2, 32], strides = [1, 1]} : vector<2x128xf32> to vector<2x32xf32>
    %728 = arith.negf %727 : vector<2x32xf32>
    %729 = math.exp %728 : vector<2x32xf32>
    %cst_173 = arith.constant 1.000000e+00 : f32
    %730 = vector.broadcast %cst_173 : f32 to vector<2x32xf32>
    %731 = arith.addf %730, %729 : vector<2x32xf32>
    %732 = arith.divf %730, %731 : vector<2x32xf32>
    %733 = vector.extract_strided_slice %726 {offsets = [0, 32], sizes = [2, 32], strides = [1, 1]} : vector<2x128xf32> to vector<2x32xf32>
    %734 = arith.negf %733 : vector<2x32xf32>
    %735 = math.exp %734 : vector<2x32xf32>
    %cst_174 = arith.constant 1.000000e+00 : f32
    %736 = vector.broadcast %cst_174 : f32 to vector<2x32xf32>
    %737 = arith.addf %736, %735 : vector<2x32xf32>
    %738 = arith.divf %736, %737 : vector<2x32xf32>
    %739 = vector.extract_strided_slice %726 {offsets = [0, 64], sizes = [2, 32], strides = [1, 1]} : vector<2x128xf32> to vector<2x32xf32>
    %740 = math.tanh %739 : vector<2x32xf32>
    %741 = vector.extract_strided_slice %726 {offsets = [0, 96], sizes = [2, 32], strides = [1, 1]} : vector<2x128xf32> to vector<2x32xf32>
    %742 = arith.negf %741 : vector<2x32xf32>
    %743 = math.exp %742 : vector<2x32xf32>
    %cst_175 = arith.constant 1.000000e+00 : f32
    %744 = vector.broadcast %cst_175 : f32 to vector<2x32xf32>
    %745 = arith.addf %744, %743 : vector<2x32xf32>
    %746 = arith.divf %744, %745 : vector<2x32xf32>
    %747 = arith.mulf %738, %650 : vector<2x32xf32>
    %748 = arith.mulf %732, %740 : vector<2x32xf32>
    %749 = arith.addf %747, %748 : vector<2x32xf32>
    %750 = math.tanh %749 : vector<2x32xf32>
    %751 = arith.mulf %746, %750 : vector<2x32xf32>
    %752 = vector.shape_cast %721 : vector<2x1xi1> to vector<2x1xi1>
    %753 = vector.broadcast %752 : vector<2x1xi1> to vector<2x32xi1>
    %754 = arith.select %753, %751, %647 : vector<2x32xi1>, vector<2x32xf32>
    %755 = vector.shape_cast %721 : vector<2x1xi1> to vector<2x1xi1>
    %756 = vector.broadcast %755 : vector<2x1xi1> to vector<2x32xi1>
    %757 = arith.select %756, %749, %650 : vector<2x32xi1>, vector<2x32xf32>
    %cst_176 = arith.constant 0.000000e+00 : f32
    %758 = vector.shape_cast %721 : vector<2x1xi1> to vector<2x1xi1>
    %759 = vector.broadcast %758 : vector<2x1xi1> to vector<2x32xi1>
    %760 = vector.broadcast %cst_176 : f32 to vector<2x32xf32>
    %761 = arith.select %759, %751, %760 : vector<2x32xi1>, vector<2x32xf32>
    %cst_177 = arith.constant dense<0.000000e+00> : vector<2x128xf32>
    %762 = tpu.matmul %761, %67, %cst_177 {dimension_numbers = #tpu.dot_dimension_numbers<[1], [0], [0], [1], [0, 0, 1, 1], [], []>} : vector<2x32xf32>, vector<32x128xf32>, vector<2x128xf32> -> vector<2x128xf32>
    %cst_178 = arith.constant dense<0.000000e+00> : vector<2x128xf32>
    %763 = tpu.matmul %687, %66, %cst_178 {dimension_numbers = #tpu.dot_dimension_numbers<[1], [0], [0], [1], [0, 0, 1, 1], [], []>} : vector<2x32xf32>, vector<32x128xf32>, vector<2x128xf32> -> vector<2x128xf32>
    %764 = arith.addf %762, %763 : vector<2x128xf32>
    %765 = vector.broadcast %68 : vector<1x128xf32> to vector<2x128xf32>
    %766 = arith.addf %764, %765 : vector<2x128xf32>
    %767 = vector.extract_strided_slice %766 {offsets = [0, 0], sizes = [2, 32], strides = [1, 1]} : vector<2x128xf32> to vector<2x32xf32>
    %768 = arith.negf %767 : vector<2x32xf32>
    %769 = math.exp %768 : vector<2x32xf32>
    %cst_179 = arith.constant 1.000000e+00 : f32
    %770 = vector.broadcast %cst_179 : f32 to vector<2x32xf32>
    %771 = arith.addf %770, %769 : vector<2x32xf32>
    %772 = arith.divf %770, %771 : vector<2x32xf32>
    %773 = vector.extract_strided_slice %766 {offsets = [0, 32], sizes = [2, 32], strides = [1, 1]} : vector<2x128xf32> to vector<2x32xf32>
    %774 = arith.negf %773 : vector<2x32xf32>
    %775 = math.exp %774 : vector<2x32xf32>
    %cst_180 = arith.constant 1.000000e+00 : f32
    %776 = vector.broadcast %cst_180 : f32 to vector<2x32xf32>
    %777 = arith.addf %776, %775 : vector<2x32xf32>
    %778 = arith.divf %776, %777 : vector<2x32xf32>
    %779 = vector.extract_strided_slice %766 {offsets = [0, 64], sizes = [2, 32], strides = [1, 1]} : vector<2x128xf32> to vector<2x32xf32>
    %780 = math.tanh %779 : vector<2x32xf32>
    %781 = vector.extract_strided_slice %766 {offsets = [0, 96], sizes = [2, 32], strides = [1, 1]} : vector<2x128xf32> to vector<2x32xf32>
    %782 = arith.negf %781 : vector<2x32xf32>
    %783 = math.exp %782 : vector<2x32xf32>
    %cst_181 = arith.constant 1.000000e+00 : f32
    %784 = vector.broadcast %cst_181 : f32 to vector<2x32xf32>
    %785 = arith.addf %784, %783 : vector<2x32xf32>
    %786 = arith.divf %784, %785 : vector<2x32xf32>
    %787 = arith.mulf %778, %690 : vector<2x32xf32>
    %788 = arith.mulf %772, %780 : vector<2x32xf32>
    %789 = arith.addf %787, %788 : vector<2x32xf32>
    %790 = math.tanh %789 : vector<2x32xf32>
    %791 = arith.mulf %786, %790 : vector<2x32xf32>
    %792 = vector.shape_cast %721 : vector<2x1xi1> to vector<2x1xi1>
    %793 = vector.broadcast %792 : vector<2x1xi1> to vector<2x32xi1>
    %794 = arith.select %793, %791, %687 : vector<2x32xi1>, vector<2x32xf32>
    %795 = vector.shape_cast %721 : vector<2x1xi1> to vector<2x1xi1>
    %796 = vector.broadcast %795 : vector<2x1xi1> to vector<2x32xi1>
    %797 = arith.select %796, %789, %690 : vector<2x32xi1>, vector<2x32xf32>
    %cst_182 = arith.constant 0.000000e+00 : f32
    %798 = vector.shape_cast %721 : vector<2x1xi1> to vector<2x1xi1>
    %799 = vector.broadcast %798 : vector<2x1xi1> to vector<2x32xi1>
    %800 = vector.broadcast %cst_182 : f32 to vector<2x32xf32>
    %801 = arith.select %799, %791, %800 : vector<2x32xi1>, vector<2x32xf32>
    %cst_183 = arith.constant 0.000000e+00 : f32
    %802 = vector.broadcast %cst_183 : f32 to vector<2x32xf32>
    %803 = arith.maximumf %801, %802 : vector<2x32xf32>
    %cst_184 = arith.constant dense<0.000000e+00> : vector<2xf32>
    %804 = vector.multi_reduction <add>, %803, %cst_184 [1] : vector<2x32xf32> to vector<2xf32>
    %805 = vector.shape_cast %804 : vector<2xf32> to vector<2x1xf32>
    %cst_185 = arith.constant 3.200000e+01 : f32
    %806 = vector.broadcast %cst_185 : f32 to vector<2x1xf32>
    %807 = arith.divf %805, %806 : vector<2x1xf32>
    %808 = vector.broadcast %807 : vector<2x1xf32> to vector<2x32xf32>
    %809 = arith.subf %803, %808 : vector<2x32xf32>
    %810 = arith.mulf %809, %809 : vector<2x32xf32>
    %cst_186 = arith.constant dense<0.000000e+00> : vector<2xf32>
    %811 = vector.multi_reduction <add>, %810, %cst_186 [1] : vector<2x32xf32> to vector<2xf32>
    %812 = vector.shape_cast %811 : vector<2xf32> to vector<2x1xf32>
    %cst_187 = arith.constant 3.200000e+01 : f32
    %813 = vector.broadcast %cst_187 : f32 to vector<2x1xf32>
    %814 = arith.divf %812, %813 : vector<2x1xf32>
    %815 = vector.broadcast %807 : vector<2x1xf32> to vector<2x32xf32>
    %816 = arith.subf %803, %815 : vector<2x32xf32>
    %cst_188 = arith.constant 9.99999974E-6 : f32
    %817 = vector.broadcast %cst_188 : f32 to vector<2x1xf32>
    %818 = arith.addf %814, %817 : vector<2x1xf32>
    %819 = math.rsqrt %818 : vector<2x1xf32>
    %820 = vector.broadcast %819 : vector<2x1xf32> to vector<2x32xf32>
    %821 = arith.mulf %816, %820 : vector<2x32xf32>
    %822 = vector.broadcast %63 : vector<1x32xf32> to vector<2x32xf32>
    %823 = arith.mulf %821, %822 : vector<2x32xf32>
    %824 = vector.broadcast %64 : vector<1x32xf32> to vector<2x32xf32>
    %825 = arith.addf %823, %824 : vector<2x32xf32>
    %826 = arith.addf %719, %825 : vector<2x32xf32>
    %c7_i32 = arith.constant 7 : i32
    %827 = vector.broadcast %c7_i32 : i32 to vector<2x1xi32>
    %828 = arith.cmpi slt, %827, %62 : vector<2x1xi32>
    %829 = arith.index_cast %c7_i32 : i32 to index
    %c0_189 = arith.constant 0 : index
    %c0_190 = arith.constant 0 : index
    %830 = vector.load %arg19[%829, %c0_189, %c0_190] : memref<8x2x128xf32, #tpu.memory_space<vmem>>, vector<1x2x128xf32>
    %831 = vector.shape_cast %830 : vector<1x2x128xf32> to vector<2x128xf32>
    %cst_191 = arith.constant dense<0.000000e+00> : vector<2x128xf32>
    %832 = tpu.matmul %754, %65, %cst_191 {dimension_numbers = #tpu.dot_dimension_numbers<[1], [0], [0], [1], [0, 0, 1, 1], [], []>} : vector<2x32xf32>, vector<32x128xf32>, vector<2x128xf32> -> vector<2x128xf32>
    %833 = arith.addf %831, %832 : vector<2x128xf32>
    %834 = vector.extract_strided_slice %833 {offsets = [0, 0], sizes = [2, 32], strides = [1, 1]} : vector<2x128xf32> to vector<2x32xf32>
    %835 = arith.negf %834 : vector<2x32xf32>
    %836 = math.exp %835 : vector<2x32xf32>
    %cst_192 = arith.constant 1.000000e+00 : f32
    %837 = vector.broadcast %cst_192 : f32 to vector<2x32xf32>
    %838 = arith.addf %837, %836 : vector<2x32xf32>
    %839 = arith.divf %837, %838 : vector<2x32xf32>
    %840 = vector.extract_strided_slice %833 {offsets = [0, 32], sizes = [2, 32], strides = [1, 1]} : vector<2x128xf32> to vector<2x32xf32>
    %841 = arith.negf %840 : vector<2x32xf32>
    %842 = math.exp %841 : vector<2x32xf32>
    %cst_193 = arith.constant 1.000000e+00 : f32
    %843 = vector.broadcast %cst_193 : f32 to vector<2x32xf32>
    %844 = arith.addf %843, %842 : vector<2x32xf32>
    %845 = arith.divf %843, %844 : vector<2x32xf32>
    %846 = vector.extract_strided_slice %833 {offsets = [0, 64], sizes = [2, 32], strides = [1, 1]} : vector<2x128xf32> to vector<2x32xf32>
    %847 = math.tanh %846 : vector<2x32xf32>
    %848 = vector.extract_strided_slice %833 {offsets = [0, 96], sizes = [2, 32], strides = [1, 1]} : vector<2x128xf32> to vector<2x32xf32>
    %849 = arith.negf %848 : vector<2x32xf32>
    %850 = math.exp %849 : vector<2x32xf32>
    %cst_194 = arith.constant 1.000000e+00 : f32
    %851 = vector.broadcast %cst_194 : f32 to vector<2x32xf32>
    %852 = arith.addf %851, %850 : vector<2x32xf32>
    %853 = arith.divf %851, %852 : vector<2x32xf32>
    %854 = arith.mulf %845, %757 : vector<2x32xf32>
    %855 = arith.mulf %839, %847 : vector<2x32xf32>
    %856 = arith.addf %854, %855 : vector<2x32xf32>
    %857 = math.tanh %856 : vector<2x32xf32>
    %858 = arith.mulf %853, %857 : vector<2x32xf32>
    %859 = vector.shape_cast %828 : vector<2x1xi1> to vector<2x1xi1>
    %860 = vector.broadcast %859 : vector<2x1xi1> to vector<2x32xi1>
    %861 = arith.select %860, %858, %754 : vector<2x32xi1>, vector<2x32xf32>
    %862 = vector.shape_cast %828 : vector<2x1xi1> to vector<2x1xi1>
    %863 = vector.broadcast %862 : vector<2x1xi1> to vector<2x32xi1>
    %864 = arith.select %863, %856, %757 : vector<2x32xi1>, vector<2x32xf32>
    %cst_195 = arith.constant 0.000000e+00 : f32
    %865 = vector.shape_cast %828 : vector<2x1xi1> to vector<2x1xi1>
    %866 = vector.broadcast %865 : vector<2x1xi1> to vector<2x32xi1>
    %867 = vector.broadcast %cst_195 : f32 to vector<2x32xf32>
    %868 = arith.select %866, %858, %867 : vector<2x32xi1>, vector<2x32xf32>
    %cst_196 = arith.constant dense<0.000000e+00> : vector<2x128xf32>
    %869 = tpu.matmul %868, %67, %cst_196 {dimension_numbers = #tpu.dot_dimension_numbers<[1], [0], [0], [1], [0, 0, 1, 1], [], []>} : vector<2x32xf32>, vector<32x128xf32>, vector<2x128xf32> -> vector<2x128xf32>
    %cst_197 = arith.constant dense<0.000000e+00> : vector<2x128xf32>
    %870 = tpu.matmul %794, %66, %cst_197 {dimension_numbers = #tpu.dot_dimension_numbers<[1], [0], [0], [1], [0, 0, 1, 1], [], []>} : vector<2x32xf32>, vector<32x128xf32>, vector<2x128xf32> -> vector<2x128xf32>
    %871 = arith.addf %869, %870 : vector<2x128xf32>
    %872 = vector.broadcast %68 : vector<1x128xf32> to vector<2x128xf32>
    %873 = arith.addf %871, %872 : vector<2x128xf32>
    %874 = vector.extract_strided_slice %873 {offsets = [0, 0], sizes = [2, 32], strides = [1, 1]} : vector<2x128xf32> to vector<2x32xf32>
    %875 = arith.negf %874 : vector<2x32xf32>
    %876 = math.exp %875 : vector<2x32xf32>
    %cst_198 = arith.constant 1.000000e+00 : f32
    %877 = vector.broadcast %cst_198 : f32 to vector<2x32xf32>
    %878 = arith.addf %877, %876 : vector<2x32xf32>
    %879 = arith.divf %877, %878 : vector<2x32xf32>
    %880 = vector.extract_strided_slice %873 {offsets = [0, 32], sizes = [2, 32], strides = [1, 1]} : vector<2x128xf32> to vector<2x32xf32>
    %881 = arith.negf %880 : vector<2x32xf32>
    %882 = math.exp %881 : vector<2x32xf32>
    %cst_199 = arith.constant 1.000000e+00 : f32
    %883 = vector.broadcast %cst_199 : f32 to vector<2x32xf32>
    %884 = arith.addf %883, %882 : vector<2x32xf32>
    %885 = arith.divf %883, %884 : vector<2x32xf32>
    %886 = vector.extract_strided_slice %873 {offsets = [0, 64], sizes = [2, 32], strides = [1, 1]} : vector<2x128xf32> to vector<2x32xf32>
    %887 = math.tanh %886 : vector<2x32xf32>
    %888 = vector.extract_strided_slice %873 {offsets = [0, 96], sizes = [2, 32], strides = [1, 1]} : vector<2x128xf32> to vector<2x32xf32>
    %889 = arith.negf %888 : vector<2x32xf32>
    %890 = math.exp %889 : vector<2x32xf32>
    %cst_200 = arith.constant 1.000000e+00 : f32
    %891 = vector.broadcast %cst_200 : f32 to vector<2x32xf32>
    %892 = arith.addf %891, %890 : vector<2x32xf32>
    %893 = arith.divf %891, %892 : vector<2x32xf32>
    %894 = arith.mulf %885, %797 : vector<2x32xf32>
    %895 = arith.mulf %879, %887 : vector<2x32xf32>
    %896 = arith.addf %894, %895 : vector<2x32xf32>
    %897 = math.tanh %896 : vector<2x32xf32>
    %898 = arith.mulf %893, %897 : vector<2x32xf32>
    %899 = vector.shape_cast %828 : vector<2x1xi1> to vector<2x1xi1>
    %900 = vector.broadcast %899 : vector<2x1xi1> to vector<2x32xi1>
    %901 = arith.select %900, %898, %794 : vector<2x32xi1>, vector<2x32xf32>
    %902 = vector.shape_cast %828 : vector<2x1xi1> to vector<2x1xi1>
    %903 = vector.broadcast %902 : vector<2x1xi1> to vector<2x32xi1>
    %904 = arith.select %903, %896, %797 : vector<2x32xi1>, vector<2x32xf32>
    %cst_201 = arith.constant 0.000000e+00 : f32
    %905 = vector.shape_cast %828 : vector<2x1xi1> to vector<2x1xi1>
    %906 = vector.broadcast %905 : vector<2x1xi1> to vector<2x32xi1>
    %907 = vector.broadcast %cst_201 : f32 to vector<2x32xf32>
    %908 = arith.select %906, %898, %907 : vector<2x32xi1>, vector<2x32xf32>
    %cst_202 = arith.constant 0.000000e+00 : f32
    %909 = vector.broadcast %cst_202 : f32 to vector<2x32xf32>
    %910 = arith.maximumf %908, %909 : vector<2x32xf32>
    %cst_203 = arith.constant dense<0.000000e+00> : vector<2xf32>
    %911 = vector.multi_reduction <add>, %910, %cst_203 [1] : vector<2x32xf32> to vector<2xf32>
    %912 = vector.shape_cast %911 : vector<2xf32> to vector<2x1xf32>
    %cst_204 = arith.constant 3.200000e+01 : f32
    %913 = vector.broadcast %cst_204 : f32 to vector<2x1xf32>
    %914 = arith.divf %912, %913 : vector<2x1xf32>
    %915 = vector.broadcast %914 : vector<2x1xf32> to vector<2x32xf32>
    %916 = arith.subf %910, %915 : vector<2x32xf32>
    %917 = arith.mulf %916, %916 : vector<2x32xf32>
    %cst_205 = arith.constant dense<0.000000e+00> : vector<2xf32>
    %918 = vector.multi_reduction <add>, %917, %cst_205 [1] : vector<2x32xf32> to vector<2xf32>
    %919 = vector.shape_cast %918 : vector<2xf32> to vector<2x1xf32>
    %cst_206 = arith.constant 3.200000e+01 : f32
    %920 = vector.broadcast %cst_206 : f32 to vector<2x1xf32>
    %921 = arith.divf %919, %920 : vector<2x1xf32>
    %922 = vector.broadcast %914 : vector<2x1xf32> to vector<2x32xf32>
    %923 = arith.subf %910, %922 : vector<2x32xf32>
    %cst_207 = arith.constant 9.99999974E-6 : f32
    %924 = vector.broadcast %cst_207 : f32 to vector<2x1xf32>
    %925 = arith.addf %921, %924 : vector<2x1xf32>
    %926 = math.rsqrt %925 : vector<2x1xf32>
    %927 = vector.broadcast %926 : vector<2x1xf32> to vector<2x32xf32>
    %928 = arith.mulf %923, %927 : vector<2x32xf32>
    %929 = vector.broadcast %63 : vector<1x32xf32> to vector<2x32xf32>
    %930 = arith.mulf %928, %929 : vector<2x32xf32>
    %931 = vector.broadcast %64 : vector<1x32xf32> to vector<2x32xf32>
    %932 = arith.addf %930, %931 : vector<2x32xf32>
    %933 = arith.addf %826, %932 : vector<2x32xf32>
    %c8_i32 = arith.constant 8 : i32
    %934 = arith.addf %933, %61 : vector<2x32xf32>
    %cst_208 = arith.constant 1.250000e-01 : f32
    %935 = vector.broadcast %cst_208 : f32 to vector<2x32xf32>
    %936 = arith.mulf %934, %935 : vector<2x32xf32>
    %c0_209 = arith.constant 0 : index
    %c0_210 = arith.constant 0 : index
    %937 = vector.load %arg14[%c0_209, %c0_210] : memref<32x32xf32, #tpu.memory_space<vmem>>, vector<32x32xf32>
    %cst_211 = arith.constant dense<0.000000e+00> : vector<2x32xf32>
    %938 = tpu.matmul %936, %937, %cst_211 {dimension_numbers = #tpu.dot_dimension_numbers<[1], [0], [0], [1], [0, 0, 1, 1], [], []>} : vector<2x32xf32>, vector<32x32xf32>, vector<2x32xf32> -> vector<2x32xf32>
    %c0_212 = arith.constant 0 : index
    %c0_213 = arith.constant 0 : index
    %939 = vector.load %arg15[%c0_212, %c0_213] : memref<1x32xf32, #tpu.memory_space<vmem>>, vector<1x32xf32>
    %940 = vector.broadcast %939 : vector<1x32xf32> to vector<2x32xf32>
    %941 = arith.addf %938, %940 : vector<2x32xf32>
    %cst_214 = arith.constant 0.000000e+00 : f32
    %942 = vector.broadcast %cst_214 : f32 to vector<2x32xf32>
    %943 = arith.maximumf %941, %942 : vector<2x32xf32>
    %c0_215 = arith.constant 0 : index
    %c0_216 = arith.constant 0 : index
    %944 = vector.load %arg16[%c0_215, %c0_216] : memref<32x4xf32, #tpu.memory_space<vmem>>, vector<32x4xf32>
    %cst_217 = arith.constant dense<0.000000e+00> : vector<2x4xf32>
    %945 = tpu.matmul %943, %944, %cst_217 {dimension_numbers = #tpu.dot_dimension_numbers<[1], [0], [0], [1], [0, 0, 1, 1], [], []>} : vector<2x32xf32>, vector<32x4xf32>, vector<2x4xf32> -> vector<2x4xf32>
    %c0_218 = arith.constant 0 : index
    %c0_219 = arith.constant 0 : index
    %946 = vector.load %arg17[%c0_218, %c0_219] : memref<1x4xf32, #tpu.memory_space<vmem>>, vector<1x4xf32>
    %947 = vector.broadcast %946 : vector<1x4xf32> to vector<2x4xf32>
    %948 = arith.addf %945, %947 : vector<2x4xf32>
    %c0_220 = arith.constant 0 : index
    %c0_221 = arith.constant 0 : index
    %949 = vector.load %arg18[%c0_220, %c0_221] : memref<2x4xf32, #tpu.memory_space<vmem>>, vector<2x4xf32>
    tpu.vector_store %arg18[%c0_220, %c0_221], %948 {strides = array<i32>} : memref<2x4xf32, #tpu.memory_space<vmem>>, vector<2x4xf32>,
    return
  }
}

</mosaic_0001>

<llo_original>
// kernel: _actor_forward_impl.1
$region0: #{_actor_forward_impl.1}
  #allocation0 [shape = 'u32[]', space=smem, size = 0x4, offset = 0x4, fixed_abs, tag = 'smem constant byte address 0x4 - core index']
  #allocation1 [shape = 'u32[72,128]{1,0:T(1,128)}', space=vmem, size = 0x9000, scoped, tag = 'internal scratch']
  #allocation2 [shape = 'f32[8,2,128]{2,1,0:T(2,128)}', space=vmem, size = 0x2000, scoped, tag = 'scratch operand']
  %s0 = inlined_call_operand.vmem [shape: f32[16,16], index: 0, kind: input, shape index: {}]
  %s1 = inlined_call_operand.vmem [shape: s32[2,1], index: 1, kind: input, shape index: {}]
  %s2 = inlined_call_operand.hbm [shape: f32[16,128], index: 2, kind: input, shape index: {}]
  %s3 = inlined_call_operand.vmem [shape: f32[32,128], index: 3, kind: input, shape index: {}]
  %s4 = inlined_call_operand.vmem [shape: f32[1,128], index: 4, kind: input, shape index: {}]
  %s5 = inlined_call_operand.vmem [shape: f32[32,128], index: 5, kind: input, shape index: {}]
  %s6 = inlined_call_operand.hbm [shape: f32[32,128], index: 6, kind: input, shape index: {}]
  %s7 = inlined_call_operand.hbm [shape: f32[1,128], index: 7, kind: input, shape index: {}]
  %s8 = inlined_call_operand.hbm [shape: f32[2,2,32], index: 8, kind: input, shape index: {}]
  %s9 = inlined_call_operand.vmem [shape: f32[2,2,32], index: 9, kind: input, shape index: {}]
  %s10 = inlined_call_operand.hbm [shape: f32[1,32], index: 10, kind: input, shape index: {}]
  %s11 = inlined_call_operand.hbm [shape: f32[1,32], index: 11, kind: input, shape index: {}]
  %s12 = inlined_call_operand.hbm [shape: f32[16,32], index: 12, kind: input, shape index: {}]
  %s13 = inlined_call_operand.hbm [shape: f32[1,32], index: 13, kind: input, shape index: {}]
  %s14 = inlined_call_operand.hbm [shape: f32[32,32], index: 14, kind: input, shape index: {}]
  %s15 = inlined_call_operand.hbm [shape: f32[1,32], index: 15, kind: input, shape index: {}]
  %s16 = inlined_call_operand.vmem [shape: f32[32,4], index: 16, kind: input, shape index: {}]
  %s17 = inlined_call_operand.hbm [shape: f32[1,4], index: 17, kind: input, shape index: {}]
  %s18 = inlined_call_operand.hbm [shape: f32[2,4], index: 18, kind: output, shape index: {}]
  %s19 = sld [smem:[#allocation0]]
  $region126: #{_actor_forward_impl.1} parent=0
    _
  %s21 = ssub.s32 1, %s19
  %s22 = scalar_select 0, %s21, %s19
  $region1: #{_actor_forward_impl.1} parent=0
    #allocation3 [shape = 'u8[8192]{0}', space=vmem, size = 0x2000, scoped, tag = 'input window, operand 2, single buffered']
    #allocation4 [shape = 's32[1]{0}', space=sflag, size = 0x4, scoped, tag = 'scoped memory for _actor_forward_impl.1']
    #allocation5 [shape = 's32[1]{0}', space=sflag, size = 0x4, scoped, tag = 'scoped memory for _actor_forward_impl.1']
    #allocation6 [shape = 'u8[16384]{0}', space=vmem, size = 0x4000, scoped, tag = 'input window, operand 6, single buffered']
    #allocation7 [shape = 's32[1]{0}', space=sflag, size = 0x4, scoped, tag = 'scoped memory for _actor_forward_impl.1']
    #allocation8 [shape = 'u8[512]{0}', space=vmem, size = 0x400, scoped, tag = 'input window, operand 7, single buffered']
    #allocation9 [shape = 'u8[2048]{0}', space=vmem, size = 0x800, scoped, tag = 'input window, operand 8, single buffered']
    #allocation10 [shape = 's32[1]{0}', space=sflag, size = 0x4, scoped, tag = 'scoped memory for _actor_forward_impl.1']
    #allocation11 [shape = 'u8[512]{0}', space=vmem, size = 0x400, scoped, tag = 'input window, operand 10, single buffered']
    #allocation12 [shape = 'u8[512]{0}', space=vmem, size = 0x400, scoped, tag = 'input window, operand 11, single buffered']
    #allocation13 [shape = 's32[1]{0}', space=sflag, size = 0x4, scoped, tag = 'scoped memory for _actor_forward_impl.1']
    #allocation14 [shape = 'u8[8192]{0}', space=vmem, size = 0x2000, scoped, tag = 'input window, operand 12, single buffered']
    #allocation15 [shape = 'u8[512]{0}', space=vmem, size = 0x400, scoped, tag = 'input window, operand 13, single buffered']
    #allocation16 [shape = 's32[1]{0}', space=sflag, size = 0x4, scoped, tag = 'scoped memory for _actor_forward_impl.1']
    #allocation17 [shape = 'u8[16384]{0}', space=vmem, size = 0x4000, scoped, tag = 'input window, operand 14, single buffered']
    #allocation18 [shape = 'u8[512]{0}', space=vmem, size = 0x400, scoped, tag = 'input window, operand 15, single buffered']
    #allocation19 [shape = 's32[1]{0}', space=sflag, size = 0x4, scoped, tag = 'scoped memory for _actor_forward_impl.1']
    #allocation20 [shape = 'u8[512]{0}', space=vmem, size = 0x400, scoped, tag = 'input window, operand 17, single buffered']
    #allocation21 [shape = 'u8[1024]{0}', space=vmem, size = 0x400, scoped, tag = 'output window, operand 0, single buffered']
    %23 = vsyncpa [#allocation4], 0
    %24 = vsyncpa [#allocation7], 0
    %25 = vsyncpa [#allocation10], 0
    %26 = vsyncpa [#allocation13], 0
    %27 = vsyncpa [#allocation16], 0
    %28 = vsyncpa [#allocation19], 0
    %29 = vsyncpa [#allocation5], 0
    // Predicated region
    $region2: #{_actor_forward_impl.1} parent=1 // pred_check
      _
    $region3: #{_actor_forward_impl.1} parent=1 // pred_check_branch
      %31 = sbr.rel (0) target = $region5
    $region4: #{_actor_forward_impl.1} parent=1 // pred_region
      _
    $region5: #{_actor_forward_impl.1} parent=1 // pred_fallthru
      _
    // Predicated region
    $region6: #{_actor_forward_impl.1} parent=1 // pred_check
      _
    $region7: #{_actor_forward_impl.1} parent=1 // pred_check_branch
      %33 = sbr.rel (0) target = $region9
    $region8: #{_actor_forward_impl.1} parent=1 // pred_region
      _
    $region9: #{_actor_forward_impl.1} parent=1 // pred_fallthru
      _
    // Predicated region
    $region10: #{_actor_forward_impl.1} parent=1 // pred_check
      _
    $region11: #{_actor_forward_impl.1} parent=1 // pred_check_branch
      %35 = sbr.rel (0) target = $region13
    $region12: #{_actor_forward_impl.1} parent=1 // pred_region
      %37 = vsyncadd [#allocation4], 0
      %s38 = sshll.u32 %s2, 4
      %s39 = int_to_ptr.hbm [resolvable:$true] %s38
      %s40 = sshll.u32 [#allocation3], 4
      %s41 = int_to_ptr.vmem [resolvable:$true] %s40
      %46 = dma.hbm_to_vmem [thread:$0]  %s39, 256, %s41, [#allocation4], 128, 128, 8
    $region13: #{_actor_forward_impl.1} parent=1 // pred_fallthru
      _
    // Predicated region
    $region14: #{_actor_forward_impl.1} parent=1 // pred_check
      _
    $region15: #{_actor_forward_impl.1} parent=1 // pred_check_branch
      %48 = sbr.rel (0) target = $region17
    $region16: #{_actor_forward_impl.1} parent=1 // pred_region
      _
    $region17: #{_actor_forward_impl.1} parent=1 // pred_fallthru
      _
    // Predicated region
    $region18: #{_actor_forward_impl.1} parent=1 // pred_check
      _
    $region19: #{_actor_forward_impl.1} parent=1 // pred_check_branch
      %50 = sbr.rel (0) target = $region21
    $region20: #{_actor_forward_impl.1} parent=1 // pred_region
      _
    $region21: #{_actor_forward_impl.1} parent=1 // pred_fallthru
      _
    // Predicated region
    $region22: #{_actor_forward_impl.1} parent=1 // pred_check
      _
    $region23: #{_actor_forward_impl.1} parent=1 // pred_check_branch
      %52 = sbr.rel (0) target = $region25
    $region24: #{_actor_forward_impl.1} parent=1 // pred_region
      _
    $region25: #{_actor_forward_impl.1} parent=1 // pred_fallthru
      _
    // Predicated region
    $region26: #{_actor_forward_impl.1} parent=1 // pred_check
      _
    $region27: #{_actor_forward_impl.1} parent=1 // pred_check_branch
      %54 = sbr.rel (0) target = $region29
    $region28: #{_actor_forward_impl.1} parent=1 // pred_region
      %56 = vsyncadd [#allocation7], 0
      %s57 = sshll.u32 %s6, 4
      %s58 = int_to_ptr.hbm [resolvable:$true] %s57
      %s59 = sshll.u32 [#allocation6], 4
      %s60 = int_to_ptr.vmem [resolvable:$true] %s59
      %65 = dma.hbm_to_vmem [thread:$0]  %s58, 512, %s60, [#allocation7], 128, 128, 8
    $region29: #{_actor_forward_impl.1} parent=1 // pred_fallthru
      _
    // Predicated region
    $region30: #{_actor_forward_impl.1} parent=1 // pred_check
      _
    $region31: #{_actor_forward_impl.1} parent=1 // pred_check_branch
      %67 = sbr.rel (0) target = $region33
    $region32: #{_actor_forward_impl.1} parent=1 // pred_region
      %69 = vsyncadd [#allocation7], 0
      %s71 = sshll.u32 %s7, 4
      %s72 = int_to_ptr.hbm [resolvable:$true] %s71
      %s73 = sshll.u32 [#allocation8], 4
      %s74 = int_to_ptr.vmem [resolvable:$true] %s73
      %76 = dma.hbm_to_vmem [thread:$0]  %s72, 16, %s74, [#allocation7]
    $region33: #{_actor_forward_impl.1} parent=1 // pred_fallthru
      _
    // Predicated region
    $region34: #{_actor_forward_impl.1} parent=1 // pred_check
      _
    $region35: #{_actor_forward_impl.1} parent=1 // pred_check_branch
      %78 = sbr.rel (0) target = $region37
    $region36: #{_actor_forward_impl.1} parent=1 // pred_region
      %80 = vsyncadd [#allocation10], 0
      %s81 = sshll.u32 %s8, 4
      %s82 = int_to_ptr.hbm [resolvable:$true] %s81
      %s83 = sshll.u32 [#allocation9], 4
      %s84 = int_to_ptr.vmem [resolvable:$true] %s83
      %89 = dma.hbm_to_vmem [thread:$0]  %s82, 64, %s84, [#allocation10], 32, 32, 2
    $region37: #{_actor_forward_impl.1} parent=1 // pred_fallthru
      _
    // Predicated region
    $region38: #{_actor_forward_impl.1} parent=1 // pred_check
      _
    $region39: #{_actor_forward_impl.1} parent=1 // pred_check_branch
      %91 = sbr.rel (0) target = $region41
    $region40: #{_actor_forward_impl.1} parent=1 // pred_region
      _
    $region41: #{_actor_forward_impl.1} parent=1 // pred_fallthru
      _
    // Predicated region
    $region42: #{_actor_forward_impl.1} parent=1 // pred_check
      _
    $region43: #{_actor_forward_impl.1} parent=1 // pred_check_branch
      %93 = sbr.rel (0) target = $region45
    $region44: #{_actor_forward_impl.1} parent=1 // pred_region
      %95 = vsyncadd [#allocation10], 0
      %s97 = sshll.u32 %s10, 4
      %s98 = int_to_ptr.hbm [resolvable:$true] %s97
      %s99 = sshll.u32 [#allocation11], 4
      %s100 = int_to_ptr.vmem [resolvable:$true] %s99
      %102 = dma.hbm_to_vmem [thread:$0]  %s98, 16, %s100, [#allocation10]
    $region45: #{_actor_forward_impl.1} parent=1 // pred_fallthru
      _
    // Predicated region
    $region46: #{_actor_forward_impl.1} parent=1 // pred_check
      _
    $region47: #{_actor_forward_impl.1} parent=1 // pred_check_branch
      %104 = sbr.rel (0) target = $region49
    $region48: #{_actor_forward_impl.1} parent=1 // pred_region
      %106 = vsyncadd [#allocation13], 0
      %s108 = sshll.u32 %s11, 4
      %s109 = int_to_ptr.hbm [resolvable:$true] %s108
      %s110 = sshll.u32 [#allocation12], 4
      %s111 = int_to_ptr.vmem [resolvable:$true] %s110
      %113 = dma.hbm_to_vmem [thread:$0]  %s109, 16, %s111, [#allocation13]
    $region49: #{_actor_forward_impl.1} parent=1 // pred_fallthru
      _
    // Predicated region
    $region50: #{_actor_forward_impl.1} parent=1 // pred_check
      _
    $region51: #{_actor_forward_impl.1} parent=1 // pred_check_branch
      %115 = sbr.rel (0) target = $region53
    $region52: #{_actor_forward_impl.1} parent=1 // pred_region
      %117 = vsyncadd [#allocation13], 0
      %s118 = sshll.u32 %s12, 4
      %s119 = int_to_ptr.hbm [resolvable:$true] %s118
      %s120 = sshll.u32 [#allocation14], 4
      %s121 = int_to_ptr.vmem [resolvable:$true] %s120
      %126 = dma.hbm_to_vmem [thread:$0]  %s119, 256, %s121, [#allocation13], 128, 128, 8
    $region53: #{_actor_forward_impl.1} parent=1 // pred_fallthru
      _
    // Predicated region
    $region54: #{_actor_forward_impl.1} parent=1 // pred_check
      _
    $region55: #{_actor_forward_impl.1} parent=1 // pred_check_branch
      %128 = sbr.rel (0) target = $region57
    $region56: #{_actor_forward_impl.1} parent=1 // pred_region
      %130 = vsyncadd [#allocation16], 0
      %s132 = sshll.u32 %s13, 4
      %s133 = int_to_ptr.hbm [resolvable:$true] %s132
      %s134 = sshll.u32 [#allocation15], 4
      %s135 = int_to_ptr.vmem [resolvable:$true] %s134
      %137 = dma.hbm_to_vmem [thread:$0]  %s133, 16, %s135, [#allocation16]
    $region57: #{_actor_forward_impl.1} parent=1 // pred_fallthru
      _
    // Predicated region
    $region58: #{_actor_forward_impl.1} parent=1 // pred_check
      _
    $region59: #{_actor_forward_impl.1} parent=1 // pred_check_branch
      %139 = sbr.rel (0) target = $region61
    $region60: #{_actor_forward_impl.1} parent=1 // pred_region
      %141 = vsyncadd [#allocation16], 0
      %s142 = sshll.u32 %s14, 4
      %s143 = int_to_ptr.hbm [resolvable:$true] %s142
      %s144 = sshll.u32 [#allocation17], 4
      %s145 = int_to_ptr.vmem [resolvable:$true] %s144
      %150 = dma.hbm_to_vmem [thread:$0]  %s143, 512, %s145, [#allocation16], 128, 128, 8
    $region61: #{_actor_forward_impl.1} parent=1 // pred_fallthru
      _
    // Predicated region
    $region62: #{_actor_forward_impl.1} parent=1 // pred_check
      _
    $region63: #{_actor_forward_impl.1} parent=1 // pred_check_branch
      %152 = sbr.rel (0) target = $region65
    $region64: #{_actor_forward_impl.1} parent=1 // pred_region
      %154 = vsyncadd [#allocation19], 0
      %s156 = sshll.u32 %s15, 4
      %s157 = int_to_ptr.hbm [resolvable:$true] %s156
      %s158 = sshll.u32 [#allocation18], 4
      %s159 = int_to_ptr.vmem [resolvable:$true] %s158
      %161 = dma.hbm_to_vmem [thread:$0]  %s157, 16, %s159, [#allocation19]
    $region65: #{_actor_forward_impl.1} parent=1 // pred_fallthru
      _
    // Predicated region
    $region66: #{_actor_forward_impl.1} parent=1 // pred_check
      _
    $region67: #{_actor_forward_impl.1} parent=1 // pred_check_branch
      %163 = sbr.rel (0) target = $region69
    $region68: #{_actor_forward_impl.1} parent=1 // pred_region
      _
    $region69: #{_actor_forward_impl.1} parent=1 // pred_fallthru
      _
    // Predicated region
    $region70: #{_actor_forward_impl.1} parent=1 // pred_check
      _
    $region71: #{_actor_forward_impl.1} parent=1 // pred_check_branch
      %165 = sbr.rel (0) target = $region73
    $region72: #{_actor_forward_impl.1} parent=1 // pred_region
      %167 = vsyncadd [#allocation19], 0
      %s169 = sshll.u32 %s17, 4
      %s170 = int_to_ptr.hbm [resolvable:$true] %s169
      %s171 = sshll.u32 [#allocation20], 4
      %s172 = int_to_ptr.vmem [resolvable:$true] %s171
      %174 = dma.hbm_to_vmem [thread:$0]  %s170, 16, %s172, [#allocation19]
    $region73: #{_actor_forward_impl.1} parent=1 // pred_fallthru
      _
    // Predicated region
    $region74: #{_actor_forward_impl.1} parent=1 // pred_check
      _
    $region75: #{_actor_forward_impl.1} parent=1 // pred_check_branch
      %176 = sbr.rel (0) target = $region77
    $region76: #{_actor_forward_impl.1} parent=1 // pred_region
      %178 = dma.done [#allocation4], 256
    $region77: #{_actor_forward_impl.1} parent=1 // pred_fallthru
      _
    // Predicated region
    $region78: #{_actor_forward_impl.1} parent=1 // pred_check
      _
    $region79: #{_actor_forward_impl.1} parent=1 // pred_check_branch
      %180 = sbr.rel (0) target = $region81
    $region80: #{_actor_forward_impl.1} parent=1 // pred_region
      %182 = dma.done [#allocation7], 512
    $region81: #{_actor_forward_impl.1} parent=1 // pred_fallthru
      _
    // Predicated region
    $region82: #{_actor_forward_impl.1} parent=1 // pred_check
      _
    $region83: #{_actor_forward_impl.1} parent=1 // pred_check_branch
      %184 = sbr.rel (0) target = $region85
    $region84: #{_actor_forward_impl.1} parent=1 // pred_region
      %186 = dma.done [#allocation7], 16
    $region85: #{_actor_forward_impl.1} parent=1 // pred_fallthru
      _
    // Predicated region
    $region86: #{_actor_forward_impl.1} parent=1 // pred_check
      _
    $region87: #{_actor_forward_impl.1} parent=1 // pred_check_branch
      %188 = sbr.rel (0) target = $region89
    $region88: #{_actor_forward_impl.1} parent=1 // pred_region
      %190 = dma.done [#allocation10], 64
    $region89: #{_actor_forward_impl.1} parent=1 // pred_fallthru
      _
    // Predicated region
    $region90: #{_actor_forward_impl.1} parent=1 // pred_check
      _
    $region91: #{_actor_forward_impl.1} parent=1 // pred_check_branch
      %192 = sbr.rel (0) target = $region93
    $region92: #{_actor_forward_impl.1} parent=1 // pred_region
      %194 = dma.done [#allocation10], 16
    $region93: #{_actor_forward_impl.1} parent=1 // pred_fallthru
      _
    // Predicated region
    $region94: #{_actor_forward_impl.1} parent=1 // pred_check
      _
    $region95: #{_actor_forward_impl.1} parent=1 // pred_check_branch
      %196 = sbr.rel (0) target = $region97
    $region96: #{_actor_forward_impl.1} parent=1 // pred_region
      %198 = dma.done [#allocation13], 16
    $region97: #{_actor_forward_impl.1} parent=1 // pred_fallthru
      _
    // Predicated region
    $region98: #{_actor_forward_impl.1} parent=1 // pred_check
      _
    $region99: #{_actor_forward_impl.1} parent=1 // pred_check_branch
      %200 = sbr.rel (0) target = $region101
    $region100: #{_actor_forward_impl.1} parent=1 // pred_region
      %202 = dma.done [#allocation13], 256
    $region101: #{_actor_forward_impl.1} parent=1 // pred_fallthru
      _
    // Predicated region
    $region102: #{_actor_forward_impl.1} parent=1 // pred_check
      _
    $region103: #{_actor_forward_impl.1} parent=1 // pred_check_branch
      %204 = sbr.rel (0) target = $region105
    $region104: #{_actor_forward_impl.1} parent=1 // pred_region
      %206 = dma.done [#allocation16], 16
    $region105: #{_actor_forward_impl.1} parent=1 // pred_fallthru
      _
    // Predicated region
    $region106: #{_actor_forward_impl.1} parent=1 // pred_check
      _
    $region107: #{_actor_forward_impl.1} parent=1 // pred_check_branch
      %208 = sbr.rel (0) target = $region109
    $region108: #{_actor_forward_impl.1} parent=1 // pred_region
      %210 = dma.done [#allocation16], 512
    $region109: #{_actor_forward_impl.1} parent=1 // pred_fallthru
      _
    // Predicated region
    $region110: #{_actor_forward_impl.1} parent=1 // pred_check
      _
    $region111: #{_actor_forward_impl.1} parent=1 // pred_check_branch
      %212 = sbr.rel (0) target = $region113
    $region112: #{_actor_forward_impl.1} parent=1 // pred_region
      %214 = dma.done [#allocation19], 16
    $region113: #{_actor_forward_impl.1} parent=1 // pred_fallthru
      _
    // Predicated region
    $region114: #{_actor_forward_impl.1} parent=1 // pred_check
      _
    $region115: #{_actor_forward_impl.1} parent=1 // pred_check_branch
      %216 = sbr.rel (0) target = $region117
    $region116: #{_actor_forward_impl.1} parent=1 // pred_region
      %218 = dma.done [#allocation19], 16
    $region117: #{_actor_forward_impl.1} parent=1 // pred_fallthru
      _
    %v219 = vld [vmem:[%s0] sm:$0xff]
    %v220 = vld [vmem:[%s0 + $0x8] sm:$0xff]
    %v221 = vld [vmem:[#allocation3] sm:$0xff]
    %v222 = vld [vmem:[#allocation3 + $0x8] sm:$0xff]
    %v223 = vld [vmem:[%s4] sm:$0x1]
    %v225 = vperm.slane %v223, 0
    %vm227 = vcmask 130048
    %v229 = vsel %vm227, %v219, 0
    %v232 = vsel %vm227, %v220, 0
    %234 = vmatpush.msra.mxu0 0.0
    %235 = vmatpush.msra.mxu0 0.0
    %236 = vmatpush.msra.mxu0 0.0
    %237 = vmatpush.msra.mxu0 0.0
    %238 = vmatpush.msra.mxu0 0.0
    %239 = vmatpush.msra.mxu0 0.0
    %240 = vmatpush.msra.mxu0 0.0
    %241 = vmatpush.msra.mxu0 0.0
    %242 = vmatpush.msra.mxu0 0.0
    %243 = vmatpush.msra.mxu0 0.0
    %244 = vmatpush.msra.mxu0 0.0
    %245 = vmatpush.msra.mxu0 0.0
    %246 = vmatpush.msra.mxu0 0.0
    %247 = vmatpush.msra.mxu0 0.0
    %248 = vmatpush.msra.mxu0 %v222
    %249 = vmatpush.msra.mxu0 %v221
    %250 = vmatmul.f32.gmra.mxu0 %v229
    %v251 = vpop.f32.mrf.mxu0
    %v252 = vadd.f32 %v225, %v251
    %253 = vmatmul.f32.gmra.mxu0 %v232
    %v254 = vpop.f32.mrf.mxu0
    %v255 = vadd.f32 %v225, %v254
    %256 = vdwg.mxu0
    %257 = vst [vmem:[#allocation2] sm:$0x3] %v252
    %s258 = scalar_lea.vmem [#allocation2], 2
    %259 = vst [vmem:[%s258 - $0x2] sm:$0xc] %v252
    %s260 = scalar_lea.vmem [#allocation2], 4
    %261 = vst [vmem:[%s260 - $0x4] sm:$0x30] %v252
    %s262 = scalar_lea.vmem [#allocation2], 6
    %263 = vst [vmem:[%s262 - $0x6] sm:$0xc0] %v252
    %s264 = scalar_lea.vmem [#allocation2], 8
    %265 = vst [vmem:[%s264] sm:$0x3] %v255
    %s266 = scalar_lea.vmem [#allocation2], 10
    %267 = vst [vmem:[%s266 - $0x2] sm:$0xc] %v255
    %s268 = scalar_lea.vmem [#allocation2], 12
    %269 = vst [vmem:[%s268 - $0x4] sm:$0x30] %v255
    %s270 = scalar_lea.vmem [#allocation2], 14
    %271 = vst [vmem:[%s270 - $0x6] sm:$0xc0] %v255
    %v272 = vld [vmem:[#allocation14] sm:$0xff]
    %v273 = vld [vmem:[#allocation14 + $0x8] sm:$0xff]
    %v274 = vld [vmem:[#allocation15] sm:$0x1]
    %v276 = vperm.slane %v274, 0
    %278 = vmatpush.msra.mxu0 0.0
    %279 = vmatpush.msra.mxu0 0.0
    %280 = vmatpush.msra.mxu0 0.0
    %281 = vmatpush.msra.mxu0 0.0
    %282 = vmatpush.msra.mxu0 0.0
    %283 = vmatpush.msra.mxu0 0.0
    %284 = vmatpush.msra.mxu0 0.0
    %285 = vmatpush.msra.mxu0 0.0
    %286 = vmatpush.msra.mxu0 0.0
    %287 = vmatpush.msra.mxu0 0.0
    %288 = vmatpush.msra.mxu0 0.0
    %289 = vmatpush.msra.mxu0 0.0
    %290 = vmatpush.msra.mxu0 0.0
    %291 = vmatpush.msra.mxu0 0.0
    %292 = vmatpush.msra.mxu0 %v273
    %293 = vmatpush.msra.mxu0 %v272
    %294 = vmatmul.f32.gmra.mxu0 %v229
    %v295 = vpop.f32.mrf.mxu0
    %v296 = vadd.f32 %v276, %v295
    %297 = vmatmul.f32.gmra.mxu0 %v232
    %v298 = vpop.f32.mrf.mxu0
    %v299 = vadd.f32 %v276, %v298
    %300 = vdwg.mxu0
    %v301 = vmax.f32 %v296, 0.0
    %v302 = vmax.f32 %v299, 0.0
    %v303 = vadd.f32 %v301, 0.0
    %v305 = vrot.slane %v301, 2
    %v307 = vadd.f32 %v303, %v305
    %v308 = vrot.slane %v301, 4
    %v310 = vadd.f32 %v307, %v308
    %v311 = vrot.slane %v301, 6
    %v313 = vadd.f32 %v310, %v311
    %v314 = vadd.f32 %v313, %v302
    %v316 = vrot.slane %v302, 2
    %v318 = vadd.f32 %v314, %v316
    %v319 = vrot.slane %v302, 4
    %v321 = vadd.f32 %v318, %v319
    %v322 = vrot.slane %v302, 6
    %v324 = vadd.f32 %v321, %v322
    %v325 = vld [vmem:[%s1] sm:$0x3]
    %v326 = vld [vmem:[#allocation11] sm:$0x1]
    %v327 = vld [vmem:[#allocation12] sm:$0x1]
    %v328 = vld [vmem:[%s3] sm:$0xff]
    %v329 = vld [vmem:[%s3 + $0x8] sm:$0xff]
    %v330 = vld [vmem:[%s3 + $0x10] sm:$0xff]
    %v331 = vld [vmem:[%s3 + $0x18] sm:$0xff]
    %v332 = vld [vmem:[#allocation6] sm:$0xff]
    %v333 = vld [vmem:[#allocation6 + $0x8] sm:$0xff]
    %v334 = vld [vmem:[#allocation6 + $0x10] sm:$0xff]
    %v335 = vld [vmem:[#allocation6 + $0x18] sm:$0xff]
    %v336 = vld [vmem:[%s5] sm:$0xff]
    %v337 = vld [vmem:[%s5 + $0x8] sm:$0xff]
    %v338 = vld [vmem:[%s5 + $0x10] sm:$0xff]
    %v339 = vld [vmem:[%s5 + $0x18] sm:$0xff]
    %v340 = vld [vmem:[#allocation8] sm:$0x1]
    %v341 = vld [vmem:[#allocation9] sm:$0x3]
    %s342 = scalar_lea.vmem [#allocation9], 2
    %v343 = vld [vmem:[%s342] sm:$0x3]
    %v344 = vld [vmem:[%s9] sm:$0x3]
    %s345 = scalar_lea.vmem %s9, 2
    %v346 = vld [vmem:[%s345] sm:$0x3]
    %vm347 = vcmp.gt.s32.totalorder %v325, 0
    %v348 = vld [vmem:[#allocation2] sm:$0x3]
    %vm349 = vcmask 261120
    %v351 = vsel %vm349, %v341, 0
    %353 = vmatpush.msra.mxu0 0.0
    %354 = vmatpush.msra.mxu0 0.0
    %355 = vmatpush.msra.mxu0 0.0
    %356 = vmatpush.msra.mxu0 0.0
    %357 = vmatpush.msra.mxu0 0.0
    %358 = vmatpush.msra.mxu0 0.0
    %359 = vmatpush.msra.mxu0 0.0
    %360 = vmatpush.msra.mxu0 0.0
    %361 = vmatpush.msra.mxu0 0.0
    %362 = vmatpush.msra.mxu0 0.0
    %363 = vmatpush.msra.mxu0 0.0
    %364 = vmatpush.msra.mxu0 0.0
    %365 = vmatpush.msra.mxu0 %v331
    %366 = vmatpush.msra.mxu0 %v330
    %367 = vmatpush.msra.mxu0 %v329
    %368 = vmatpush.msra.mxu0 %v328
    %369 = vmatmul.f32.gmra.mxu0 %v351
    %v370 = vpop.f32.mrf.mxu0
    %v371 = vadd.f32 0.0, %v370
    %372 = vdwg.mxu0
    %v373 = vadd.f32 %v348, %v371
    %v374 = vxor.u32 %v373, 2147483648
    %v375 = vmul.f32 %v374, 1.442695
    %v376 = vpow.pop %v375
    %v377 = vadd.f32 %v376, 1.0
    %v378 = vrcp.pop %v377
    %v379 = vmul.f32 %v377, %v378
    %v380 = vsub.f32 1.0, %v379
    %v381 = vmul.f32 %v378, %v380
    %v382 = vadd.f32 %v378, %v381
    %vm383 = vweird.f32 %v377
    %vm384 = vweird.f32 %v378
    %vm385 = vmor %vm383, %vm384
    %v386 = vsel %vm385, %v378, %v382
    %v387 = vand.u32 2147483647, %v377
    %vm388 = vcmp.eq.f32.partialorder %v387, 8.507059e+37
    %v389 = vand.u32 %v377, 2147483648
    %v390 = vor.u32 1.1754944e-38, %v389
    %v391 = vsel %vm388, %v390, %v386
    %v392 = vmul.f32 1.0, %v391
    %v393 = vtanh.pop %v373
    %395 = vrot.lane.b32.xlu0 %v344, 32
    %v396 = vpop.permute.xlu0 %395
    %v398 = vmul.f32 %v392, %v396
    %400 = vrot.lane.b32.xlu0 %v393, 64
    %v401 = vpop.permute.xlu0 %400
    %v403 = vmul.f32 %v392, %v401
    %405 = vrot.lane.b32.xlu0 %v403, 32
    %v406 = vpop.permute.xlu0 %405
    %v408 = vadd.f32 %v398, %v406
    %v409 = vtanh.pop %v408
    %411 = vrot.lane.b32.xlu0 %v409, 64
    %v412 = vpop.permute.xlu0 %411
    %v414 = vmul.f32 %v392, %v412
    %v415 = vsel %vm347, 1, 0
    %416 = vset.pattern.permute.xlu0 0
    %417 = vperm.xlu0 %416, %v415
    %v418 = vpop.permute.xlu0 %417
    %vm419 = vcmp.eq.s32.totalorder %v418, 1
    %420 = vrot.lane.b32.xlu0 %v341, 96
    %v421 = vpop.permute.xlu0 %420
    %v423 = vsel %vm419, %v414, %v421
    %v424 = vsel %vm419, %v408, %v396
    %v425 = vsel %vm419, %v414, 0.0
    %v427 = vsel %vm349, %v343, 0
    %429 = vmatpush.msra.mxu0 0.0
    %430 = vmatpush.msra.mxu0 0.0
    %431 = vmatpush.msra.mxu0 0.0
    %432 = vmatpush.msra.mxu0 0.0
    %433 = vmatpush.msra.mxu0 0.0
    %434 = vmatpush.msra.mxu0 0.0
    %435 = vmatpush.msra.mxu0 0.0
    %436 = vmatpush.msra.mxu0 0.0
    %437 = vmatpush.msra.mxu0 0.0
    %438 = vmatpush.msra.mxu0 0.0
    %439 = vmatpush.msra.mxu0 0.0
    %440 = vmatpush.msra.mxu0 0.0
    %441 = vmatpush.msra.mxu0 %v335
    %442 = vmatpush.msra.mxu0 %v334
    %443 = vmatpush.msra.mxu0 %v333
    %444 = vmatpush.msra.mxu0 %v332
    %445 = vmatmul.f32.gmra.mxu0 %v427
    %v446 = vpop.f32.mrf.mxu0
    %v447 = vadd.f32 0.0, %v446
    %448 = vdwg.mxu0
    %450 = vrot.lane.b32.xlu0 %v425, 32
    %v451 = vpop.permute.xlu0 %450
    %v452 = vsel %vm349, %v451, 0
    %454 = vmatpush.msra.mxu0 0.0
    %455 = vmatpush.msra.mxu0 0.0
    %456 = vmatpush.msra.mxu0 0.0
    %457 = vmatpush.msra.mxu0 0.0
    %458 = vmatpush.msra.mxu0 0.0
    %459 = vmatpush.msra.mxu0 0.0
    %460 = vmatpush.msra.mxu0 0.0
    %461 = vmatpush.msra.mxu0 0.0
    %462 = vmatpush.msra.mxu0 0.0
    %463 = vmatpush.msra.mxu0 0.0
    %464 = vmatpush.msra.mxu0 0.0
    %465 = vmatpush.msra.mxu0 0.0
    %466 = vmatpush.msra.mxu0 %v339
    %467 = vmatpush.msra.mxu0 %v338
    %468 = vmatpush.msra.mxu0 %v337
    %469 = vmatpush.msra.mxu0 %v336
    %470 = vmatmul.f32.gmra.mxu0 %v452
    %v471 = vpop.f32.mrf.mxu0
    %v472 = vadd.f32 %v447, %v471
    %473 = vdwg.mxu0
    %v475 = vperm.slane %v340, 0
    %v477 = vadd.f32 %v472, %v475
    %v478 = vxor.u32 %v477, 2147483648
    %v479 = vmul.f32 %v478, 1.442695
    %v480 = vpow.pop %v479
    %v481 = vadd.f32 %v480, 1.0
    %v482 = vrcp.pop %v481
    %v483 = vmul.f32 %v481, %v482
    %v484 = vsub.f32 1.0, %v483
    %v485 = vmul.f32 %v482, %v484
    %v486 = vadd.f32 %v482, %v485
    %vm487 = vweird.f32 %v481
    %vm488 = vweird.f32 %v482
    %vm489 = vmor %vm487, %vm488
    %v490 = vsel %vm489, %v482, %v486
    %v491 = vand.u32 2147483647, %v481
    %vm492 = vcmp.eq.f32.partialorder %v491, 8.507059e+37
    %v493 = vand.u32 %v481, 2147483648
    %v494 = vor.u32 1.1754944e-38, %v493
    %v495 = vsel %vm492, %v494, %v490
    %v496 = vmul.f32 1.0, %v495
    %v497 = vtanh.pop %v477
    %499 = vrot.lane.b32.xlu0 %v346, 32
    %v500 = vpop.permute.xlu0 %499
    %v502 = vmul.f32 %v496, %v500
    %504 = vrot.lane.b32.xlu0 %v497, 64
    %v505 = vpop.permute.xlu0 %504
    %v507 = vmul.f32 %v496, %v505
    %509 = vrot.lane.b32.xlu0 %v507, 32
    %v510 = vpop.permute.xlu0 %509
    %v512 = vadd.f32 %v502, %v510
    %v513 = vtanh.pop %v512
    %515 = vrot.lane.b32.xlu0 %v513, 64
    %v516 = vpop.permute.xlu0 %515
    %v518 = vmul.f32 %v496, %v516
    %519 = vrot.lane.b32.xlu0 %v343, 96
    %v520 = vpop.permute.xlu0 %519
    %v522 = vsel %vm419, %v518, %v520
    %v523 = vsel %vm419, %v512, %v500
    %v524 = vsel %vm419, %v518, 0.0
    %v525 = vmax.f32 %v524, 0.0
    %527 = vrot.lane.b32.xlu0 %v525, 32
    %v528 = vpop.permute.xlu0 %527
    %vm530 = vcmask 254976
    %v531 = vsel %vm530, %v528, 0.0
    %532 = vadd.xlane.f32.xlu0 %v531
    %v533 = vpop.xlane.xlu0 %532
    %v534 = vrcp.pop 32.0
    %v535 = vmul.f32 32.0, %v534
    %v536 = vsub.f32 1.0, %v535
    %v537 = vmul.f32 %v534, %v536
    %v538 = vadd.f32 %v534, %v537
    %vm539 = vweird.f32 %v534
    %v540 = vsel %vm539, %v534, %v538
    %v541 = vmul.f32 %v533, %v540
    %v542 = vsub.f32 %v525, %v541
    %v543 = vmul.f32 %v542, %v542
    %545 = vrot.lane.b32.xlu0 %v543, 32
    %v546 = vpop.permute.xlu0 %545
    %v548 = vsel %vm530, %v546, 0.0
    %549 = vadd.xlane.f32.xlu0 %v548
    %v550 = vpop.xlane.xlu0 %549
    %v551 = vmul.f32 %v550, %v540
    %v552 = vadd.f32 %v551, 1e-05
    %v553 = vrsqrt.pop %v552
    %v554 = vmul.f32 %v553, %v552
    %v555 = vmul.f32 %v554, %v553
    %v556 = vmul.f32 0.5, %v555
    %v557 = vsub.f32 1.5, %v556
    %v558 = vmul.f32 %v553, %v557
    %vm559 = vweird.f32 %v552
    %vm560 = vweird.f32 %v553
    %vm561 = vmor %vm559, %vm560
    %v562 = vsel %vm561, %v553, %v558
    %v563 = vmul.f32 %v542, %v562
    %v565 = vperm.slane %v326, 0
    %566 = vrot.lane.b32.xlu0 %v565, 96
    %v567 = vpop.permute.xlu0 %566
    %v569 = vmul.f32 %v563, %v567
    %v571 = vperm.slane %v327, 0
    %572 = vrot.lane.b32.xlu0 %v571, 96
    %v573 = vpop.permute.xlu0 %572
    %v575 = vadd.f32 %v569, %v573
    %v576 = vadd.f32 %v575, 0.0
    %vm577 = vcmp.gt.s32.totalorder %v325, 1
    %v578 = vld [vmem:[%s258] sm:$0x3]
    %580 = vrot.lane.b32.xlu0 %v423, 32
    %v581 = vpop.permute.xlu0 %580
    %v582 = vsel %vm349, %v581, 0
    %584 = vmatpush.msra.mxu0 0.0
    %585 = vmatpush.msra.mxu0 0.0
    %586 = vmatpush.msra.mxu0 0.0
    %587 = vmatpush.msra.mxu0 0.0
    %588 = vmatpush.msra.mxu0 0.0
    %589 = vmatpush.msra.mxu0 0.0
    %590 = vmatpush.msra.mxu0 0.0
    %591 = vmatpush.msra.mxu0 0.0
    %592 = vmatpush.msra.mxu0 0.0
    %593 = vmatpush.msra.mxu0 0.0
    %594 = vmatpush.msra.mxu0 0.0
    %595 = vmatpush.msra.mxu0 0.0
    %596 = vmatpush.msra.mxu0 %v331
    %597 = vmatpush.msra.mxu0 %v330
    %598 = vmatpush.msra.mxu0 %v329
    %599 = vmatpush.msra.mxu0 %v328
    %600 = vmatmul.f32.gmra.mxu0 %v582
    %v601 = vpop.f32.mrf.mxu0
    %v602 = vadd.f32 0.0, %v601
    %603 = vdwg.mxu0
    %v604 = vadd.f32 %v578, %v602
    %v605 = vxor.u32 %v604, 2147483648
    %v606 = vmul.f32 %v605, 1.442695
    %v607 = vpow.pop %v606
    %v608 = vadd.f32 %v607, 1.0
    %v609 = vrcp.pop %v608
    %v610 = vmul.f32 %v608, %v609
    %v611 = vsub.f32 1.0, %v610
    %v612 = vmul.f32 %v609, %v611
    %v613 = vadd.f32 %v609, %v612
    %vm614 = vweird.f32 %v608
    %vm615 = vweird.f32 %v609
    %vm616 = vmor %vm614, %vm615
    %v617 = vsel %vm616, %v609, %v613
    %v618 = vand.u32 2147483647, %v608
    %vm619 = vcmp.eq.f32.partialorder %v618, 8.507059e+37
    %v620 = vand.u32 %v608, 2147483648
    %v621 = vor.u32 1.1754944e-38, %v620
    %v622 = vsel %vm619, %v621, %v617
    %v623 = vmul.f32 1.0, %v622
    %v624 = vtanh.pop %v604
    %v625 = vmul.f32 %v623, %v424
    %627 = vrot.lane.b32.xlu0 %v624, 64
    %v628 = vpop.permute.xlu0 %627
    %v630 = vmul.f32 %v623, %v628
    %632 = vrot.lane.b32.xlu0 %v630, 32
    %v633 = vpop.permute.xlu0 %632
    %v635 = vadd.f32 %v625, %v633
    %v636 = vtanh.pop %v635
    %638 = vrot.lane.b32.xlu0 %v636, 64
    %v639 = vpop.permute.xlu0 %638
    %v641 = vmul.f32 %v623, %v639
    %v642 = vsel %vm577, 1, 0
    %643 = vset.pattern.permute.xlu0 0
    %644 = vperm.xlu0 %643, %v642
    %v645 = vpop.permute.xlu0 %644
    %vm646 = vcmp.eq.s32.totalorder %v645, 1
    %v647 = vsel %vm646, %v641, %v423
    %v648 = vsel %vm646, %v635, %v424
    %v649 = vsel %vm646, %v641, 0.0
    %651 = vrot.lane.b32.xlu0 %v522, 32
    %v652 = vpop.permute.xlu0 %651
    %v653 = vsel %vm349, %v652, 0
    %655 = vmatpush.msra.mxu0 0.0
    %656 = vmatpush.msra.mxu0 0.0
    %657 = vmatpush.msra.mxu0 0.0
    %658 = vmatpush.msra.mxu0 0.0
    %659 = vmatpush.msra.mxu0 0.0
    %660 = vmatpush.msra.mxu0 0.0
    %661 = vmatpush.msra.mxu0 0.0
    %662 = vmatpush.msra.mxu0 0.0
    %663 = vmatpush.msra.mxu0 0.0
    %664 = vmatpush.msra.mxu0 0.0
    %665 = vmatpush.msra.mxu0 0.0
    %666 = vmatpush.msra.mxu0 0.0
    %667 = vmatpush.msra.mxu0 %v335
    %668 = vmatpush.msra.mxu0 %v334
    %669 = vmatpush.msra.mxu0 %v333
    %670 = vmatpush.msra.mxu0 %v332
    %671 = vmatmul.f32.gmra.mxu0 %v653
    %v672 = vpop.f32.mrf.mxu0
    %v673 = vadd.f32 0.0, %v672
    %674 = vdwg.mxu0
    %676 = vrot.lane.b32.xlu0 %v649, 32
    %v677 = vpop.permute.xlu0 %676
    %v678 = vsel %vm349, %v677, 0
    %680 = vmatpush.msra.mxu0 0.0
    %681 = vmatpush.msra.mxu0 0.0
    %682 = vmatpush.msra.mxu0 0.0
    %683 = vmatpush.msra.mxu0 0.0
    %684 = vmatpush.msra.mxu0 0.0
    %685 = vmatpush.msra.mxu0 0.0
    %686 = vmatpush.msra.mxu0 0.0
    %687 = vmatpush.msra.mxu0 0.0
    %688 = vmatpush.msra.mxu0 0.0
    %689 = vmatpush.msra.mxu0 0.0
    %690 = vmatpush.msra.mxu0 0.0
    %691 = vmatpush.msra.mxu0 0.0
    %692 = vmatpush.msra.mxu0 %v339
    %693 = vmatpush.msra.mxu0 %v338
    %694 = vmatpush.msra.mxu0 %v337
    %695 = vmatpush.msra.mxu0 %v336
    %696 = vmatmul.f32.gmra.mxu0 %v678
    %v697 = vpop.f32.mrf.mxu0
    %v698 = vadd.f32 %v673, %v697
    %699 = vdwg.mxu0
    %v700 = vadd.f32 %v698, %v475
    %v701 = vxor.u32 %v700, 2147483648
    %v702 = vmul.f32 %v701, 1.442695
    %v703 = vpow.pop %v702
    %v704 = vadd.f32 %v703, 1.0
    %v705 = vrcp.pop %v704
    %v706 = vmul.f32 %v704, %v705
    %v707 = vsub.f32 1.0, %v706
    %v708 = vmul.f32 %v705, %v707
    %v709 = vadd.f32 %v705, %v708
    %vm710 = vweird.f32 %v704
    %vm711 = vweird.f32 %v705
    %vm712 = vmor %vm710, %vm711
    %v713 = vsel %vm712, %v705, %v709
    %v714 = vand.u32 2147483647, %v704
    %vm715 = vcmp.eq.f32.partialorder %v714, 8.507059e+37
    %v716 = vand.u32 %v704, 2147483648
    %v717 = vor.u32 1.1754944e-38, %v716
    %v718 = vsel %vm715, %v717, %v713
    %v719 = vmul.f32 1.0, %v718
    %v720 = vtanh.pop %v700
    %v721 = vmul.f32 %v719, %v523
    %723 = vrot.lane.b32.xlu0 %v720, 64
    %v724 = vpop.permute.xlu0 %723
    %v726 = vmul.f32 %v719, %v724
    %728 = vrot.lane.b32.xlu0 %v726, 32
    %v729 = vpop.permute.xlu0 %728
    %v731 = vadd.f32 %v721, %v729
    %v732 = vtanh.pop %v731
    %734 = vrot.lane.b32.xlu0 %v732, 64
    %v735 = vpop.permute.xlu0 %734
    %v737 = vmul.f32 %v719, %v735
    %v738 = vsel %vm646, %v737, %v522
    %v739 = vsel %vm646, %v731, %v523
    %v740 = vsel %vm646, %v737, 0.0
    %v741 = vmax.f32 %v740, 0.0
    %743 = vrot.lane.b32.xlu0 %v741, 32
    %v744 = vpop.permute.xlu0 %743
    %v746 = vsel %vm530, %v744, 0.0
    %747 = vadd.xlane.f32.xlu0 %v746
    %v748 = vpop.xlane.xlu0 %747
    %v749 = vmul.f32 %v748, %v540
    %v750 = vsub.f32 %v741, %v749
    %v751 = vmul.f32 %v750, %v750
    %753 = vrot.lane.b32.xlu0 %v751, 32
    %v754 = vpop.permute.xlu0 %753
    %v756 = vsel %vm530, %v754, 0.0
    %757 = vadd.xlane.f32.xlu0 %v756
    %v758 = vpop.xlane.xlu0 %757
    %v759 = vmul.f32 %v758, %v540
    %v760 = vadd.f32 %v759, 1e-05
    %v761 = vrsqrt.pop %v760
    %v762 = vmul.f32 %v761, %v760
    %v763 = vmul.f32 %v762, %v761
    %v764 = vmul.f32 0.5, %v763
    %v765 = vsub.f32 1.5, %v764
    %v766 = vmul.f32 %v761, %v765
    %vm767 = vweird.f32 %v760
    %vm768 = vweird.f32 %v761
    %vm769 = vmor %vm767, %vm768
    %v770 = vsel %vm769, %v761, %v766
    %v771 = vmul.f32 %v750, %v770
    %v772 = vmul.f32 %v771, %v567
    %v773 = vadd.f32 %v772, %v573
    %v774 = vadd.f32 %v576, %v773
    %vm775 = vcmp.gt.s32.totalorder %v325, 2
    %v776 = vld [vmem:[%s260] sm:$0x3]
    %778 = vrot.lane.b32.xlu0 %v647, 32
    %v779 = vpop.permute.xlu0 %778
    %v780 = vsel %vm349, %v779, 0
    %782 = vmatpush.msra.mxu0 0.0
    %783 = vmatpush.msra.mxu0 0.0
    %784 = vmatpush.msra.mxu0 0.0
    %785 = vmatpush.msra.mxu0 0.0
    %786 = vmatpush.msra.mxu0 0.0
    %787 = vmatpush.msra.mxu0 0.0
    %788 = vmatpush.msra.mxu0 0.0
    %789 = vmatpush.msra.mxu0 0.0
    %790 = vmatpush.msra.mxu0 0.0
    %791 = vmatpush.msra.mxu0 0.0
    %792 = vmatpush.msra.mxu0 0.0
    %793 = vmatpush.msra.mxu0 0.0
    %794 = vmatpush.msra.mxu0 %v331
    %795 = vmatpush.msra.mxu0 %v330
    %796 = vmatpush.msra.mxu0 %v329
    %797 = vmatpush.msra.mxu0 %v328
    %798 = vmatmul.f32.gmra.mxu0 %v780
    %v799 = vpop.f32.mrf.mxu0
    %v800 = vadd.f32 0.0, %v799
    %801 = vdwg.mxu0
    %v802 = vadd.f32 %v776, %v800
    %v803 = vxor.u32 %v802, 2147483648
    %v804 = vmul.f32 %v803, 1.442695
    %v805 = vpow.pop %v804
    %v806 = vadd.f32 %v805, 1.0
    %v807 = vrcp.pop %v806
    %v808 = vmul.f32 %v806, %v807
    %v809 = vsub.f32 1.0, %v808
    %v810 = vmul.f32 %v807, %v809
    %v811 = vadd.f32 %v807, %v810
    %vm812 = vweird.f32 %v806
    %vm813 = vweird.f32 %v807
    %vm814 = vmor %vm812, %vm813
    %v815 = vsel %vm814, %v807, %v811
    %v816 = vand.u32 2147483647, %v806
    %vm817 = vcmp.eq.f32.partialorder %v816, 8.507059e+37
    %v818 = vand.u32 %v806, 2147483648
    %v819 = vor.u32 1.1754944e-38, %v818
    %v820 = vsel %vm817, %v819, %v815
    %v821 = vmul.f32 1.0, %v820
    %v822 = vtanh.pop %v802
    %v823 = vmul.f32 %v821, %v648
    %825 = vrot.lane.b32.xlu0 %v822, 64
    %v826 = vpop.permute.xlu0 %825
    %v828 = vmul.f32 %v821, %v826
    %830 = vrot.lane.b32.xlu0 %v828, 32
    %v831 = vpop.permute.xlu0 %830
    %v833 = vadd.f32 %v823, %v831
    %v834 = vtanh.pop %v833
    %836 = vrot.lane.b32.xlu0 %v834, 64
    %v837 = vpop.permute.xlu0 %836
    %v839 = vmul.f32 %v821, %v837
    %v840 = vsel %vm775, 1, 0
    %841 = vset.pattern.permute.xlu0 0
    %842 = vperm.xlu0 %841, %v840
    %v843 = vpop.permute.xlu0 %842
    %vm844 = vcmp.eq.s32.totalorder %v843, 1
    %v845 = vsel %vm844, %v839, %v647
    %v846 = vsel %vm844, %v833, %v648
    %v847 = vsel %vm844, %v839, 0.0
    %849 = vrot.lane.b32.xlu0 %v738, 32
    %v850 = vpop.permute.xlu0 %849
    %v851 = vsel %vm349, %v850, 0
    %853 = vmatpush.msra.mxu0 0.0
    %854 = vmatpush.msra.mxu0 0.0
    %855 = vmatpush.msra.mxu0 0.0
    %856 = vmatpush.msra.mxu0 0.0
    %857 = vmatpush.msra.mxu0 0.0
    %858 = vmatpush.msra.mxu0 0.0
    %859 = vmatpush.msra.mxu0 0.0
    %860 = vmatpush.msra.mxu0 0.0
    %861 = vmatpush.msra.mxu0 0.0
    %862 = vmatpush.msra.mxu0 0.0
    %863 = vmatpush.msra.mxu0 0.0
    %864 = vmatpush.msra.mxu0 0.0
    %865 = vmatpush.msra.mxu0 %v335
    %866 = vmatpush.msra.mxu0 %v334
    %867 = vmatpush.msra.mxu0 %v333
    %868 = vmatpush.msra.mxu0 %v332
    %869 = vmatmul.f32.gmra.mxu0 %v851
    %v870 = vpop.f32.mrf.mxu0
    %v871 = vadd.f32 0.0, %v870
    %872 = vdwg.mxu0
    %874 = vrot.lane.b32.xlu0 %v847, 32
    %v875 = vpop.permute.xlu0 %874
    %v876 = vsel %vm349, %v875, 0
    %878 = vmatpush.msra.mxu0 0.0
    %879 = vmatpush.msra.mxu0 0.0
    %880 = vmatpush.msra.mxu0 0.0
    %881 = vmatpush.msra.mxu0 0.0
    %882 = vmatpush.msra.mxu0 0.0
    %883 = vmatpush.msra.mxu0 0.0
    %884 = vmatpush.msra.mxu0 0.0
    %885 = vmatpush.msra.mxu0 0.0
    %886 = vmatpush.msra.mxu0 0.0
    %887 = vmatpush.msra.mxu0 0.0
    %888 = vmatpush.msra.mxu0 0.0
    %889 = vmatpush.msra.mxu0 0.0
    %890 = vmatpush.msra.mxu0 %v339
    %891 = vmatpush.msra.mxu0 %v338
    %892 = vmatpush.msra.mxu0 %v337
    %893 = vmatpush.msra.mxu0 %v336
    %894 = vmatmul.f32.gmra.mxu0 %v876
    %v895 = vpop.f32.mrf.mxu0
    %v896 = vadd.f32 %v871, %v895
    %897 = vdwg.mxu0
    %v898 = vadd.f32 %v896, %v475
    %v899 = vxor.u32 %v898, 2147483648
    %v900 = vmul.f32 %v899, 1.442695
    %v901 = vpow.pop %v900
    %v902 = vadd.f32 %v901, 1.0
    %v903 = vrcp.pop %v902
    %v904 = vmul.f32 %v902, %v903
    %v905 = vsub.f32 1.0, %v904
    %v906 = vmul.f32 %v903, %v905
    %v907 = vadd.f32 %v903, %v906
    %vm908 = vweird.f32 %v902
    %vm909 = vweird.f32 %v903
    %vm910 = vmor %vm908, %vm909
    %v911 = vsel %vm910, %v903, %v907
    %v912 = vand.u32 2147483647, %v902
    %vm913 = vcmp.eq.f32.partialorder %v912, 8.507059e+37
    %v914 = vand.u32 %v902, 2147483648
    %v915 = vor.u32 1.1754944e-38, %v914
    %v916 = vsel %vm913, %v915, %v911
    %v917 = vmul.f32 1.0, %v916
    %v918 = vtanh.pop %v898
    %v919 = vmul.f32 %v917, %v739
    %921 = vrot.lane.b32.xlu0 %v918, 64
    %v922 = vpop.permute.xlu0 %921
    %v924 = vmul.f32 %v917, %v922
    %926 = vrot.lane.b32.xlu0 %v924, 32
    %v927 = vpop.permute.xlu0 %926
    %v929 = vadd.f32 %v919, %v927
    %v930 = vtanh.pop %v929
    %932 = vrot.lane.b32.xlu0 %v930, 64
    %v933 = vpop.permute.xlu0 %932
    %v935 = vmul.f32 %v917, %v933
    %v936 = vsel %vm844, %v935, %v738
    %v937 = vsel %vm844, %v929, %v739
    %v938 = vsel %vm844, %v935, 0.0
    %v939 = vmax.f32 %v938, 0.0
    %941 = vrot.lane.b32.xlu0 %v939, 32
    %v942 = vpop.permute.xlu0 %941
    %v944 = vsel %vm530, %v942, 0.0
    %945 = vadd.xlane.f32.xlu0 %v944
    %v946 = vpop.xlane.xlu0 %945
    %v947 = vmul.f32 %v946, %v540
    %v948 = vsub.f32 %v939, %v947
    %v949 = vmul.f32 %v948, %v948
    %951 = vrot.lane.b32.xlu0 %v949, 32
    %v952 = vpop.permute.xlu0 %951
    %v954 = vsel %vm530, %v952, 0.0
    %955 = vadd.xlane.f32.xlu0 %v954
    %v956 = vpop.xlane.xlu0 %955
    %v957 = vmul.f32 %v956, %v540
    %v958 = vadd.f32 %v957, 1e-05
    %v959 = vrsqrt.pop %v958
    %v960 = vmul.f32 %v959, %v958
    %v961 = vmul.f32 %v960, %v959
    %v962 = vmul.f32 0.5, %v961
    %v963 = vsub.f32 1.5, %v962
    %v964 = vmul.f32 %v959, %v963
    %vm965 = vweird.f32 %v958
    %vm966 = vweird.f32 %v959
    %vm967 = vmor %vm965, %vm966
    %v968 = vsel %vm967, %v959, %v964
    %v969 = vmul.f32 %v948, %v968
    %v970 = vmul.f32 %v969, %v567
    %v971 = vadd.f32 %v970, %v573
    %v972 = vadd.f32 %v774, %v971
    %vm973 = vcmp.gt.s32.totalorder %v325, 3
    %v974 = vld [vmem:[%s262] sm:$0x3]
    %976 = vrot.lane.b32.xlu0 %v845, 32
    %v977 = vpop.permute.xlu0 %976
    %v978 = vsel %vm349, %v977, 0
    %980 = vmatpush.msra.mxu0 0.0
    %981 = vmatpush.msra.mxu0 0.0
    %982 = vmatpush.msra.mxu0 0.0
    %983 = vmatpush.msra.mxu0 0.0
    %984 = vmatpush.msra.mxu0 0.0
    %985 = vmatpush.msra.mxu0 0.0
    %986 = vmatpush.msra.mxu0 0.0
    %987 = vmatpush.msra.mxu0 0.0
    %988 = vmatpush.msra.mxu0 0.0
    %989 = vmatpush.msra.mxu0 0.0
    %990 = vmatpush.msra.mxu0 0.0
    %991 = vmatpush.msra.mxu0 0.0
    %992 = vmatpush.msra.mxu0 %v331
    %993 = vmatpush.msra.mxu0 %v330
    %994 = vmatpush.msra.mxu0 %v329
    %995 = vmatpush.msra.mxu0 %v328
    %996 = vmatmul.f32.gmra.mxu0 %v978
    %v997 = vpop.f32.mrf.mxu0
    %v998 = vadd.f32 0.0, %v997
    %999 = vdwg.mxu0
    %v1000 = vadd.f32 %v974, %v998
    %v1001 = vxor.u32 %v1000, 2147483648
    %v1002 = vmul.f32 %v1001, 1.442695
    %v1003 = vpow.pop %v1002
    %v1004 = vadd.f32 %v1003, 1.0
    %v1005 = vrcp.pop %v1004
    %v1006 = vmul.f32 %v1004, %v1005
    %v1007 = vsub.f32 1.0, %v1006
    %v1008 = vmul.f32 %v1005, %v1007
    %v1009 = vadd.f32 %v1005, %v1008
    %vm1010 = vweird.f32 %v1004
    %vm1011 = vweird.f32 %v1005
    %vm1012 = vmor %vm1010, %vm1011
    %v1013 = vsel %vm1012, %v1005, %v1009
    %v1014 = vand.u32 2147483647, %v1004
    %vm1015 = vcmp.eq.f32.partialorder %v1014, 8.507059e+37
    %v1016 = vand.u32 %v1004, 2147483648
    %v1017 = vor.u32 1.1754944e-38, %v1016
    %v1018 = vsel %vm1015, %v1017, %v1013
    %v1019 = vmul.f32 1.0, %v1018
    %v1020 = vtanh.pop %v1000
    %v1021 = vmul.f32 %v1019, %v846
    %1023 = vrot.lane.b32.xlu0 %v1020, 64
    %v1024 = vpop.permute.xlu0 %1023
    %v1026 = vmul.f32 %v1019, %v1024
    %1028 = vrot.lane.b32.xlu0 %v1026, 32
    %v1029 = vpop.permute.xlu0 %1028
    %v1031 = vadd.f32 %v1021, %v1029
    %v1032 = vtanh.pop %v1031
    %1034 = vrot.lane.b32.xlu0 %v1032, 64
    %v1035 = vpop.permute.xlu0 %1034
    %v1037 = vmul.f32 %v1019, %v1035
    %v1038 = vsel %vm973, 1, 0
    %1039 = vset.pattern.permute.xlu0 0
    %1040 = vperm.xlu0 %1039, %v1038
    %v1041 = vpop.permute.xlu0 %1040
    %vm1042 = vcmp.eq.s32.totalorder %v1041, 1
    %v1043 = vsel %vm1042, %v1037, %v845
    %v1044 = vsel %vm1042, %v1031, %v846
    %v1045 = vsel %vm1042, %v1037, 0.0
    %1047 = vrot.lane.b32.xlu0 %v936, 32
    %v1048 = vpop.permute.xlu0 %1047
    %v1049 = vsel %vm349, %v1048, 0
    %1051 = vmatpush.msra.mxu0 0.0
    %1052 = vmatpush.msra.mxu0 0.0
    %1053 = vmatpush.msra.mxu0 0.0
    %1054 = vmatpush.msra.mxu0 0.0
    %1055 = vmatpush.msra.mxu0 0.0
    %1056 = vmatpush.msra.mxu0 0.0
    %1057 = vmatpush.msra.mxu0 0.0
    %1058 = vmatpush.msra.mxu0 0.0
    %1059 = vmatpush.msra.mxu0 0.0
    %1060 = vmatpush.msra.mxu0 0.0
    %1061 = vmatpush.msra.mxu0 0.0
    %1062 = vmatpush.msra.mxu0 0.0
    %1063 = vmatpush.msra.mxu0 %v335
    %1064 = vmatpush.msra.mxu0 %v334
    %1065 = vmatpush.msra.mxu0 %v333
    %1066 = vmatpush.msra.mxu0 %v332
    %1067 = vmatmul.f32.gmra.mxu0 %v1049
    %v1068 = vpop.f32.mrf.mxu0
    %v1069 = vadd.f32 0.0, %v1068
    %1070 = vdwg.mxu0
    %1072 = vrot.lane.b32.xlu0 %v1045, 32
    %v1073 = vpop.permute.xlu0 %1072
    %v1074 = vsel %vm349, %v1073, 0
    %1076 = vmatpush.msra.mxu0 0.0
    %1077 = vmatpush.msra.mxu0 0.0
    %1078 = vmatpush.msra.mxu0 0.0
    %1079 = vmatpush.msra.mxu0 0.0
    %1080 = vmatpush.msra.mxu0 0.0
    %1081 = vmatpush.msra.mxu0 0.0
    %1082 = vmatpush.msra.mxu0 0.0
    %1083 = vmatpush.msra.mxu0 0.0
    %1084 = vmatpush.msra.mxu0 0.0
    %1085 = vmatpush.msra.mxu0 0.0
    %1086 = vmatpush.msra.mxu0 0.0
    %1087 = vmatpush.msra.mxu0 0.0
    %1088 = vmatpush.msra.mxu0 %v339
    %1089 = vmatpush.msra.mxu0 %v338
    %1090 = vmatpush.msra.mxu0 %v337
    %1091 = vmatpush.msra.mxu0 %v336
    %1092 = vmatmul.f32.gmra.mxu0 %v1074
    %v1093 = vpop.f32.mrf.mxu0
    %v1094 = vadd.f32 %v1069, %v1093
    %1095 = vdwg.mxu0
    %v1096 = vadd.f32 %v1094, %v475
    %v1097 = vxor.u32 %v1096, 2147483648
    %v1098 = vmul.f32 %v1097, 1.442695
    %v1099 = vpow.pop %v1098
    %v1100 = vadd.f32 %v1099, 1.0
    %v1101 = vrcp.pop %v1100
    %v1102 = vmul.f32 %v1100, %v1101
    %v1103 = vsub.f32 1.0, %v1102
    %v1104 = vmul.f32 %v1101, %v1103
    %v1105 = vadd.f32 %v1101, %v1104
    %vm1106 = vweird.f32 %v1100
    %vm1107 = vweird.f32 %v1101
    %vm1108 = vmor %vm1106, %vm1107
    %v1109 = vsel %vm1108, %v1101, %v1105
    %v1110 = vand.u32 2147483647, %v1100
    %vm1111 = vcmp.eq.f32.partialorder %v1110, 8.507059e+37
    %v1112 = vand.u32 %v1100, 2147483648
    %v1113 = vor.u32 1.1754944e-38, %v1112
    %v1114 = vsel %vm1111, %v1113, %v1109
    %v1115 = vmul.f32 1.0, %v1114
    %v1116 = vtanh.pop %v1096
    %v1117 = vmul.f32 %v1115, %v937
    %1119 = vrot.lane.b32.xlu0 %v1116, 64
    %v1120 = vpop.permute.xlu0 %1119
    %v1122 = vmul.f32 %v1115, %v1120
    %1124 = vrot.lane.b32.xlu0 %v1122, 32
    %v1125 = vpop.permute.xlu0 %1124
    %v1127 = vadd.f32 %v1117, %v1125
    %v1128 = vtanh.pop %v1127
    %1130 = vrot.lane.b32.xlu0 %v1128, 64
    %v1131 = vpop.permute.xlu0 %1130
    %v1133 = vmul.f32 %v1115, %v1131
    %v1134 = vsel %vm1042, %v1133, %v936
    %v1135 = vsel %vm1042, %v1127, %v937
    %v1136 = vsel %vm1042, %v1133, 0.0
    %v1137 = vmax.f32 %v1136, 0.0
    %1139 = vrot.lane.b32.xlu0 %v1137, 32
    %v1140 = vpop.permute.xlu0 %1139
    %v1142 = vsel %vm530, %v1140, 0.0
    %1143 = vadd.xlane.f32.xlu0 %v1142
    %v1144 = vpop.xlane.xlu0 %1143
    %v1145 = vmul.f32 %v1144, %v540
    %v1146 = vsub.f32 %v1137, %v1145
    %v1147 = vmul.f32 %v1146, %v1146
    %1149 = vrot.lane.b32.xlu0 %v1147, 32
    %v1150 = vpop.permute.xlu0 %1149
    %v1152 = vsel %vm530, %v1150, 0.0
    %1153 = vadd.xlane.f32.xlu0 %v1152
    %v1154 = vpop.xlane.xlu0 %1153
    %v1155 = vmul.f32 %v1154, %v540
    %v1156 = vadd.f32 %v1155, 1e-05
    %v1157 = vrsqrt.pop %v1156
    %v1158 = vmul.f32 %v1157, %v1156
    %v1159 = vmul.f32 %v1158, %v1157
    %v1160 = vmul.f32 0.5, %v1159
    %v1161 = vsub.f32 1.5, %v1160
    %v1162 = vmul.f32 %v1157, %v1161
    %vm1163 = vweird.f32 %v1156
    %vm1164 = vweird.f32 %v1157
    %vm1165 = vmor %vm1163, %vm1164
    %v1166 = vsel %vm1165, %v1157, %v1162
    %v1167 = vmul.f32 %v1146, %v1166
    %v1168 = vmul.f32 %v1167, %v567
    %v1169 = vadd.f32 %v1168, %v573
    %v1170 = vadd.f32 %v972, %v1169
    %vm1171 = vcmp.gt.s32.totalorder %v325, 4
    %v1172 = vld [vmem:[%s264] sm:$0x3]
    %1174 = vrot.lane.b32.xlu0 %v1043, 32
    %v1175 = vpop.permute.xlu0 %1174
    %v1176 = vsel %vm349, %v1175, 0
    %1178 = vmatpush.msra.mxu0 0.0
    %1179 = vmatpush.msra.mxu0 0.0
    %1180 = vmatpush.msra.mxu0 0.0
    %1181 = vmatpush.msra.mxu0 0.0
    %1182 = vmatpush.msra.mxu0 0.0
    %1183 = vmatpush.msra.mxu0 0.0
    %1184 = vmatpush.msra.mxu0 0.0
    %1185 = vmatpush.msra.mxu0 0.0
    %1186 = vmatpush.msra.mxu0 0.0
    %1187 = vmatpush.msra.mxu0 0.0
    %1188 = vmatpush.msra.mxu0 0.0
    %1189 = vmatpush.msra.mxu0 0.0
    %1190 = vmatpush.msra.mxu0 %v331
    %1191 = vmatpush.msra.mxu0 %v330
    %1192 = vmatpush.msra.mxu0 %v329
    %1193 = vmatpush.msra.mxu0 %v328
    %1194 = vmatmul.f32.gmra.mxu0 %v1176
    %v1195 = vpop.f32.mrf.mxu0
    %v1196 = vadd.f32 0.0, %v1195
    %1197 = vdwg.mxu0
    %v1198 = vadd.f32 %v1172, %v1196
    %v1199 = vxor.u32 %v1198, 2147483648
    %v1200 = vmul.f32 %v1199, 1.442695
    %v1201 = vpow.pop %v1200
    %v1202 = vadd.f32 %v1201, 1.0
    %v1203 = vrcp.pop %v1202
    %v1204 = vmul.f32 %v1202, %v1203
    %v1205 = vsub.f32 1.0, %v1204
    %v1206 = vmul.f32 %v1203, %v1205
    %v1207 = vadd.f32 %v1203, %v1206
    %vm1208 = vweird.f32 %v1202
    %vm1209 = vweird.f32 %v1203
    %vm1210 = vmor %vm1208, %vm1209
    %v1211 = vsel %vm1210, %v1203, %v1207
    %v1212 = vand.u32 2147483647, %v1202
    %vm1213 = vcmp.eq.f32.partialorder %v1212, 8.507059e+37
    %v1214 = vand.u32 %v1202, 2147483648
    %v1215 = vor.u32 1.1754944e-38, %v1214
    %v1216 = vsel %vm1213, %v1215, %v1211
    %v1217 = vmul.f32 1.0, %v1216
    %v1218 = vtanh.pop %v1198
    %v1219 = vmul.f32 %v1217, %v1044
    %1221 = vrot.lane.b32.xlu0 %v1218, 64
    %v1222 = vpop.permute.xlu0 %1221
    %v1224 = vmul.f32 %v1217, %v1222
    %1226 = vrot.lane.b32.xlu0 %v1224, 32
    %v1227 = vpop.permute.xlu0 %1226
    %v1229 = vadd.f32 %v1219, %v1227
    %v1230 = vtanh.pop %v1229
    %1232 = vrot.lane.b32.xlu0 %v1230, 64
    %v1233 = vpop.permute.xlu0 %1232
    %v1235 = vmul.f32 %v1217, %v1233
    %v1236 = vsel %vm1171, 1, 0
    %1237 = vset.pattern.permute.xlu0 0
    %1238 = vperm.xlu0 %1237, %v1236
    %v1239 = vpop.permute.xlu0 %1238
    %vm1240 = vcmp.eq.s32.totalorder %v1239, 1
    %v1241 = vsel %vm1240, %v1235, %v1043
    %v1242 = vsel %vm1240, %v1229, %v1044
    %v1243 = vsel %vm1240, %v1235, 0.0
    %1245 = vrot.lane.b32.xlu0 %v1134, 32
    %v1246 = vpop.permute.xlu0 %1245
    %v1247 = vsel %vm349, %v1246, 0
    %1249 = vmatpush.msra.mxu0 0.0
    %1250 = vmatpush.msra.mxu0 0.0
    %1251 = vmatpush.msra.mxu0 0.0
    %1252 = vmatpush.msra.mxu0 0.0
    %1253 = vmatpush.msra.mxu0 0.0
    %1254 = vmatpush.msra.mxu0 0.0
    %1255 = vmatpush.msra.mxu0 0.0
    %1256 = vmatpush.msra.mxu0 0.0
    %1257 = vmatpush.msra.mxu0 0.0
    %1258 = vmatpush.msra.mxu0 0.0
    %1259 = vmatpush.msra.mxu0 0.0
    %1260 = vmatpush.msra.mxu0 0.0
    %1261 = vmatpush.msra.mxu0 %v335
    %1262 = vmatpush.msra.mxu0 %v334
    %1263 = vmatpush.msra.mxu0 %v333
    %1264 = vmatpush.msra.mxu0 %v332
    %1265 = vmatmul.f32.gmra.mxu0 %v1247
    %v1266 = vpop.f32.mrf.mxu0
    %v1267 = vadd.f32 0.0, %v1266
    %1268 = vdwg.mxu0
    %1270 = vrot.lane.b32.xlu0 %v1243, 32
    %v1271 = vpop.permute.xlu0 %1270
    %v1272 = vsel %vm349, %v1271, 0
    %1274 = vmatpush.msra.mxu0 0.0
    %1275 = vmatpush.msra.mxu0 0.0
    %1276 = vmatpush.msra.mxu0 0.0
    %1277 = vmatpush.msra.mxu0 0.0
    %1278 = vmatpush.msra.mxu0 0.0
    %1279 = vmatpush.msra.mxu0 0.0
    %1280 = vmatpush.msra.mxu0 0.0
    %1281 = vmatpush.msra.mxu0 0.0
    %1282 = vmatpush.msra.mxu0 0.0
    %1283 = vmatpush.msra.mxu0 0.0
    %1284 = vmatpush.msra.mxu0 0.0
    %1285 = vmatpush.msra.mxu0 0.0
    %1286 = vmatpush.msra.mxu0 %v339
    %1287 = vmatpush.msra.mxu0 %v338
    %1288 = vmatpush.msra.mxu0 %v337
    %1289 = vmatpush.msra.mxu0 %v336
    %1290 = vmatmul.f32.gmra.mxu0 %v1272
    %v1291 = vpop.f32.mrf.mxu0
    %v1292 = vadd.f32 %v1267, %v1291
    %1293 = vdwg.mxu0
    %v1294 = vadd.f32 %v1292, %v475
    %v1295 = vxor.u32 %v1294, 2147483648
    %v1296 = vmul.f32 %v1295, 1.442695
    %v1297 = vpow.pop %v1296
    %v1298 = vadd.f32 %v1297, 1.0
    %v1299 = vrcp.pop %v1298
    %v1300 = vmul.f32 %v1298, %v1299
    %v1301 = vsub.f32 1.0, %v1300
    %v1302 = vmul.f32 %v1299, %v1301
    %v1303 = vadd.f32 %v1299, %v1302
    %vm1304 = vweird.f32 %v1298
    %vm1305 = vweird.f32 %v1299
    %vm1306 = vmor %vm1304, %vm1305
    %v1307 = vsel %vm1306, %v1299, %v1303
    %v1308 = vand.u32 2147483647, %v1298
    %vm1309 = vcmp.eq.f32.partialorder %v1308, 8.507059e+37
    %v1310 = vand.u32 %v1298, 2147483648
    %v1311 = vor.u32 1.1754944e-38, %v1310
    %v1312 = vsel %vm1309, %v1311, %v1307
    %v1313 = vmul.f32 1.0, %v1312
    %v1314 = vtanh.pop %v1294
    %v1315 = vmul.f32 %v1313, %v1135
    %1317 = vrot.lane.b32.xlu0 %v1314, 64
    %v1318 = vpop.permute.xlu0 %1317
    %v1320 = vmul.f32 %v1313, %v1318
    %1322 = vrot.lane.b32.xlu0 %v1320, 32
    %v1323 = vpop.permute.xlu0 %1322
    %v1325 = vadd.f32 %v1315, %v1323
    %v1326 = vtanh.pop %v1325
    %1328 = vrot.lane.b32.xlu0 %v1326, 64
    %v1329 = vpop.permute.xlu0 %1328
    %v1331 = vmul.f32 %v1313, %v1329
    %v1332 = vsel %vm1240, %v1331, %v1134
    %v1333 = vsel %vm1240, %v1325, %v1135
    %v1334 = vsel %vm1240, %v1331, 0.0
    %v1335 = vmax.f32 %v1334, 0.0
    %1337 = vrot.lane.b32.xlu0 %v1335, 32
    %v1338 = vpop.permute.xlu0 %1337
    %v1340 = vsel %vm530, %v1338, 0.0
    %1341 = vadd.xlane.f32.xlu0 %v1340
    %v1342 = vpop.xlane.xlu0 %1341
    %v1343 = vmul.f32 %v1342, %v540
    %v1344 = vsub.f32 %v1335, %v1343
    %v1345 = vmul.f32 %v1344, %v1344
    %1347 = vrot.lane.b32.xlu0 %v1345, 32
    %v1348 = vpop.permute.xlu0 %1347
    %v1350 = vsel %vm530, %v1348, 0.0
    %1351 = vadd.xlane.f32.xlu0 %v1350
    %v1352 = vpop.xlane.xlu0 %1351
    %v1353 = vmul.f32 %v1352, %v540
    %v1354 = vadd.f32 %v1353, 1e-05
    %v1355 = vrsqrt.pop %v1354
    %v1356 = vmul.f32 %v1355, %v1354
    %v1357 = vmul.f32 %v1356, %v1355
    %v1358 = vmul.f32 0.5, %v1357
    %v1359 = vsub.f32 1.5, %v1358
    %v1360 = vmul.f32 %v1355, %v1359
    %vm1361 = vweird.f32 %v1354
    %vm1362 = vweird.f32 %v1355
    %vm1363 = vmor %vm1361, %vm1362
    %v1364 = vsel %vm1363, %v1355, %v1360
    %v1365 = vmul.f32 %v1344, %v1364
    %v1366 = vmul.f32 %v1365, %v567
    %v1367 = vadd.f32 %v1366, %v573
    %v1368 = vadd.f32 %v1170, %v1367
    %vm1369 = vcmp.gt.s32.totalorder %v325, 5
    %v1370 = vld [vmem:[%s266] sm:$0x3]
    %1372 = vrot.lane.b32.xlu0 %v1241, 32
    %v1373 = vpop.permute.xlu0 %1372
    %v1374 = vsel %vm349, %v1373, 0
    %1376 = vmatpush.msra.mxu0 0.0
    %1377 = vmatpush.msra.mxu0 0.0
    %1378 = vmatpush.msra.mxu0 0.0
    %1379 = vmatpush.msra.mxu0 0.0
    %1380 = vmatpush.msra.mxu0 0.0
    %1381 = vmatpush.msra.mxu0 0.0
    %1382 = vmatpush.msra.mxu0 0.0
    %1383 = vmatpush.msra.mxu0 0.0
    %1384 = vmatpush.msra.mxu0 0.0
    %1385 = vmatpush.msra.mxu0 0.0
    %1386 = vmatpush.msra.mxu0 0.0
    %1387 = vmatpush.msra.mxu0 0.0
    %1388 = vmatpush.msra.mxu0 %v331
    %1389 = vmatpush.msra.mxu0 %v330
    %1390 = vmatpush.msra.mxu0 %v329
    %1391 = vmatpush.msra.mxu0 %v328
    %1392 = vmatmul.f32.gmra.mxu0 %v1374
    %v1393 = vpop.f32.mrf.mxu0
    %v1394 = vadd.f32 0.0, %v1393
    %1395 = vdwg.mxu0
    %v1396 = vadd.f32 %v1370, %v1394
    %v1397 = vxor.u32 %v1396, 2147483648
    %v1398 = vmul.f32 %v1397, 1.442695
    %v1399 = vpow.pop %v1398
    %v1400 = vadd.f32 %v1399, 1.0
    %v1401 = vrcp.pop %v1400
    %v1402 = vmul.f32 %v1400, %v1401
    %v1403 = vsub.f32 1.0, %v1402
    %v1404 = vmul.f32 %v1401, %v1403
    %v1405 = vadd.f32 %v1401, %v1404
    %vm1406 = vweird.f32 %v1400
    %vm1407 = vweird.f32 %v1401
    %vm1408 = vmor %vm1406, %vm1407
    %v1409 = vsel %vm1408, %v1401, %v1405
    %v1410 = vand.u32 2147483647, %v1400
    %vm1411 = vcmp.eq.f32.partialorder %v1410, 8.507059e+37
    %v1412 = vand.u32 %v1400, 2147483648
    %v1413 = vor.u32 1.1754944e-38, %v1412
    %v1414 = vsel %vm1411, %v1413, %v1409
    %v1415 = vmul.f32 1.0, %v1414
    %v1416 = vtanh.pop %v1396
    %v1417 = vmul.f32 %v1415, %v1242
    %1419 = vrot.lane.b32.xlu0 %v1416, 64
    %v1420 = vpop.permute.xlu0 %1419
    %v1422 = vmul.f32 %v1415, %v1420
    %1424 = vrot.lane.b32.xlu0 %v1422, 32
    %v1425 = vpop.permute.xlu0 %1424
    %v1427 = vadd.f32 %v1417, %v1425
    %v1428 = vtanh.pop %v1427
    %1430 = vrot.lane.b32.xlu0 %v1428, 64
    %v1431 = vpop.permute.xlu0 %1430
    %v1433 = vmul.f32 %v1415, %v1431
    %v1434 = vsel %vm1369, 1, 0
    %1435 = vset.pattern.permute.xlu0 0
    %1436 = vperm.xlu0 %1435, %v1434
    %v1437 = vpop.permute.xlu0 %1436
    %vm1438 = vcmp.eq.s32.totalorder %v1437, 1
    %v1439 = vsel %vm1438, %v1433, %v1241
    %v1440 = vsel %vm1438, %v1427, %v1242
    %v1441 = vsel %vm1438, %v1433, 0.0
    %1443 = vrot.lane.b32.xlu0 %v1332, 32
    %v1444 = vpop.permute.xlu0 %1443
    %v1445 = vsel %vm349, %v1444, 0
    %1447 = vmatpush.msra.mxu0 0.0
    %1448 = vmatpush.msra.mxu0 0.0
    %1449 = vmatpush.msra.mxu0 0.0
    %1450 = vmatpush.msra.mxu0 0.0
    %1451 = vmatpush.msra.mxu0 0.0
    %1452 = vmatpush.msra.mxu0 0.0
    %1453 = vmatpush.msra.mxu0 0.0
    %1454 = vmatpush.msra.mxu0 0.0
    %1455 = vmatpush.msra.mxu0 0.0
    %1456 = vmatpush.msra.mxu0 0.0
    %1457 = vmatpush.msra.mxu0 0.0
    %1458 = vmatpush.msra.mxu0 0.0
    %1459 = vmatpush.msra.mxu0 %v335
    %1460 = vmatpush.msra.mxu0 %v334
    %1461 = vmatpush.msra.mxu0 %v333
    %1462 = vmatpush.msra.mxu0 %v332
    %1463 = vmatmul.f32.gmra.mxu0 %v1445
    %v1464 = vpop.f32.mrf.mxu0
    %v1465 = vadd.f32 0.0, %v1464
    %1466 = vdwg.mxu0
    %1468 = vrot.lane.b32.xlu0 %v1441, 32
    %v1469 = vpop.permute.xlu0 %1468
    %v1470 = vsel %vm349, %v1469, 0
    %1472 = vmatpush.msra.mxu0 0.0
    %1473 = vmatpush.msra.mxu0 0.0
    %1474 = vmatpush.msra.mxu0 0.0
    %1475 = vmatpush.msra.mxu0 0.0
    %1476 = vmatpush.msra.mxu0 0.0
    %1477 = vmatpush.msra.mxu0 0.0
    %1478 = vmatpush.msra.mxu0 0.0
    %1479 = vmatpush.msra.mxu0 0.0
    %1480 = vmatpush.msra.mxu0 0.0
    %1481 = vmatpush.msra.mxu0 0.0
    %1482 = vmatpush.msra.mxu0 0.0
    %1483 = vmatpush.msra.mxu0 0.0
    %1484 = vmatpush.msra.mxu0 %v339
    %1485 = vmatpush.msra.mxu0 %v338
    %1486 = vmatpush.msra.mxu0 %v337
    %1487 = vmatpush.msra.mxu0 %v336
    %1488 = vmatmul.f32.gmra.mxu0 %v1470
    %v1489 = vpop.f32.mrf.mxu0
    %v1490 = vadd.f32 %v1465, %v1489
    %1491 = vdwg.mxu0
    %v1492 = vadd.f32 %v1490, %v475
    %v1493 = vxor.u32 %v1492, 2147483648
    %v1494 = vmul.f32 %v1493, 1.442695
    %v1495 = vpow.pop %v1494
    %v1496 = vadd.f32 %v1495, 1.0
    %v1497 = vrcp.pop %v1496
    %v1498 = vmul.f32 %v1496, %v1497
    %v1499 = vsub.f32 1.0, %v1498
    %v1500 = vmul.f32 %v1497, %v1499
    %v1501 = vadd.f32 %v1497, %v1500
    %vm1502 = vweird.f32 %v1496
    %vm1503 = vweird.f32 %v1497
    %vm1504 = vmor %vm1502, %vm1503
    %v1505 = vsel %vm1504, %v1497, %v1501
    %v1506 = vand.u32 2147483647, %v1496
    %vm1507 = vcmp.eq.f32.partialorder %v1506, 8.507059e+37
    %v1508 = vand.u32 %v1496, 2147483648
    %v1509 = vor.u32 1.1754944e-38, %v1508
    %v1510 = vsel %vm1507, %v1509, %v1505
    %v1511 = vmul.f32 1.0, %v1510
    %v1512 = vtanh.pop %v1492
    %v1513 = vmul.f32 %v1511, %v1333
    %1515 = vrot.lane.b32.xlu0 %v1512, 64
    %v1516 = vpop.permute.xlu0 %1515
    %v1518 = vmul.f32 %v1511, %v1516
    %1520 = vrot.lane.b32.xlu0 %v1518, 32
    %v1521 = vpop.permute.xlu0 %1520
    %v1523 = vadd.f32 %v1513, %v1521
    %v1524 = vtanh.pop %v1523
    %1526 = vrot.lane.b32.xlu0 %v1524, 64
    %v1527 = vpop.permute.xlu0 %1526
    %v1529 = vmul.f32 %v1511, %v1527
    %v1530 = vsel %vm1438, %v1529, %v1332
    %v1531 = vsel %vm1438, %v1523, %v1333
    %v1532 = vsel %vm1438, %v1529, 0.0
    %v1533 = vmax.f32 %v1532, 0.0
    %1535 = vrot.lane.b32.xlu0 %v1533, 32
    %v1536 = vpop.permute.xlu0 %1535
    %v1538 = vsel %vm530, %v1536, 0.0
    %1539 = vadd.xlane.f32.xlu0 %v1538
    %v1540 = vpop.xlane.xlu0 %1539
    %v1541 = vmul.f32 %v1540, %v540
    %v1542 = vsub.f32 %v1533, %v1541
    %v1543 = vmul.f32 %v1542, %v1542
    %1545 = vrot.lane.b32.xlu0 %v1543, 32
    %v1546 = vpop.permute.xlu0 %1545
    %v1548 = vsel %vm530, %v1546, 0.0
    %1549 = vadd.xlane.f32.xlu0 %v1548
    %v1550 = vpop.xlane.xlu0 %1549
    %v1551 = vmul.f32 %v1550, %v540
    %v1552 = vadd.f32 %v1551, 1e-05
    %v1553 = vrsqrt.pop %v1552
    %v1554 = vmul.f32 %v1553, %v1552
    %v1555 = vmul.f32 %v1554, %v1553
    %v1556 = vmul.f32 0.5, %v1555
    %v1557 = vsub.f32 1.5, %v1556
    %v1558 = vmul.f32 %v1553, %v1557
    %vm1559 = vweird.f32 %v1552
    %vm1560 = vweird.f32 %v1553
    %vm1561 = vmor %vm1559, %vm1560
    %v1562 = vsel %vm1561, %v1553, %v1558
    %v1563 = vmul.f32 %v1542, %v1562
    %v1564 = vmul.f32 %v1563, %v567
    %v1565 = vadd.f32 %v1564, %v573
    %v1566 = vadd.f32 %v1368, %v1565
    %vm1567 = vcmp.gt.s32.totalorder %v325, 6
    %v1568 = vld [vmem:[%s268] sm:$0x3]
    %1570 = vrot.lane.b32.xlu0 %v1439, 32
    %v1571 = vpop.permute.xlu0 %1570
    %v1572 = vsel %vm349, %v1571, 0
    %1574 = vmatpush.msra.mxu0 0.0
    %1575 = vmatpush.msra.mxu0 0.0
    %1576 = vmatpush.msra.mxu0 0.0
    %1577 = vmatpush.msra.mxu0 0.0
    %1578 = vmatpush.msra.mxu0 0.0
    %1579 = vmatpush.msra.mxu0 0.0
    %1580 = vmatpush.msra.mxu0 0.0
    %1581 = vmatpush.msra.mxu0 0.0
    %1582 = vmatpush.msra.mxu0 0.0
    %1583 = vmatpush.msra.mxu0 0.0
    %1584 = vmatpush.msra.mxu0 0.0
    %1585 = vmatpush.msra.mxu0 0.0
    %1586 = vmatpush.msra.mxu0 %v331
    %1587 = vmatpush.msra.mxu0 %v330
    %1588 = vmatpush.msra.mxu0 %v329
    %1589 = vmatpush.msra.mxu0 %v328
    %1590 = vmatmul.f32.gmra.mxu0 %v1572
    %v1591 = vpop.f32.mrf.mxu0
    %v1592 = vadd.f32 0.0, %v1591
    %1593 = vdwg.mxu0
    %v1594 = vadd.f32 %v1568, %v1592
    %v1595 = vxor.u32 %v1594, 2147483648
    %v1596 = vmul.f32 %v1595, 1.442695
    %v1597 = vpow.pop %v1596
    %v1598 = vadd.f32 %v1597, 1.0
    %v1599 = vrcp.pop %v1598
    %v1600 = vmul.f32 %v1598, %v1599
    %v1601 = vsub.f32 1.0, %v1600
    %v1602 = vmul.f32 %v1599, %v1601
    %v1603 = vadd.f32 %v1599, %v1602
    %vm1604 = vweird.f32 %v1598
    %vm1605 = vweird.f32 %v1599
    %vm1606 = vmor %vm1604, %vm1605
    %v1607 = vsel %vm1606, %v1599, %v1603
    %v1608 = vand.u32 2147483647, %v1598
    %vm1609 = vcmp.eq.f32.partialorder %v1608, 8.507059e+37
    %v1610 = vand.u32 %v1598, 2147483648
    %v1611 = vor.u32 1.1754944e-38, %v1610
    %v1612 = vsel %vm1609, %v1611, %v1607
    %v1613 = vmul.f32 1.0, %v1612
    %v1614 = vtanh.pop %v1594
    %v1615 = vmul.f32 %v1613, %v1440
    %1617 = vrot.lane.b32.xlu0 %v1614, 64
    %v1618 = vpop.permute.xlu0 %1617
    %v1620 = vmul.f32 %v1613, %v1618
    %1622 = vrot.lane.b32.xlu0 %v1620, 32
    %v1623 = vpop.permute.xlu0 %1622
    %v1625 = vadd.f32 %v1615, %v1623
    %v1626 = vtanh.pop %v1625
    %1628 = vrot.lane.b32.xlu0 %v1626, 64
    %v1629 = vpop.permute.xlu0 %1628
    %v1631 = vmul.f32 %v1613, %v1629
    %v1632 = vsel %vm1567, 1, 0
    %1633 = vset.pattern.permute.xlu0 0
    %1634 = vperm.xlu0 %1633, %v1632
    %v1635 = vpop.permute.xlu0 %1634
    %vm1636 = vcmp.eq.s32.totalorder %v1635, 1
    %v1637 = vsel %vm1636, %v1631, %v1439
    %v1638 = vsel %vm1636, %v1625, %v1440
    %v1639 = vsel %vm1636, %v1631, 0.0
    %1641 = vrot.lane.b32.xlu0 %v1530, 32
    %v1642 = vpop.permute.xlu0 %1641
    %v1643 = vsel %vm349, %v1642, 0
    %1645 = vmatpush.msra.mxu0 0.0
    %1646 = vmatpush.msra.mxu0 0.0
    %1647 = vmatpush.msra.mxu0 0.0
    %1648 = vmatpush.msra.mxu0 0.0
    %1649 = vmatpush.msra.mxu0 0.0
    %1650 = vmatpush.msra.mxu0 0.0
    %1651 = vmatpush.msra.mxu0 0.0
    %1652 = vmatpush.msra.mxu0 0.0
    %1653 = vmatpush.msra.mxu0 0.0
    %1654 = vmatpush.msra.mxu0 0.0
    %1655 = vmatpush.msra.mxu0 0.0
    %1656 = vmatpush.msra.mxu0 0.0
    %1657 = vmatpush.msra.mxu0 %v335
    %1658 = vmatpush.msra.mxu0 %v334
    %1659 = vmatpush.msra.mxu0 %v333
    %1660 = vmatpush.msra.mxu0 %v332
    %1661 = vmatmul.f32.gmra.mxu0 %v1643
    %v1662 = vpop.f32.mrf.mxu0
    %v1663 = vadd.f32 0.0, %v1662
    %1664 = vdwg.mxu0
    %1666 = vrot.lane.b32.xlu0 %v1639, 32
    %v1667 = vpop.permute.xlu0 %1666
    %v1668 = vsel %vm349, %v1667, 0
    %1670 = vmatpush.msra.mxu0 0.0
    %1671 = vmatpush.msra.mxu0 0.0
    %1672 = vmatpush.msra.mxu0 0.0
    %1673 = vmatpush.msra.mxu0 0.0
    %1674 = vmatpush.msra.mxu0 0.0
    %1675 = vmatpush.msra.mxu0 0.0
    %1676 = vmatpush.msra.mxu0 0.0
    %1677 = vmatpush.msra.mxu0 0.0
    %1678 = vmatpush.msra.mxu0 0.0
    %1679 = vmatpush.msra.mxu0 0.0
    %1680 = vmatpush.msra.mxu0 0.0
    %1681 = vmatpush.msra.mxu0 0.0
    %1682 = vmatpush.msra.mxu0 %v339
    %1683 = vmatpush.msra.mxu0 %v338
    %1684 = vmatpush.msra.mxu0 %v337
    %1685 = vmatpush.msra.mxu0 %v336
    %1686 = vmatmul.f32.gmra.mxu0 %v1668
    %v1687 = vpop.f32.mrf.mxu0
    %v1688 = vadd.f32 %v1663, %v1687
    %1689 = vdwg.mxu0
    %v1690 = vadd.f32 %v1688, %v475
    %v1691 = vxor.u32 %v1690, 2147483648
    %v1692 = vmul.f32 %v1691, 1.442695
    %v1693 = vpow.pop %v1692
    %v1694 = vadd.f32 %v1693, 1.0
    %v1695 = vrcp.pop %v1694
    %v1696 = vmul.f32 %v1694, %v1695
    %v1697 = vsub.f32 1.0, %v1696
    %v1698 = vmul.f32 %v1695, %v1697
    %v1699 = vadd.f32 %v1695, %v1698
    %vm1700 = vweird.f32 %v1694
    %vm1701 = vweird.f32 %v1695
    %vm1702 = vmor %vm1700, %vm1701
    %v1703 = vsel %vm1702, %v1695, %v1699
    %v1704 = vand.u32 2147483647, %v1694
    %vm1705 = vcmp.eq.f32.partialorder %v1704, 8.507059e+37
    %v1706 = vand.u32 %v1694, 2147483648
    %v1707 = vor.u32 1.1754944e-38, %v1706
    %v1708 = vsel %vm1705, %v1707, %v1703
    %v1709 = vmul.f32 1.0, %v1708
    %v1710 = vtanh.pop %v1690
    %v1711 = vmul.f32 %v1709, %v1531
    %1713 = vrot.lane.b32.xlu0 %v1710, 64
    %v1714 = vpop.permute.xlu0 %1713
    %v1716 = vmul.f32 %v1709, %v1714
    %1718 = vrot.lane.b32.xlu0 %v1716, 32
    %v1719 = vpop.permute.xlu0 %1718
    %v1721 = vadd.f32 %v1711, %v1719
    %v1722 = vtanh.pop %v1721
    %1724 = vrot.lane.b32.xlu0 %v1722, 64
    %v1725 = vpop.permute.xlu0 %1724
    %v1727 = vmul.f32 %v1709, %v1725
    %v1728 = vsel %vm1636, %v1727, %v1530
    %v1729 = vsel %vm1636, %v1721, %v1531
    %v1730 = vsel %vm1636, %v1727, 0.0
    %v1731 = vmax.f32 %v1730, 0.0
    %1733 = vrot.lane.b32.xlu0 %v1731, 32
    %v1734 = vpop.permute.xlu0 %1733
    %v1736 = vsel %vm530, %v1734, 0.0
    %1737 = vadd.xlane.f32.xlu0 %v1736
    %v1738 = vpop.xlane.xlu0 %1737
    %v1739 = vmul.f32 %v1738, %v540
    %v1740 = vsub.f32 %v1731, %v1739
    %v1741 = vmul.f32 %v1740, %v1740
    %1743 = vrot.lane.b32.xlu0 %v1741, 32
    %v1744 = vpop.permute.xlu0 %1743
    %v1746 = vsel %vm530, %v1744, 0.0
    %1747 = vadd.xlane.f32.xlu0 %v1746
    %v1748 = vpop.xlane.xlu0 %1747
    %v1749 = vmul.f32 %v1748, %v540
    %v1750 = vadd.f32 %v1749, 1e-05
    %v1751 = vrsqrt.pop %v1750
    %v1752 = vmul.f32 %v1751, %v1750
    %v1753 = vmul.f32 %v1752, %v1751
    %v1754 = vmul.f32 0.5, %v1753
    %v1755 = vsub.f32 1.5, %v1754
    %v1756 = vmul.f32 %v1751, %v1755
    %vm1757 = vweird.f32 %v1750
    %vm1758 = vweird.f32 %v1751
    %vm1759 = vmor %vm1757, %vm1758
    %v1760 = vsel %vm1759, %v1751, %v1756
    %v1761 = vmul.f32 %v1740, %v1760
    %v1762 = vmul.f32 %v1761, %v567
    %v1763 = vadd.f32 %v1762, %v573
    %v1764 = vadd.f32 %v1566, %v1763
    %vm1765 = vcmp.gt.s32.totalorder %v325, 7
    %v1766 = vld [vmem:[%s270] sm:$0x3]
    %1768 = vrot.lane.b32.xlu0 %v1637, 32
    %v1769 = vpop.permute.xlu0 %1768
    %v1770 = vsel %vm349, %v1769, 0
    %1772 = vmatpush.msra.mxu0 0.0
    %1773 = vmatpush.msra.mxu0 0.0
    %1774 = vmatpush.msra.mxu0 0.0
    %1775 = vmatpush.msra.mxu0 0.0
    %1776 = vmatpush.msra.mxu0 0.0
    %1777 = vmatpush.msra.mxu0 0.0
    %1778 = vmatpush.msra.mxu0 0.0
    %1779 = vmatpush.msra.mxu0 0.0
    %1780 = vmatpush.msra.mxu0 0.0
    %1781 = vmatpush.msra.mxu0 0.0
    %1782 = vmatpush.msra.mxu0 0.0
    %1783 = vmatpush.msra.mxu0 0.0
    %1784 = vmatpush.msra.mxu0 %v331
    %1785 = vmatpush.msra.mxu0 %v330
    %1786 = vmatpush.msra.mxu0 %v329
    %1787 = vmatpush.msra.mxu0 %v328
    %1788 = vmatmul.f32.gmra.mxu0 %v1770
    %v1789 = vpop.f32.mrf.mxu0
    %v1790 = vadd.f32 0.0, %v1789
    %1791 = vdwg.mxu0
    %v1792 = vadd.f32 %v1766, %v1790
    %v1793 = vxor.u32 %v1792, 2147483648
    %v1794 = vmul.f32 %v1793, 1.442695
    %v1795 = vpow.pop %v1794
    %v1796 = vadd.f32 %v1795, 1.0
    %v1797 = vrcp.pop %v1796
    %v1798 = vmul.f32 %v1796, %v1797
    %v1799 = vsub.f32 1.0, %v1798
    %v1800 = vmul.f32 %v1797, %v1799
    %v1801 = vadd.f32 %v1797, %v1800
    %vm1802 = vweird.f32 %v1796
    %vm1803 = vweird.f32 %v1797
    %vm1804 = vmor %vm1802, %vm1803
    %v1805 = vsel %vm1804, %v1797, %v1801
    %v1806 = vand.u32 2147483647, %v1796
    %vm1807 = vcmp.eq.f32.partialorder %v1806, 8.507059e+37
    %v1808 = vand.u32 %v1796, 2147483648
    %v1809 = vor.u32 1.1754944e-38, %v1808
    %v1810 = vsel %vm1807, %v1809, %v1805
    %v1811 = vmul.f32 1.0, %v1810
    %v1812 = vtanh.pop %v1792
    %v1813 = vmul.f32 %v1811, %v1638
    %1815 = vrot.lane.b32.xlu0 %v1812, 64
    %v1816 = vpop.permute.xlu0 %1815
    %v1818 = vmul.f32 %v1811, %v1816
    %1820 = vrot.lane.b32.xlu0 %v1818, 32
    %v1821 = vpop.permute.xlu0 %1820
    %v1823 = vadd.f32 %v1813, %v1821
    %v1824 = vtanh.pop %v1823
    %1826 = vrot.lane.b32.xlu0 %v1824, 64
    %v1827 = vpop.permute.xlu0 %1826
    %v1829 = vmul.f32 %v1811, %v1827
    %v1830 = vsel %vm1765, 1, 0
    %1831 = vset.pattern.permute.xlu0 0
    %1832 = vperm.xlu0 %1831, %v1830
    %v1833 = vpop.permute.xlu0 %1832
    %vm1834 = vcmp.eq.s32.totalorder %v1833, 1
    %v1835 = vsel %vm1834, %v1829, 0.0
    %1837 = vrot.lane.b32.xlu0 %v1728, 32
    %v1838 = vpop.permute.xlu0 %1837
    %v1839 = vsel %vm349, %v1838, 0
    %1841 = vmatpush.msra.mxu0 0.0
    %1842 = vmatpush.msra.mxu0 0.0
    %1843 = vmatpush.msra.mxu0 0.0
    %1844 = vmatpush.msra.mxu0 0.0
    %1845 = vmatpush.msra.mxu0 0.0
    %1846 = vmatpush.msra.mxu0 0.0
    %1847 = vmatpush.msra.mxu0 0.0
    %1848 = vmatpush.msra.mxu0 0.0
    %1849 = vmatpush.msra.mxu0 0.0
    %1850 = vmatpush.msra.mxu0 0.0
    %1851 = vmatpush.msra.mxu0 0.0
    %1852 = vmatpush.msra.mxu0 0.0
    %1853 = vmatpush.msra.mxu0 %v335
    %1854 = vmatpush.msra.mxu0 %v334
    %1855 = vmatpush.msra.mxu0 %v333
    %1856 = vmatpush.msra.mxu0 %v332
    %1857 = vmatmul.f32.gmra.mxu0 %v1839
    %v1858 = vpop.f32.mrf.mxu0
    %v1859 = vadd.f32 0.0, %v1858
    %1860 = vdwg.mxu0
    %1862 = vrot.lane.b32.xlu0 %v1835, 32
    %v1863 = vpop.permute.xlu0 %1862
    %v1864 = vsel %vm349, %v1863, 0
    %1866 = vmatpush.msra.mxu0 0.0
    %1867 = vmatpush.msra.mxu0 0.0
    %1868 = vmatpush.msra.mxu0 0.0
    %1869 = vmatpush.msra.mxu0 0.0
    %1870 = vmatpush.msra.mxu0 0.0
    %1871 = vmatpush.msra.mxu0 0.0
    %1872 = vmatpush.msra.mxu0 0.0
    %1873 = vmatpush.msra.mxu0 0.0
    %1874 = vmatpush.msra.mxu0 0.0
    %1875 = vmatpush.msra.mxu0 0.0
    %1876 = vmatpush.msra.mxu0 0.0
    %1877 = vmatpush.msra.mxu0 0.0
    %1878 = vmatpush.msra.mxu0 %v339
    %1879 = vmatpush.msra.mxu0 %v338
    %1880 = vmatpush.msra.mxu0 %v337
    %1881 = vmatpush.msra.mxu0 %v336
    %1882 = vmatmul.f32.gmra.mxu0 %v1864
    %v1883 = vpop.f32.mrf.mxu0
    %v1884 = vadd.f32 %v1859, %v1883
    %1885 = vdwg.mxu0
    %v1886 = vadd.f32 %v1884, %v475
    %v1887 = vxor.u32 %v1886, 2147483648
    %v1888 = vmul.f32 %v1887, 1.442695
    %v1889 = vpow.pop %v1888
    %v1890 = vadd.f32 %v1889, 1.0
    %v1891 = vrcp.pop %v1890
    %v1892 = vmul.f32 %v1890, %v1891
    %v1893 = vsub.f32 1.0, %v1892
    %v1894 = vmul.f32 %v1891, %v1893
    %v1895 = vadd.f32 %v1891, %v1894
    %vm1896 = vweird.f32 %v1890
    %vm1897 = vweird.f32 %v1891
    %vm1898 = vmor %vm1896, %vm1897
    %v1899 = vsel %vm1898, %v1891, %v1895
    %v1900 = vand.u32 2147483647, %v1890
    %vm1901 = vcmp.eq.f32.partialorder %v1900, 8.507059e+37
    %v1902 = vand.u32 %v1890, 2147483648
    %v1903 = vor.u32 1.1754944e-38, %v1902
    %v1904 = vsel %vm1901, %v1903, %v1899
    %v1905 = vmul.f32 1.0, %v1904
    %v1906 = vtanh.pop %v1886
    %v1907 = vmul.f32 %v1905, %v1729
    %1909 = vrot.lane.b32.xlu0 %v1906, 64
    %v1910 = vpop.permute.xlu0 %1909
    %v1912 = vmul.f32 %v1905, %v1910
    %1914 = vrot.lane.b32.xlu0 %v1912, 32
    %v1915 = vpop.permute.xlu0 %1914
    %v1917 = vadd.f32 %v1907, %v1915
    %v1918 = vtanh.pop %v1917
    %1920 = vrot.lane.b32.xlu0 %v1918, 64
    %v1921 = vpop.permute.xlu0 %1920
    %v1923 = vmul.f32 %v1905, %v1921
    %v1924 = vsel %vm1834, %v1923, 0.0
    %v1925 = vmax.f32 %v1924, 0.0
    %1927 = vrot.lane.b32.xlu0 %v1925, 32
    %v1928 = vpop.permute.xlu0 %1927
    %v1930 = vsel %vm530, %v1928, 0.0
    %1931 = vadd.xlane.f32.xlu0 %v1930
    %v1932 = vpop.xlane.xlu0 %1931
    %v1933 = vmul.f32 %v1932, %v540
    %v1934 = vsub.f32 %v1925, %v1933
    %v1935 = vmul.f32 %v1934, %v1934
    %1937 = vrot.lane.b32.xlu0 %v1935, 32
    %v1938 = vpop.permute.xlu0 %1937
    %v1940 = vsel %vm530, %v1938, 0.0
    %1941 = vadd.xlane.f32.xlu0 %v1940
    %v1942 = vpop.xlane.xlu0 %1941
    %v1943 = vmul.f32 %v1942, %v540
    %v1944 = vadd.f32 %v1943, 1e-05
    %v1945 = vrsqrt.pop %v1944
    %v1946 = vmul.f32 %v1945, %v1944
    %v1947 = vmul.f32 %v1946, %v1945
    %v1948 = vmul.f32 0.5, %v1947
    %v1949 = vsub.f32 1.5, %v1948
    %v1950 = vmul.f32 %v1945, %v1949
    %vm1951 = vweird.f32 %v1944
    %vm1952 = vweird.f32 %v1945
    %vm1953 = vmor %vm1951, %vm1952
    %v1954 = vsel %vm1953, %v1945, %v1950
    %v1955 = vmul.f32 %v1934, %v1954
    %v1956 = vmul.f32 %v1955, %v567
    %v1957 = vadd.f32 %v1956, %v573
    %v1958 = vadd.f32 %v1764, %v1957
    %1960 = vrot.lane.b32.xlu0 %v324, 96
    %v1961 = vpop.permute.xlu0 %1960
    %v1963 = vadd.f32 %v1958, %v1961
    %v1964 = vmul.f32 %v1963, 0.125
    %v1965 = vld [vmem:[#allocation17] sm:$0xff]
    %v1966 = vld [vmem:[#allocation17 + $0x8] sm:$0xff]
    %v1967 = vld [vmem:[#allocation17 + $0x10] sm:$0xff]
    %v1968 = vld [vmem:[#allocation17 + $0x18] sm:$0xff]
    %v1969 = vld [vmem:[#allocation18] sm:$0x1]
    %v1971 = vperm.slane %v1969, 0
    %1974 = vrot.lane.b32.xlu0 %v1964, 32
    %v1975 = vpop.permute.xlu0 %1974
    %v1976 = vsel %vm349, %v1975, 0
    %1978 = vmatpush.msra.mxu0 0.0
    %1979 = vmatpush.msra.mxu0 0.0
    %1980 = vmatpush.msra.mxu0 0.0
    %1981 = vmatpush.msra.mxu0 0.0
    %1982 = vmatpush.msra.mxu0 0.0
    %1983 = vmatpush.msra.mxu0 0.0
    %1984 = vmatpush.msra.mxu0 0.0
    %1985 = vmatpush.msra.mxu0 0.0
    %1986 = vmatpush.msra.mxu0 0.0
    %1987 = vmatpush.msra.mxu0 0.0
    %1988 = vmatpush.msra.mxu0 0.0
    %1989 = vmatpush.msra.mxu0 0.0
    %1990 = vmatpush.msra.mxu0 %v1968
    %1991 = vmatpush.msra.mxu0 %v1967
    %1992 = vmatpush.msra.mxu0 %v1966
    %1993 = vmatpush.msra.mxu0 %v1965
    %1994 = vmatmul.f32.gmra.mxu0 %v1976
    %v1995 = vpop.f32.mrf.mxu0
    %v1996 = vadd.f32 %v1971, %v1995
    %1997 = vdwg.mxu0
    %v1998 = vmax.f32 %v1996, 0.0
    %v1999 = vld [vmem:[%s16] sm:$0xff]
    %v2000 = vld [vmem:[%s16 + $0x8] sm:$0xff]
    %v2001 = vld [vmem:[%s16 + $0x10] sm:$0xff]
    %v2002 = vld [vmem:[%s16 + $0x18] sm:$0xff]
    %v2003 = vld [vmem:[#allocation20] sm:$0x1]
    %v2005 = vperm.slane %v2003, 0
    %v2008 = vsel %vm349, %v1998, 0
    %2010 = vmatpush.msra.mxu0 0.0
    %2011 = vmatpush.msra.mxu0 0.0
    %2012 = vmatpush.msra.mxu0 0.0
    %2013 = vmatpush.msra.mxu0 0.0
    %2014 = vmatpush.msra.mxu0 0.0
    %2015 = vmatpush.msra.mxu0 0.0
    %2016 = vmatpush.msra.mxu0 0.0
    %2017 = vmatpush.msra.mxu0 0.0
    %2018 = vmatpush.msra.mxu0 0.0
    %2019 = vmatpush.msra.mxu0 0.0
    %2020 = vmatpush.msra.mxu0 0.0
    %2021 = vmatpush.msra.mxu0 0.0
    %2022 = vmatpush.msra.mxu0 %v2002
    %2023 = vmatpush.msra.mxu0 %v2001
    %2024 = vmatpush.msra.mxu0 %v2000
    %2025 = vmatpush.msra.mxu0 %v1999
    %2026 = vmatmul.f32.gmra.mxu0 %v2008
    %v2027 = vpop.f32.mrf.mxu0
    %v2028 = vadd.f32 %v2005, %v2027
    %2029 = vdwg.mxu0
    %vm2030 = vcmask 25600
    %2031 = vst.msk [vmem:[#allocation21] sm:$0x3] %vm2030, %v2028
    // Predicated region
    $region118: #{_actor_forward_impl.1} parent=1 // pred_check
      _
    $region119: #{_actor_forward_impl.1} parent=1 // pred_check_branch
      %2033 = sbr.rel (0) target = $region121
    $region120: #{_actor_forward_impl.1} parent=1 // pred_region
      %2035 = vsyncadd [#allocation5], 0
      %s2037 = sshll.u32 [#allocation21], 4
      %s2038 = int_to_ptr.vmem [resolvable:$true] %s2037
      %s2039 = sshll.u32 %s18, 4
      %s2040 = int_to_ptr.hbm [resolvable:$true] %s2039
      %2042 = dma.vmem_to_hbm [thread:$0]  %s2038, 32, %s2040, [#allocation5]
    $region121: #{_actor_forward_impl.1} parent=1 // pred_fallthru
      _
    // Predicated region
    $region122: #{_actor_forward_impl.1} parent=1 // pred_check
      _
    $region123: #{_actor_forward_impl.1} parent=1 // pred_check_branch
      %2044 = sbr.rel (0) target = $region125
    $region124: #{_actor_forward_impl.1} parent=1 // pred_region
      %2046 = dma.done [#allocation5], 32
    $region125: #{_actor_forward_impl.1} parent=1 // pred_fallthru
      _
    %2047 = vsyncpa [#allocation4], 1
    %2048 = vsyncpa [#allocation7], 1
    %2049 = vsyncpa [#allocation10], 1
    %2050 = vsyncpa [#allocation13], 1
    %2051 = vsyncpa [#allocation16], 1
    %2052 = vsyncpa [#allocation19], 1
    %2053 = vsyncpa [#allocation5], 1

</llo_original>
